<compile_context>
chip_gen: v6e
topology: v6e:2x2x1
jax: 0.10.0
libtpu: 0.0.40
codegen_flags: <defaults>
</compile_context>

<pallas_src>
import functools

import jax
import jax.numpy as jnp
from jax.experimental import pallas as pl
from jax.experimental.pallas import tpu as pltpu


# ---------------------------------------------------------------------------
# Fused whole-network kernel: one batch element per grid step.
# ---------------------------------------------------------------------------
def _ddn_kernel(*refs, depth, C, H, W, eps):
    # refs = (x_ref, w_ref[0..depth-1], prm_ref, o_ref, skip_ref)
    x_ref = refs[0]
    w_refs = refs[1:1 + depth]          # each: (6, C, C*(i+1))  flattened taps
    prm_ref = refs[1 + depth]           # (3, depth, C, 1): gamma, beta, alpha
    o_ref = refs[2 + depth]             # (1, C, HW)
    skip_ref = refs[3 + depth]          # VMEM scratch (C*depth, HW), f32

    HW = H * W

    # Stage this batch element's input at the tail of the skip scratch.
    # Channel layout of the scratch: [out_{d-2}, ..., out_1, out_0, x]
    # (newest layer output at the lowest offset == torch.cat([out, skip]) order).
    skip_ref[pl.ds((depth - 1) * C, C), :] = x_ref[0].astype(jnp.float32)

    # Lane-position helpers for the conv boundary masks (built once).
    lane = jax.lax.broadcasted_iota(jnp.int32, (1, HW), 1)
    col = lane % W
    mask_w0 = jnp.where(col == 0, 0.0, 1.0)          # tap kw=0 invalid at w==0
    mask_w2 = jnp.where(col == (W - 1), 0.0, 1.0)    # tap kw=2 invalid at w==W-1

    for i in range(depth):                           # unrolled at trace time
        dil = 2 ** i
        cin = C * (i + 1)
        c0 = (depth - 1 - i) * C                     # start row of this layer's skip

        xin = skip_ref[pl.ds(c0, cin), :]            # (cin, HW), f32
        # tap kh=0 reads row h-dil -> invalid for h < dil
        mask_h = jnp.where(lane >= dil * W, 1.0, 0.0)

        # Dilated 2x3 conv == 6 accumulated matmuls over rolled+masked taps.
        acc = jnp.zeros((C, HW), jnp.float32)
        for kh in range(2):
            for kw in range(3):
                t = kh * 3 + kw
                # output[p] uses input flat position p + s (zero outside).
                s = (kh - 1) * dil * W + (kw - 1)
                tap = xin if s == 0 else pltpu.roll(xin, shift=(-s) % HW, axis=1)
                m = None
                if kh == 0:
                    m = mask_h
                if kw == 0:
                    m = mask_w0 if m is None else m * mask_w0
                elif kw == 2:
                    m = mask_w2 if m is None else m * mask_w2
                if m is not None:
                    tap = tap * m                    # zero the wrapped/padded lanes
                w_t = w_refs[i][t]                   # (C, cin)
                acc = acc + jnp.dot(w_t, tap, preferred_element_type=jnp.float32)

        # Conv bias intentionally omitted: a per-channel constant is exactly
        # cancelled by the InstanceNorm mean subtraction.

        # Single-pass InstanceNorm + affine folded into one FMA, then PReLU.
        gamma = prm_ref[0, i]                        # (C, 1)
        beta = prm_ref[1, i]
        alpha = prm_ref[2, i]
        inv_hw = 1.0 / float(HW)
        mean = jnp.sum(acc, axis=1, keepdims=True) * inv_hw
        meansq = jnp.sum(acc * acc, axis=1, keepdims=True) * inv_hw
        var = meansq - mean * mean
        scale = gamma * jax.lax.rsqrt(var + eps)     # rsqrt -> EUP (free slot)
        shift = beta - mean * scale
        y = acc * scale + shift
        out = jnp.where(y >= 0, y, alpha * y)

        if i < depth - 1:
            # Dense connectivity: prepend this layer's output to the skip.
            skip_ref[pl.ds(c0 - C, C), :] = out
        else:
            o_ref[0] = out.astype(o_ref.dtype)


# ---------------------------------------------------------------------------
# Wrapper: parameter packing + one pallas_call for the whole network.
# ---------------------------------------------------------------------------
def dilated_dense_net_forward(x, params, eps=1e-5):
    B, C, H, W = x.shape
    depth = len(params)
    HW = H * W

    x2 = x.reshape(B, C, HW)

    # weight[co, ci, kh, kw] -> w6[kh*3+kw, co, ci]  (GEMM-ready per tap)
    w_list = []
    for i, layer in enumerate(params):
        cin = C * (i + 1)
        w6 = jnp.transpose(layer["w"], (2, 3, 0, 1)).reshape(2 * 3, C, cin)
        w_list.append(w6)

    # gamma / beta / alpha for all layers packed into one resident operand.
    prm = jnp.stack([
        jnp.stack([l["gamma"] for l in params], axis=0),   # (depth, C)
        jnp.stack([l["beta"] for l in params], axis=0),
        jnp.stack([l["alpha"] for l in params], axis=0),
    ], axis=0)[..., None]                                   # (3, depth, C, 1)

    kernel = functools.partial(
        _ddn_kernel, depth=depth, C=C, H=H, W=W, eps=float(eps))

    in_specs = [pl.BlockSpec((1, C, HW), lambda b: (b, 0, 0))]       # x (per batch)
    for i in range(depth):
        cin = C * (i + 1)
        in_specs.append(pl.BlockSpec((6, C, cin), lambda b: (0, 0, 0)))   # resident
    in_specs.append(pl.BlockSpec((3, depth, C, 1), lambda b: (0, 0, 0, 0)))

    out2d = pl.pallas_call(
        kernel,
        out_shape=jax.ShapeDtypeStruct((B, C, HW), x.dtype),
        grid_spec=pltpu.PrefetchScalarGridSpec(
            num_scalar_prefetch=0,
            grid=(B,),
            in_specs=in_specs,
            out_specs=pl.BlockSpec((1, C, HW), lambda b: (b, 0, 0)),
            scratch_shapes=[pltpu.VMEM((C * depth, HW), jnp.float32)],
        ),
        compiler_params=pltpu.CompilerParams(
            dimension_semantics=("parallel",),
        ),
    )(x2, *w_list, prm)

    return out2d.reshape(B, C, H, W)


# ---------------------------------------------------------------------------
# Pure-JAX reference (mirrors the PyTorch module exactly, bias included).
# ---------------------------------------------------------------------------
def dilated_dense_net_reference(x, params, eps=1e-5):
    skip = x
    out = x
    for i, layer in enumerate(params):
        dil = 2 ** i
        xp = jnp.pad(skip, ((0, 0), (0, 0), (dil, 0), (1, 1)))
        y = jax.lax.conv_general_dilated(
            xp, layer["w"], window_strides=(1, 1), padding="VALID",
            rhs_dilation=(dil, 1),
            dimension_numbers=("NCHW", "OIHW", "NCHW"),
            precision=jax.lax.Precision.HIGHEST,
        )
        y = y + layer["b"][None, :, None, None]
        mean = jnp.mean(y, axis=(2, 3), keepdims=True)
        var = jnp.mean((y - mean) ** 2, axis=(2, 3), keepdims=True)
        y = (y - mean) * jax.lax.rsqrt(var + eps)
        y = y * layer["gamma"][None, :, None, None] + layer["beta"][None, :, None, None]
        a = layer["alpha"][None, :, None, None]
        out = jnp.where(y >= 0, y, a * y)
        skip = jnp.concatenate([out, skip], axis=1)
    return out


def init_params(key, in_channels, depth):
    params = []
    for i in range(depth):
        cin = in_channels * (i + 1)
        key, kw, kb = jax.random.split(key, 3)
        fan_in = cin * 2 * 3
        w = jax.random.normal(kw, (in_channels, cin, 2, 3), jnp.float32) / jnp.sqrt(
            jnp.float32(fan_in))
        b = 0.01 * jax.random.normal(kb, (in_channels,), jnp.float32)
        params.append(dict(
            w=w,
            b=b,
            gamma=jnp.ones((in_channels,), jnp.float32),        # InstanceNorm affine
            beta=jnp.zeros((in_channels,), jnp.float32),
            alpha=jnp.full((in_channels,), 0.25, jnp.float32),  # PReLU default
        ))
    return params


if __name__ == "__main__":
    key = jax.random.PRNGKey(0)
    B, C, H, W = 2, 8, 16, 16          # small demo shapes; H*W = 256 (lane-dense)
    depth = 4

    kx, kp = jax.random.split(key)
    x = jax.random.normal(kx, (B, C, H, W), dtype=jnp.float32)
    params = init_params(kp, C, depth)

    fwd = jax.jit(dilated_dense_net_forward)
    out = jax.block_until_ready(fwd(x, params))

    ref = dilated_dense_net_reference(x, params)
    assert out.shape == (B, C, H, W)
    assert jnp.allclose(out, ref, atol=1e-3, rtol=1e-3), "mismatch vs reference"

    print("KERNEL_OK")
</pallas_src>

<mosaic_0001>
module attributes {stable_mosaic.version = 11 : i64} {
  func.func @_ddn_kernel(%arg0: i32, %arg1: memref<1x8x256xf32, #tpu.memory_space<vmem>>, %arg2: memref<6x8x8xf32, #tpu.memory_space<vmem>>, %arg3: memref<6x8x16xf32, #tpu.memory_space<vmem>>, %arg4: memref<6x8x24xf32, #tpu.memory_space<vmem>>, %arg5: memref<6x8x32xf32, #tpu.memory_space<vmem>>, %arg6: memref<3x4x8x1xf32, #tpu.memory_space<vmem>>, %arg7: memref<1x8x256xf32, #tpu.memory_space<vmem>>, %arg8: memref<32x256xf32, #tpu.memory_space<vmem>>) attributes {dimension_semantics = [#tpu.dimension_semantics<parallel>], iteration_bounds = array<i64: 2>, scalar_prefetch = 0 : i64, scratch_operands = 1 : i64, tpu.core_type = #tpu.core_type<tc>, window_params = [{transform_indices = @transform_0, window_bounds = array<i64: 1, 8, 256>}, {pipeline_mode = #tpu.pipeline_mode<synchronous>, transform_indices = @transform_1, window_bounds = array<i64: 6, 8, 8>}, {pipeline_mode = #tpu.pipeline_mode<synchronous>, transform_indices = @transform_2, window_bounds = array<i64: 6, 8, 16>}, {pipeline_mode = #tpu.pipeline_mode<synchronous>, transform_indices = @transform_3, window_bounds = array<i64: 6, 8, 24>}, {pipeline_mode = #tpu.pipeline_mode<synchronous>, transform_indices = @transform_4, window_bounds = array<i64: 6, 8, 32>}, {pipeline_mode = #tpu.pipeline_mode<synchronous>, transform_indices = @transform_5, window_bounds = array<i64: 3, 4, 8, 1>}, {transform_indices = @transform_6, window_bounds = array<i64: 1, 8, 256>}]} {
    %c0 = arith.constant 0 : index
    %c0_0 = arith.constant 0 : index
    %c0_1 = arith.constant 0 : index
    %0 = vector.load %arg1[%c0, %c0_0, %c0_1] : memref<1x8x256xf32, #tpu.memory_space<vmem>>, vector<1x8x256xf32>
    %1 = vector.shape_cast %0 : vector<1x8x256xf32> to vector<8x256xf32>
    %c24 = arith.constant 24 : index
    %c0_2 = arith.constant 0 : index
    %2 = vector.load %arg8[%c24, %c0_2] : memref<32x256xf32, #tpu.memory_space<vmem>>, vector<8x256xf32>
    tpu.vector_store %arg8[%c24, %c0_2], %1 {strides = array<i32>} : memref<32x256xf32, #tpu.memory_space<vmem>>, vector<8x256xf32>,
    %3 = tpu.iota {dimensions = array<i32: 1>} : vector<1x256xi32>
    %c16_i32 = arith.constant 16 : i32
    %c0_i32 = arith.constant 0 : i32
    %4 = arith.cmpi eq, %c16_i32, %c0_i32 : i32
    %c1_i32 = arith.constant 1 : i32
    %5 = arith.select %4, %c1_i32, %c16_i32 : i32
    %6 = vector.broadcast %5 : i32 to vector<1x256xi32>
    %7 = arith.remsi %3, %6 : vector<1x256xi32>
    %c0_i32_3 = arith.constant 0 : i32
    %8 = vector.broadcast %c0_i32_3 : i32 to vector<1x256xi32>
    %9 = arith.cmpi ne, %7, %8 : vector<1x256xi32>
    %c0_i32_4 = arith.constant 0 : i32
    %10 = vector.broadcast %c0_i32_4 : i32 to vector<1x256xi32>
    %11 = arith.cmpi slt, %7, %10 : vector<1x256xi32>
    %c0_i32_5 = arith.constant 0 : i32
    %12 = arith.cmpi slt, %5, %c0_i32_5 : i32
    %13 = vector.broadcast %12 : i1 to vector<1x256xi1>
    %14 = vector.broadcast %13 : vector<1x256xi1> to vector<1x256xi1>
    %15 = arith.xori %11, %14 : vector<1x256xi1>
    %16 = arith.andi %15, %9 : vector<1x256xi1>
    %17 = vector.broadcast %5 : i32 to vector<1x256xi32>
    %18 = arith.addi %7, %17 : vector<1x256xi32>
    %19 = arith.select %16, %18, %7 : vector<1x256xi1>, vector<1x256xi32>
    %c0_i32_6 = arith.constant 0 : i32
    %20 = vector.broadcast %c0_i32_6 : i32 to vector<1x256xi32>
    %21 = arith.cmpi eq, %19, %20 : vector<1x256xi32>
    %cst = arith.constant 0.000000e+00 : f32
    %cst_7 = arith.constant 1.000000e+00 : f32
    %22 = vector.broadcast %cst : f32 to vector<1x256xf32>
    %23 = vector.broadcast %cst_7 : f32 to vector<1x256xf32>
    %24 = arith.select %21, %22, %23 : vector<1x256xi1>, vector<1x256xf32>
    %c15_i32 = arith.constant 15 : i32
    %25 = vector.broadcast %c15_i32 : i32 to vector<1x256xi32>
    %26 = arith.cmpi eq, %19, %25 : vector<1x256xi32>
    %cst_8 = arith.constant 0.000000e+00 : f32
    %cst_9 = arith.constant 1.000000e+00 : f32
    %27 = vector.broadcast %cst_8 : f32 to vector<1x256xf32>
    %28 = vector.broadcast %cst_9 : f32 to vector<1x256xf32>
    %29 = arith.select %26, %27, %28 : vector<1x256xi1>, vector<1x256xf32>
    %c24_10 = arith.constant 24 : index
    %c0_11 = arith.constant 0 : index
    %30 = vector.load %arg8[%c24_10, %c0_11] : memref<32x256xf32, #tpu.memory_space<vmem>>, vector<8x256xf32>
    %c16_i32_12 = arith.constant 16 : i32
    %31 = vector.broadcast %c16_i32_12 : i32 to vector<1x256xi32>
    %32 = arith.cmpi sge, %3, %31 : vector<1x256xi32>
    %cst_13 = arith.constant 1.000000e+00 : f32
    %cst_14 = arith.constant 0.000000e+00 : f32
    %33 = vector.broadcast %cst_13 : f32 to vector<1x256xf32>
    %34 = vector.broadcast %cst_14 : f32 to vector<1x256xf32>
    %35 = arith.select %32, %33, %34 : vector<1x256xi1>, vector<1x256xf32>
    %cst_15 = arith.constant 0.000000e+00 : f32
    %36 = vector.broadcast %cst_15 : f32 to vector<8x256xf32>
    %c17_i32 = arith.constant 17 : i32
    %37 = tpu.dynamic_rotate %30 by %c17_i32 dim 1 : vector<8x256xf32>, i32 -> vector<8x256xf32>
    %38 = arith.mulf %35, %24 : vector<1x256xf32>
    %39 = vector.broadcast %38 : vector<1x256xf32> to vector<8x256xf32>
    %40 = arith.mulf %37, %39 : vector<8x256xf32>
    %c0_16 = arith.constant 0 : index
    %c0_17 = arith.constant 0 : index
    %c0_18 = arith.constant 0 : index
    %41 = vector.load %arg2[%c0_16, %c0_17, %c0_18] : memref<6x8x8xf32, #tpu.memory_space<vmem>>, vector<1x8x8xf32>
    %42 = vector.shape_cast %41 : vector<1x8x8xf32> to vector<8x8xf32>
    %cst_19 = arith.constant dense<0.000000e+00> : vector<8x256xf32>
    %43 = tpu.matmul %42, %40, %cst_19 {dimension_numbers = #tpu.dot_dimension_numbers<[1], [0], [0], [1], [0, 0, 1, 1], [], []>} : vector<8x8xf32>, vector<8x256xf32>, vector<8x256xf32> -> vector<8x256xf32>
    %44 = arith.addf %36, %43 : vector<8x256xf32>
    %c16_i32_20 = arith.constant 16 : i32
    %45 = tpu.dynamic_rotate %30 by %c16_i32_20 dim 1 : vector<8x256xf32>, i32 -> vector<8x256xf32>
    %46 = vector.broadcast %35 : vector<1x256xf32> to vector<8x256xf32>
    %47 = arith.mulf %45, %46 : vector<8x256xf32>
    %c1 = arith.constant 1 : index
    %c0_21 = arith.constant 0 : index
    %c0_22 = arith.constant 0 : index
    %48 = vector.load %arg2[%c1, %c0_21, %c0_22] : memref<6x8x8xf32, #tpu.memory_space<vmem>>, vector<1x8x8xf32>
    %49 = vector.shape_cast %48 : vector<1x8x8xf32> to vector<8x8xf32>
    %cst_23 = arith.constant dense<0.000000e+00> : vector<8x256xf32>
    %50 = tpu.matmul %49, %47, %cst_23 {dimension_numbers = #tpu.dot_dimension_numbers<[1], [0], [0], [1], [0, 0, 1, 1], [], []>} : vector<8x8xf32>, vector<8x256xf32>, vector<8x256xf32> -> vector<8x256xf32>
    %51 = arith.addf %44, %50 : vector<8x256xf32>
    %c15_i32_24 = arith.constant 15 : i32
    %52 = tpu.dynamic_rotate %30 by %c15_i32_24 dim 1 : vector<8x256xf32>, i32 -> vector<8x256xf32>
    %53 = arith.mulf %35, %29 : vector<1x256xf32>
    %54 = vector.broadcast %53 : vector<1x256xf32> to vector<8x256xf32>
    %55 = arith.mulf %52, %54 : vector<8x256xf32>
    %c2 = arith.constant 2 : index
    %c0_25 = arith.constant 0 : index
    %c0_26 = arith.constant 0 : index
    %56 = vector.load %arg2[%c2, %c0_25, %c0_26] : memref<6x8x8xf32, #tpu.memory_space<vmem>>, vector<1x8x8xf32>
    %57 = vector.shape_cast %56 : vector<1x8x8xf32> to vector<8x8xf32>
    %cst_27 = arith.constant dense<0.000000e+00> : vector<8x256xf32>
    %58 = tpu.matmul %57, %55, %cst_27 {dimension_numbers = #tpu.dot_dimension_numbers<[1], [0], [0], [1], [0, 0, 1, 1], [], []>} : vector<8x8xf32>, vector<8x256xf32>, vector<8x256xf32> -> vector<8x256xf32>
    %59 = arith.addf %51, %58 : vector<8x256xf32>
    %c1_i32_28 = arith.constant 1 : i32
    %60 = tpu.dynamic_rotate %30 by %c1_i32_28 dim 1 : vector<8x256xf32>, i32 -> vector<8x256xf32>
    %61 = vector.broadcast %24 : vector<1x256xf32> to vector<8x256xf32>
    %62 = arith.mulf %60, %61 : vector<8x256xf32>
    %c3 = arith.constant 3 : index
    %c0_29 = arith.constant 0 : index
    %c0_30 = arith.constant 0 : index
    %63 = vector.load %arg2[%c3, %c0_29, %c0_30] : memref<6x8x8xf32, #tpu.memory_space<vmem>>, vector<1x8x8xf32>
    %64 = vector.shape_cast %63 : vector<1x8x8xf32> to vector<8x8xf32>
    %cst_31 = arith.constant dense<0.000000e+00> : vector<8x256xf32>
    %65 = tpu.matmul %64, %62, %cst_31 {dimension_numbers = #tpu.dot_dimension_numbers<[1], [0], [0], [1], [0, 0, 1, 1], [], []>} : vector<8x8xf32>, vector<8x256xf32>, vector<8x256xf32> -> vector<8x256xf32>
    %66 = arith.addf %59, %65 : vector<8x256xf32>
    %c4 = arith.constant 4 : index
    %c0_32 = arith.constant 0 : index
    %c0_33 = arith.constant 0 : index
    %67 = vector.load %arg2[%c4, %c0_32, %c0_33] : memref<6x8x8xf32, #tpu.memory_space<vmem>>, vector<1x8x8xf32>
    %68 = vector.shape_cast %67 : vector<1x8x8xf32> to vector<8x8xf32>
    %cst_34 = arith.constant dense<0.000000e+00> : vector<8x256xf32>
    %69 = tpu.matmul %68, %30, %cst_34 {dimension_numbers = #tpu.dot_dimension_numbers<[1], [0], [0], [1], [0, 0, 1, 1], [], []>} : vector<8x8xf32>, vector<8x256xf32>, vector<8x256xf32> -> vector<8x256xf32>
    %70 = arith.addf %66, %69 : vector<8x256xf32>
    %c255_i32 = arith.constant 255 : i32
    %71 = tpu.dynamic_rotate %30 by %c255_i32 dim 1 : vector<8x256xf32>, i32 -> vector<8x256xf32>
    %72 = vector.broadcast %29 : vector<1x256xf32> to vector<8x256xf32>
    %73 = arith.mulf %71, %72 : vector<8x256xf32>
    %c5 = arith.constant 5 : index
    %c0_35 = arith.constant 0 : index
    %c0_36 = arith.constant 0 : index
    %74 = vector.load %arg2[%c5, %c0_35, %c0_36] : memref<6x8x8xf32, #tpu.memory_space<vmem>>, vector<1x8x8xf32>
    %75 = vector.shape_cast %74 : vector<1x8x8xf32> to vector<8x8xf32>
    %cst_37 = arith.constant dense<0.000000e+00> : vector<8x256xf32>
    %76 = tpu.matmul %75, %73, %cst_37 {dimension_numbers = #tpu.dot_dimension_numbers<[1], [0], [0], [1], [0, 0, 1, 1], [], []>} : vector<8x8xf32>, vector<8x256xf32>, vector<8x256xf32> -> vector<8x256xf32>
    %77 = arith.addf %70, %76 : vector<8x256xf32>
    %c0_38 = arith.constant 0 : index
    %c0_39 = arith.constant 0 : index
    %c0_40 = arith.constant 0 : index
    %c0_41 = arith.constant 0 : index
    %78 = vector.load %arg6[%c0_38, %c0_39, %c0_40, %c0_41] : memref<3x4x8x1xf32, #tpu.memory_space<vmem>>, vector<1x1x8x1xf32>
    %79 = vector.shape_cast %78 : vector<1x1x8x1xf32> to vector<8x1xf32>
    %c1_42 = arith.constant 1 : index
    %c0_43 = arith.constant 0 : index
    %c0_44 = arith.constant 0 : index
    %c0_45 = arith.constant 0 : index
    %80 = vector.load %arg6[%c1_42, %c0_43, %c0_44, %c0_45] : memref<3x4x8x1xf32, #tpu.memory_space<vmem>>, vector<1x1x8x1xf32>
    %81 = vector.shape_cast %80 : vector<1x1x8x1xf32> to vector<8x1xf32>
    %c2_46 = arith.constant 2 : index
    %c0_47 = arith.constant 0 : index
    %c0_48 = arith.constant 0 : index
    %c0_49 = arith.constant 0 : index
    %82 = vector.load %arg6[%c2_46, %c0_47, %c0_48, %c0_49] : memref<3x4x8x1xf32, #tpu.memory_space<vmem>>, vector<1x1x8x1xf32>
    %83 = vector.shape_cast %82 : vector<1x1x8x1xf32> to vector<8x1xf32>
    %cst_50 = arith.constant dense<0.000000e+00> : vector<8xf32>
    %84 = vector.multi_reduction <add>, %77, %cst_50 [1] : vector<8x256xf32> to vector<8xf32>
    %85 = vector.shape_cast %84 : vector<8xf32> to vector<8x1xf32>
    %cst_51 = arith.constant 3.906250e-03 : f32
    %86 = vector.broadcast %cst_51 : f32 to vector<8x1xf32>
    %87 = arith.mulf %85, %86 : vector<8x1xf32>
    %88 = arith.mulf %77, %77 : vector<8x256xf32>
    %cst_52 = arith.constant dense<0.000000e+00> : vector<8xf32>
    %89 = vector.multi_reduction <add>, %88, %cst_52 [1] : vector<8x256xf32> to vector<8xf32>
    %90 = vector.shape_cast %89 : vector<8xf32> to vector<8x1xf32>
    %cst_53 = arith.constant 3.906250e-03 : f32
    %91 = vector.broadcast %cst_53 : f32 to vector<8x1xf32>
    %92 = arith.mulf %90, %91 : vector<8x1xf32>
    %93 = arith.mulf %87, %87 : vector<8x1xf32>
    %94 = arith.subf %92, %93 : vector<8x1xf32>
    %cst_54 = arith.constant 9.99999974E-6 : f32
    %95 = vector.broadcast %cst_54 : f32 to vector<8x1xf32>
    %96 = arith.addf %94, %95 : vector<8x1xf32>
    %97 = math.rsqrt %96 : vector<8x1xf32>
    %98 = arith.mulf %79, %97 : vector<8x1xf32>
    %99 = arith.mulf %87, %98 : vector<8x1xf32>
    %100 = arith.subf %81, %99 : vector<8x1xf32>
    %101 = vector.broadcast %98 : vector<8x1xf32> to vector<8x256xf32>
    %102 = arith.mulf %77, %101 : vector<8x256xf32>
    %103 = vector.broadcast %100 : vector<8x1xf32> to vector<8x256xf32>
    %104 = arith.addf %102, %103 : vector<8x256xf32>
    %cst_55 = arith.constant 0.000000e+00 : f32
    %105 = vector.broadcast %cst_55 : f32 to vector<8x256xf32>
    %106 = arith.cmpf oge, %104, %105 : vector<8x256xf32>
    %107 = vector.broadcast %83 : vector<8x1xf32> to vector<8x256xf32>
    %108 = arith.mulf %107, %104 : vector<8x256xf32>
    %109 = arith.select %106, %104, %108 : vector<8x256xi1>, vector<8x256xf32>
    %c16 = arith.constant 16 : index
    %c0_56 = arith.constant 0 : index
    %110 = vector.load %arg8[%c16, %c0_56] : memref<32x256xf32, #tpu.memory_space<vmem>>, vector<8x256xf32>
    tpu.vector_store %arg8[%c16, %c0_56], %109 {strides = array<i32>} : memref<32x256xf32, #tpu.memory_space<vmem>>, vector<8x256xf32>,
    %c16_57 = arith.constant 16 : index
    %c0_58 = arith.constant 0 : index
    %111 = vector.load %arg8[%c16_57, %c0_58] : memref<32x256xf32, #tpu.memory_space<vmem>>, vector<16x256xf32>
    %c32_i32 = arith.constant 32 : i32
    %112 = vector.broadcast %c32_i32 : i32 to vector<1x256xi32>
    %113 = arith.cmpi sge, %3, %112 : vector<1x256xi32>
    %cst_59 = arith.constant 1.000000e+00 : f32
    %cst_60 = arith.constant 0.000000e+00 : f32
    %114 = vector.broadcast %cst_59 : f32 to vector<1x256xf32>
    %115 = vector.broadcast %cst_60 : f32 to vector<1x256xf32>
    %116 = arith.select %113, %114, %115 : vector<1x256xi1>, vector<1x256xf32>
    %cst_61 = arith.constant 0.000000e+00 : f32
    %117 = vector.broadcast %cst_61 : f32 to vector<8x256xf32>
    %c33_i32 = arith.constant 33 : i32
    %118 = tpu.dynamic_rotate %111 by %c33_i32 dim 1 : vector<16x256xf32>, i32 -> vector<16x256xf32>
    %119 = arith.mulf %116, %24 : vector<1x256xf32>
    %120 = vector.broadcast %119 : vector<1x256xf32> to vector<16x256xf32>
    %121 = arith.mulf %118, %120 : vector<16x256xf32>
    %c0_62 = arith.constant 0 : index
    %c0_63 = arith.constant 0 : index
    %c0_64 = arith.constant 0 : index
    %122 = vector.load %arg3[%c0_62, %c0_63, %c0_64] : memref<6x8x16xf32, #tpu.memory_space<vmem>>, vector<1x8x16xf32>
    %123 = vector.shape_cast %122 : vector<1x8x16xf32> to vector<8x16xf32>
    %cst_65 = arith.constant dense<0.000000e+00> : vector<8x256xf32>
    %124 = tpu.matmul %123, %121, %cst_65 {dimension_numbers = #tpu.dot_dimension_numbers<[1], [0], [0], [1], [0, 0, 1, 1], [], []>} : vector<8x16xf32>, vector<16x256xf32>, vector<8x256xf32> -> vector<8x256xf32>
    %125 = arith.addf %117, %124 : vector<8x256xf32>
    %c32_i32_66 = arith.constant 32 : i32
    %126 = tpu.dynamic_rotate %111 by %c32_i32_66 dim 1 : vector<16x256xf32>, i32 -> vector<16x256xf32>
    %127 = vector.broadcast %116 : vector<1x256xf32> to vector<16x256xf32>
    %128 = arith.mulf %126, %127 : vector<16x256xf32>
    %c1_67 = arith.constant 1 : index
    %c0_68 = arith.constant 0 : index
    %c0_69 = arith.constant 0 : index
    %129 = vector.load %arg3[%c1_67, %c0_68, %c0_69] : memref<6x8x16xf32, #tpu.memory_space<vmem>>, vector<1x8x16xf32>
    %130 = vector.shape_cast %129 : vector<1x8x16xf32> to vector<8x16xf32>
    %cst_70 = arith.constant dense<0.000000e+00> : vector<8x256xf32>
    %131 = tpu.matmul %130, %128, %cst_70 {dimension_numbers = #tpu.dot_dimension_numbers<[1], [0], [0], [1], [0, 0, 1, 1], [], []>} : vector<8x16xf32>, vector<16x256xf32>, vector<8x256xf32> -> vector<8x256xf32>
    %132 = arith.addf %125, %131 : vector<8x256xf32>
    %c31_i32 = arith.constant 31 : i32
    %133 = tpu.dynamic_rotate %111 by %c31_i32 dim 1 : vector<16x256xf32>, i32 -> vector<16x256xf32>
    %134 = arith.mulf %116, %29 : vector<1x256xf32>
    %135 = vector.broadcast %134 : vector<1x256xf32> to vector<16x256xf32>
    %136 = arith.mulf %133, %135 : vector<16x256xf32>
    %c2_71 = arith.constant 2 : index
    %c0_72 = arith.constant 0 : index
    %c0_73 = arith.constant 0 : index
    %137 = vector.load %arg3[%c2_71, %c0_72, %c0_73] : memref<6x8x16xf32, #tpu.memory_space<vmem>>, vector<1x8x16xf32>
    %138 = vector.shape_cast %137 : vector<1x8x16xf32> to vector<8x16xf32>
    %cst_74 = arith.constant dense<0.000000e+00> : vector<8x256xf32>
    %139 = tpu.matmul %138, %136, %cst_74 {dimension_numbers = #tpu.dot_dimension_numbers<[1], [0], [0], [1], [0, 0, 1, 1], [], []>} : vector<8x16xf32>, vector<16x256xf32>, vector<8x256xf32> -> vector<8x256xf32>
    %140 = arith.addf %132, %139 : vector<8x256xf32>
    %c1_i32_75 = arith.constant 1 : i32
    %141 = tpu.dynamic_rotate %111 by %c1_i32_75 dim 1 : vector<16x256xf32>, i32 -> vector<16x256xf32>
    %142 = vector.broadcast %24 : vector<1x256xf32> to vector<16x256xf32>
    %143 = arith.mulf %141, %142 : vector<16x256xf32>
    %c3_76 = arith.constant 3 : index
    %c0_77 = arith.constant 0 : index
    %c0_78 = arith.constant 0 : index
    %144 = vector.load %arg3[%c3_76, %c0_77, %c0_78] : memref<6x8x16xf32, #tpu.memory_space<vmem>>, vector<1x8x16xf32>
    %145 = vector.shape_cast %144 : vector<1x8x16xf32> to vector<8x16xf32>
    %cst_79 = arith.constant dense<0.000000e+00> : vector<8x256xf32>
    %146 = tpu.matmul %145, %143, %cst_79 {dimension_numbers = #tpu.dot_dimension_numbers<[1], [0], [0], [1], [0, 0, 1, 1], [], []>} : vector<8x16xf32>, vector<16x256xf32>, vector<8x256xf32> -> vector<8x256xf32>
    %147 = arith.addf %140, %146 : vector<8x256xf32>
    %c4_80 = arith.constant 4 : index
    %c0_81 = arith.constant 0 : index
    %c0_82 = arith.constant 0 : index
    %148 = vector.load %arg3[%c4_80, %c0_81, %c0_82] : memref<6x8x16xf32, #tpu.memory_space<vmem>>, vector<1x8x16xf32>
    %149 = vector.shape_cast %148 : vector<1x8x16xf32> to vector<8x16xf32>
    %cst_83 = arith.constant dense<0.000000e+00> : vector<8x256xf32>
    %150 = tpu.matmul %149, %111, %cst_83 {dimension_numbers = #tpu.dot_dimension_numbers<[1], [0], [0], [1], [0, 0, 1, 1], [], []>} : vector<8x16xf32>, vector<16x256xf32>, vector<8x256xf32> -> vector<8x256xf32>
    %151 = arith.addf %147, %150 : vector<8x256xf32>
    %c255_i32_84 = arith.constant 255 : i32
    %152 = tpu.dynamic_rotate %111 by %c255_i32_84 dim 1 : vector<16x256xf32>, i32 -> vector<16x256xf32>
    %153 = vector.broadcast %29 : vector<1x256xf32> to vector<16x256xf32>
    %154 = arith.mulf %152, %153 : vector<16x256xf32>
    %c5_85 = arith.constant 5 : index
    %c0_86 = arith.constant 0 : index
    %c0_87 = arith.constant 0 : index
    %155 = vector.load %arg3[%c5_85, %c0_86, %c0_87] : memref<6x8x16xf32, #tpu.memory_space<vmem>>, vector<1x8x16xf32>
    %156 = vector.shape_cast %155 : vector<1x8x16xf32> to vector<8x16xf32>
    %cst_88 = arith.constant dense<0.000000e+00> : vector<8x256xf32>
    %157 = tpu.matmul %156, %154, %cst_88 {dimension_numbers = #tpu.dot_dimension_numbers<[1], [0], [0], [1], [0, 0, 1, 1], [], []>} : vector<8x16xf32>, vector<16x256xf32>, vector<8x256xf32> -> vector<8x256xf32>
    %158 = arith.addf %151, %157 : vector<8x256xf32>
    %c0_89 = arith.constant 0 : index
    %c1_90 = arith.constant 1 : index
    %c0_91 = arith.constant 0 : index
    %c0_92 = arith.constant 0 : index
    %159 = vector.load %arg6[%c0_89, %c1_90, %c0_91, %c0_92] : memref<3x4x8x1xf32, #tpu.memory_space<vmem>>, vector<1x1x8x1xf32>
    %160 = vector.shape_cast %159 : vector<1x1x8x1xf32> to vector<8x1xf32>
    %c1_93 = arith.constant 1 : index
    %c1_94 = arith.constant 1 : index
    %c0_95 = arith.constant 0 : index
    %c0_96 = arith.constant 0 : index
    %161 = vector.load %arg6[%c1_93, %c1_94, %c0_95, %c0_96] : memref<3x4x8x1xf32, #tpu.memory_space<vmem>>, vector<1x1x8x1xf32>
    %162 = vector.shape_cast %161 : vector<1x1x8x1xf32> to vector<8x1xf32>
    %c2_97 = arith.constant 2 : index
    %c1_98 = arith.constant 1 : index
    %c0_99 = arith.constant 0 : index
    %c0_100 = arith.constant 0 : index
    %163 = vector.load %arg6[%c2_97, %c1_98, %c0_99, %c0_100] : memref<3x4x8x1xf32, #tpu.memory_space<vmem>>, vector<1x1x8x1xf32>
    %164 = vector.shape_cast %163 : vector<1x1x8x1xf32> to vector<8x1xf32>
    %cst_101 = arith.constant dense<0.000000e+00> : vector<8xf32>
    %165 = vector.multi_reduction <add>, %158, %cst_101 [1] : vector<8x256xf32> to vector<8xf32>
    %166 = vector.shape_cast %165 : vector<8xf32> to vector<8x1xf32>
    %cst_102 = arith.constant 3.906250e-03 : f32
    %167 = vector.broadcast %cst_102 : f32 to vector<8x1xf32>
    %168 = arith.mulf %166, %167 : vector<8x1xf32>
    %169 = arith.mulf %158, %158 : vector<8x256xf32>
    %cst_103 = arith.constant dense<0.000000e+00> : vector<8xf32>
    %170 = vector.multi_reduction <add>, %169, %cst_103 [1] : vector<8x256xf32> to vector<8xf32>
    %171 = vector.shape_cast %170 : vector<8xf32> to vector<8x1xf32>
    %cst_104 = arith.constant 3.906250e-03 : f32
    %172 = vector.broadcast %cst_104 : f32 to vector<8x1xf32>
    %173 = arith.mulf %171, %172 : vector<8x1xf32>
    %174 = arith.mulf %168, %168 : vector<8x1xf32>
    %175 = arith.subf %173, %174 : vector<8x1xf32>
    %cst_105 = arith.constant 9.99999974E-6 : f32
    %176 = vector.broadcast %cst_105 : f32 to vector<8x1xf32>
    %177 = arith.addf %175, %176 : vector<8x1xf32>
    %178 = math.rsqrt %177 : vector<8x1xf32>
    %179 = arith.mulf %160, %178 : vector<8x1xf32>
    %180 = arith.mulf %168, %179 : vector<8x1xf32>
    %181 = arith.subf %162, %180 : vector<8x1xf32>
    %182 = vector.broadcast %179 : vector<8x1xf32> to vector<8x256xf32>
    %183 = arith.mulf %158, %182 : vector<8x256xf32>
    %184 = vector.broadcast %181 : vector<8x1xf32> to vector<8x256xf32>
    %185 = arith.addf %183, %184 : vector<8x256xf32>
    %cst_106 = arith.constant 0.000000e+00 : f32
    %186 = vector.broadcast %cst_106 : f32 to vector<8x256xf32>
    %187 = arith.cmpf oge, %185, %186 : vector<8x256xf32>
    %188 = vector.broadcast %164 : vector<8x1xf32> to vector<8x256xf32>
    %189 = arith.mulf %188, %185 : vector<8x256xf32>
    %190 = arith.select %187, %185, %189 : vector<8x256xi1>, vector<8x256xf32>
    %c8 = arith.constant 8 : index
    %c0_107 = arith.constant 0 : index
    %191 = vector.load %arg8[%c8, %c0_107] : memref<32x256xf32, #tpu.memory_space<vmem>>, vector<8x256xf32>
    tpu.vector_store %arg8[%c8, %c0_107], %190 {strides = array<i32>} : memref<32x256xf32, #tpu.memory_space<vmem>>, vector<8x256xf32>,
    %c8_108 = arith.constant 8 : index
    %c0_109 = arith.constant 0 : index
    %192 = vector.load %arg8[%c8_108, %c0_109] : memref<32x256xf32, #tpu.memory_space<vmem>>, vector<24x256xf32>
    %c64_i32 = arith.constant 64 : i32
    %193 = vector.broadcast %c64_i32 : i32 to vector<1x256xi32>
    %194 = arith.cmpi sge, %3, %193 : vector<1x256xi32>
    %cst_110 = arith.constant 1.000000e+00 : f32
    %cst_111 = arith.constant 0.000000e+00 : f32
    %195 = vector.broadcast %cst_110 : f32 to vector<1x256xf32>
    %196 = vector.broadcast %cst_111 : f32 to vector<1x256xf32>
    %197 = arith.select %194, %195, %196 : vector<1x256xi1>, vector<1x256xf32>
    %cst_112 = arith.constant 0.000000e+00 : f32
    %198 = vector.broadcast %cst_112 : f32 to vector<8x256xf32>
    %c65_i32 = arith.constant 65 : i32
    %199 = tpu.dynamic_rotate %192 by %c65_i32 dim 1 : vector<24x256xf32>, i32 -> vector<24x256xf32>
    %200 = arith.mulf %197, %24 : vector<1x256xf32>
    %201 = vector.broadcast %200 : vector<1x256xf32> to vector<24x256xf32>
    %202 = arith.mulf %199, %201 : vector<24x256xf32>
    %c0_113 = arith.constant 0 : index
    %c0_114 = arith.constant 0 : index
    %c0_115 = arith.constant 0 : index
    %203 = vector.load %arg4[%c0_113, %c0_114, %c0_115] : memref<6x8x24xf32, #tpu.memory_space<vmem>>, vector<1x8x24xf32>
    %204 = vector.shape_cast %203 : vector<1x8x24xf32> to vector<8x24xf32>
    %cst_116 = arith.constant dense<0.000000e+00> : vector<8x256xf32>
    %205 = tpu.matmul %204, %202, %cst_116 {dimension_numbers = #tpu.dot_dimension_numbers<[1], [0], [0], [1], [0, 0, 1, 1], [], []>} : vector<8x24xf32>, vector<24x256xf32>, vector<8x256xf32> -> vector<8x256xf32>
    %206 = arith.addf %198, %205 : vector<8x256xf32>
    %c64_i32_117 = arith.constant 64 : i32
    %207 = tpu.dynamic_rotate %192 by %c64_i32_117 dim 1 : vector<24x256xf32>, i32 -> vector<24x256xf32>
    %208 = vector.broadcast %197 : vector<1x256xf32> to vector<24x256xf32>
    %209 = arith.mulf %207, %208 : vector<24x256xf32>
    %c1_118 = arith.constant 1 : index
    %c0_119 = arith.constant 0 : index
    %c0_120 = arith.constant 0 : index
    %210 = vector.load %arg4[%c1_118, %c0_119, %c0_120] : memref<6x8x24xf32, #tpu.memory_space<vmem>>, vector<1x8x24xf32>
    %211 = vector.shape_cast %210 : vector<1x8x24xf32> to vector<8x24xf32>
    %cst_121 = arith.constant dense<0.000000e+00> : vector<8x256xf32>
    %212 = tpu.matmul %211, %209, %cst_121 {dimension_numbers = #tpu.dot_dimension_numbers<[1], [0], [0], [1], [0, 0, 1, 1], [], []>} : vector<8x24xf32>, vector<24x256xf32>, vector<8x256xf32> -> vector<8x256xf32>
    %213 = arith.addf %206, %212 : vector<8x256xf32>
    %c63_i32 = arith.constant 63 : i32
    %214 = tpu.dynamic_rotate %192 by %c63_i32 dim 1 : vector<24x256xf32>, i32 -> vector<24x256xf32>
    %215 = arith.mulf %197, %29 : vector<1x256xf32>
    %216 = vector.broadcast %215 : vector<1x256xf32> to vector<24x256xf32>
    %217 = arith.mulf %214, %216 : vector<24x256xf32>
    %c2_122 = arith.constant 2 : index
    %c0_123 = arith.constant 0 : index
    %c0_124 = arith.constant 0 : index
    %218 = vector.load %arg4[%c2_122, %c0_123, %c0_124] : memref<6x8x24xf32, #tpu.memory_space<vmem>>, vector<1x8x24xf32>
    %219 = vector.shape_cast %218 : vector<1x8x24xf32> to vector<8x24xf32>
    %cst_125 = arith.constant dense<0.000000e+00> : vector<8x256xf32>
    %220 = tpu.matmul %219, %217, %cst_125 {dimension_numbers = #tpu.dot_dimension_numbers<[1], [0], [0], [1], [0, 0, 1, 1], [], []>} : vector<8x24xf32>, vector<24x256xf32>, vector<8x256xf32> -> vector<8x256xf32>
    %221 = arith.addf %213, %220 : vector<8x256xf32>
    %c1_i32_126 = arith.constant 1 : i32
    %222 = tpu.dynamic_rotate %192 by %c1_i32_126 dim 1 : vector<24x256xf32>, i32 -> vector<24x256xf32>
    %223 = vector.broadcast %24 : vector<1x256xf32> to vector<24x256xf32>
    %224 = arith.mulf %222, %223 : vector<24x256xf32>
    %c3_127 = arith.constant 3 : index
    %c0_128 = arith.constant 0 : index
    %c0_129 = arith.constant 0 : index
    %225 = vector.load %arg4[%c3_127, %c0_128, %c0_129] : memref<6x8x24xf32, #tpu.memory_space<vmem>>, vector<1x8x24xf32>
    %226 = vector.shape_cast %225 : vector<1x8x24xf32> to vector<8x24xf32>
    %cst_130 = arith.constant dense<0.000000e+00> : vector<8x256xf32>
    %227 = tpu.matmul %226, %224, %cst_130 {dimension_numbers = #tpu.dot_dimension_numbers<[1], [0], [0], [1], [0, 0, 1, 1], [], []>} : vector<8x24xf32>, vector<24x256xf32>, vector<8x256xf32> -> vector<8x256xf32>
    %228 = arith.addf %221, %227 : vector<8x256xf32>
    %c4_131 = arith.constant 4 : index
    %c0_132 = arith.constant 0 : index
    %c0_133 = arith.constant 0 : index
    %229 = vector.load %arg4[%c4_131, %c0_132, %c0_133] : memref<6x8x24xf32, #tpu.memory_space<vmem>>, vector<1x8x24xf32>
    %230 = vector.shape_cast %229 : vector<1x8x24xf32> to vector<8x24xf32>
    %cst_134 = arith.constant dense<0.000000e+00> : vector<8x256xf32>
    %231 = tpu.matmul %230, %192, %cst_134 {dimension_numbers = #tpu.dot_dimension_numbers<[1], [0], [0], [1], [0, 0, 1, 1], [], []>} : vector<8x24xf32>, vector<24x256xf32>, vector<8x256xf32> -> vector<8x256xf32>
    %232 = arith.addf %228, %231 : vector<8x256xf32>
    %c255_i32_135 = arith.constant 255 : i32
    %233 = tpu.dynamic_rotate %192 by %c255_i32_135 dim 1 : vector<24x256xf32>, i32 -> vector<24x256xf32>
    %234 = vector.broadcast %29 : vector<1x256xf32> to vector<24x256xf32>
    %235 = arith.mulf %233, %234 : vector<24x256xf32>
    %c5_136 = arith.constant 5 : index
    %c0_137 = arith.constant 0 : index
    %c0_138 = arith.constant 0 : index
    %236 = vector.load %arg4[%c5_136, %c0_137, %c0_138] : memref<6x8x24xf32, #tpu.memory_space<vmem>>, vector<1x8x24xf32>
    %237 = vector.shape_cast %236 : vector<1x8x24xf32> to vector<8x24xf32>
    %cst_139 = arith.constant dense<0.000000e+00> : vector<8x256xf32>
    %238 = tpu.matmul %237, %235, %cst_139 {dimension_numbers = #tpu.dot_dimension_numbers<[1], [0], [0], [1], [0, 0, 1, 1], [], []>} : vector<8x24xf32>, vector<24x256xf32>, vector<8x256xf32> -> vector<8x256xf32>
    %239 = arith.addf %232, %238 : vector<8x256xf32>
    %c0_140 = arith.constant 0 : index
    %c2_141 = arith.constant 2 : index
    %c0_142 = arith.constant 0 : index
    %c0_143 = arith.constant 0 : index
    %240 = vector.load %arg6[%c0_140, %c2_141, %c0_142, %c0_143] : memref<3x4x8x1xf32, #tpu.memory_space<vmem>>, vector<1x1x8x1xf32>
    %241 = vector.shape_cast %240 : vector<1x1x8x1xf32> to vector<8x1xf32>
    %c1_144 = arith.constant 1 : index
    %c2_145 = arith.constant 2 : index
    %c0_146 = arith.constant 0 : index
    %c0_147 = arith.constant 0 : index
    %242 = vector.load %arg6[%c1_144, %c2_145, %c0_146, %c0_147] : memref<3x4x8x1xf32, #tpu.memory_space<vmem>>, vector<1x1x8x1xf32>
    %243 = vector.shape_cast %242 : vector<1x1x8x1xf32> to vector<8x1xf32>
    %c2_148 = arith.constant 2 : index
    %c2_149 = arith.constant 2 : index
    %c0_150 = arith.constant 0 : index
    %c0_151 = arith.constant 0 : index
    %244 = vector.load %arg6[%c2_148, %c2_149, %c0_150, %c0_151] : memref<3x4x8x1xf32, #tpu.memory_space<vmem>>, vector<1x1x8x1xf32>
    %245 = vector.shape_cast %244 : vector<1x1x8x1xf32> to vector<8x1xf32>
    %cst_152 = arith.constant dense<0.000000e+00> : vector<8xf32>
    %246 = vector.multi_reduction <add>, %239, %cst_152 [1] : vector<8x256xf32> to vector<8xf32>
    %247 = vector.shape_cast %246 : vector<8xf32> to vector<8x1xf32>
    %cst_153 = arith.constant 3.906250e-03 : f32
    %248 = vector.broadcast %cst_153 : f32 to vector<8x1xf32>
    %249 = arith.mulf %247, %248 : vector<8x1xf32>
    %250 = arith.mulf %239, %239 : vector<8x256xf32>
    %cst_154 = arith.constant dense<0.000000e+00> : vector<8xf32>
    %251 = vector.multi_reduction <add>, %250, %cst_154 [1] : vector<8x256xf32> to vector<8xf32>
    %252 = vector.shape_cast %251 : vector<8xf32> to vector<8x1xf32>
    %cst_155 = arith.constant 3.906250e-03 : f32
    %253 = vector.broadcast %cst_155 : f32 to vector<8x1xf32>
    %254 = arith.mulf %252, %253 : vector<8x1xf32>
    %255 = arith.mulf %249, %249 : vector<8x1xf32>
    %256 = arith.subf %254, %255 : vector<8x1xf32>
    %cst_156 = arith.constant 9.99999974E-6 : f32
    %257 = vector.broadcast %cst_156 : f32 to vector<8x1xf32>
    %258 = arith.addf %256, %257 : vector<8x1xf32>
    %259 = math.rsqrt %258 : vector<8x1xf32>
    %260 = arith.mulf %241, %259 : vector<8x1xf32>
    %261 = arith.mulf %249, %260 : vector<8x1xf32>
    %262 = arith.subf %243, %261 : vector<8x1xf32>
    %263 = vector.broadcast %260 : vector<8x1xf32> to vector<8x256xf32>
    %264 = arith.mulf %239, %263 : vector<8x256xf32>
    %265 = vector.broadcast %262 : vector<8x1xf32> to vector<8x256xf32>
    %266 = arith.addf %264, %265 : vector<8x256xf32>
    %cst_157 = arith.constant 0.000000e+00 : f32
    %267 = vector.broadcast %cst_157 : f32 to vector<8x256xf32>
    %268 = arith.cmpf oge, %266, %267 : vector<8x256xf32>
    %269 = vector.broadcast %245 : vector<8x1xf32> to vector<8x256xf32>
    %270 = arith.mulf %269, %266 : vector<8x256xf32>
    %271 = arith.select %268, %266, %270 : vector<8x256xi1>, vector<8x256xf32>
    %c0_158 = arith.constant 0 : index
    %c0_159 = arith.constant 0 : index
    %272 = vector.load %arg8[%c0_158, %c0_159] : memref<32x256xf32, #tpu.memory_space<vmem>>, vector<8x256xf32>
    tpu.vector_store %arg8[%c0_158, %c0_159], %271 {strides = array<i32>} : memref<32x256xf32, #tpu.memory_space<vmem>>, vector<8x256xf32>,
    %c0_160 = arith.constant 0 : index
    %c0_161 = arith.constant 0 : index
    %273 = vector.load %arg8[%c0_160, %c0_161] : memref<32x256xf32, #tpu.memory_space<vmem>>, vector<32x256xf32>
    %c128_i32 = arith.constant 128 : i32
    %274 = vector.broadcast %c128_i32 : i32 to vector<1x256xi32>
    %275 = arith.cmpi sge, %3, %274 : vector<1x256xi32>
    %cst_162 = arith.constant 1.000000e+00 : f32
    %cst_163 = arith.constant 0.000000e+00 : f32
    %276 = vector.broadcast %cst_162 : f32 to vector<1x256xf32>
    %277 = vector.broadcast %cst_163 : f32 to vector<1x256xf32>
    %278 = arith.select %275, %276, %277 : vector<1x256xi1>, vector<1x256xf32>
    %cst_164 = arith.constant 0.000000e+00 : f32
    %279 = vector.broadcast %cst_164 : f32 to vector<8x256xf32>
    %c129_i32 = arith.constant 129 : i32
    %280 = tpu.dynamic_rotate %273 by %c129_i32 dim 1 : vector<32x256xf32>, i32 -> vector<32x256xf32>
    %281 = arith.mulf %278, %24 : vector<1x256xf32>
    %282 = vector.broadcast %281 : vector<1x256xf32> to vector<32x256xf32>
    %283 = arith.mulf %280, %282 : vector<32x256xf32>
    %c0_165 = arith.constant 0 : index
    %c0_166 = arith.constant 0 : index
    %c0_167 = arith.constant 0 : index
    %284 = vector.load %arg5[%c0_165, %c0_166, %c0_167] : memref<6x8x32xf32, #tpu.memory_space<vmem>>, vector<1x8x32xf32>
    %285 = vector.shape_cast %284 : vector<1x8x32xf32> to vector<8x32xf32>
    %cst_168 = arith.constant dense<0.000000e+00> : vector<8x256xf32>
    %286 = tpu.matmul %285, %283, %cst_168 {dimension_numbers = #tpu.dot_dimension_numbers<[1], [0], [0], [1], [0, 0, 1, 1], [], []>} : vector<8x32xf32>, vector<32x256xf32>, vector<8x256xf32> -> vector<8x256xf32>
    %287 = arith.addf %279, %286 : vector<8x256xf32>
    %c128_i32_169 = arith.constant 128 : i32
    %288 = tpu.dynamic_rotate %273 by %c128_i32_169 dim 1 : vector<32x256xf32>, i32 -> vector<32x256xf32>
    %289 = vector.broadcast %278 : vector<1x256xf32> to vector<32x256xf32>
    %290 = arith.mulf %288, %289 : vector<32x256xf32>
    %c1_170 = arith.constant 1 : index
    %c0_171 = arith.constant 0 : index
    %c0_172 = arith.constant 0 : index
    %291 = vector.load %arg5[%c1_170, %c0_171, %c0_172] : memref<6x8x32xf32, #tpu.memory_space<vmem>>, vector<1x8x32xf32>
    %292 = vector.shape_cast %291 : vector<1x8x32xf32> to vector<8x32xf32>
    %cst_173 = arith.constant dense<0.000000e+00> : vector<8x256xf32>
    %293 = tpu.matmul %292, %290, %cst_173 {dimension_numbers = #tpu.dot_dimension_numbers<[1], [0], [0], [1], [0, 0, 1, 1], [], []>} : vector<8x32xf32>, vector<32x256xf32>, vector<8x256xf32> -> vector<8x256xf32>
    %294 = arith.addf %287, %293 : vector<8x256xf32>
    %c127_i32 = arith.constant 127 : i32
    %295 = tpu.dynamic_rotate %273 by %c127_i32 dim 1 : vector<32x256xf32>, i32 -> vector<32x256xf32>
    %296 = arith.mulf %278, %29 : vector<1x256xf32>
    %297 = vector.broadcast %296 : vector<1x256xf32> to vector<32x256xf32>
    %298 = arith.mulf %295, %297 : vector<32x256xf32>
    %c2_174 = arith.constant 2 : index
    %c0_175 = arith.constant 0 : index
    %c0_176 = arith.constant 0 : index
    %299 = vector.load %arg5[%c2_174, %c0_175, %c0_176] : memref<6x8x32xf32, #tpu.memory_space<vmem>>, vector<1x8x32xf32>
    %300 = vector.shape_cast %299 : vector<1x8x32xf32> to vector<8x32xf32>
    %cst_177 = arith.constant dense<0.000000e+00> : vector<8x256xf32>
    %301 = tpu.matmul %300, %298, %cst_177 {dimension_numbers = #tpu.dot_dimension_numbers<[1], [0], [0], [1], [0, 0, 1, 1], [], []>} : vector<8x32xf32>, vector<32x256xf32>, vector<8x256xf32> -> vector<8x256xf32>
    %302 = arith.addf %294, %301 : vector<8x256xf32>
    %c1_i32_178 = arith.constant 1 : i32
    %303 = tpu.dynamic_rotate %273 by %c1_i32_178 dim 1 : vector<32x256xf32>, i32 -> vector<32x256xf32>
    %304 = vector.broadcast %24 : vector<1x256xf32> to vector<32x256xf32>
    %305 = arith.mulf %303, %304 : vector<32x256xf32>
    %c3_179 = arith.constant 3 : index
    %c0_180 = arith.constant 0 : index
    %c0_181 = arith.constant 0 : index
    %306 = vector.load %arg5[%c3_179, %c0_180, %c0_181] : memref<6x8x32xf32, #tpu.memory_space<vmem>>, vector<1x8x32xf32>
    %307 = vector.shape_cast %306 : vector<1x8x32xf32> to vector<8x32xf32>
    %cst_182 = arith.constant dense<0.000000e+00> : vector<8x256xf32>
    %308 = tpu.matmul %307, %305, %cst_182 {dimension_numbers = #tpu.dot_dimension_numbers<[1], [0], [0], [1], [0, 0, 1, 1], [], []>} : vector<8x32xf32>, vector<32x256xf32>, vector<8x256xf32> -> vector<8x256xf32>
    %309 = arith.addf %302, %308 : vector<8x256xf32>
    %c4_183 = arith.constant 4 : index
    %c0_184 = arith.constant 0 : index
    %c0_185 = arith.constant 0 : index
    %310 = vector.load %arg5[%c4_183, %c0_184, %c0_185] : memref<6x8x32xf32, #tpu.memory_space<vmem>>, vector<1x8x32xf32>
    %311 = vector.shape_cast %310 : vector<1x8x32xf32> to vector<8x32xf32>
    %cst_186 = arith.constant dense<0.000000e+00> : vector<8x256xf32>
    %312 = tpu.matmul %311, %273, %cst_186 {dimension_numbers = #tpu.dot_dimension_numbers<[1], [0], [0], [1], [0, 0, 1, 1], [], []>} : vector<8x32xf32>, vector<32x256xf32>, vector<8x256xf32> -> vector<8x256xf32>
    %313 = arith.addf %309, %312 : vector<8x256xf32>
    %c255_i32_187 = arith.constant 255 : i32
    %314 = tpu.dynamic_rotate %273 by %c255_i32_187 dim 1 : vector<32x256xf32>, i32 -> vector<32x256xf32>
    %315 = vector.broadcast %29 : vector<1x256xf32> to vector<32x256xf32>
    %316 = arith.mulf %314, %315 : vector<32x256xf32>
    %c5_188 = arith.constant 5 : index
    %c0_189 = arith.constant 0 : index
    %c0_190 = arith.constant 0 : index
    %317 = vector.load %arg5[%c5_188, %c0_189, %c0_190] : memref<6x8x32xf32, #tpu.memory_space<vmem>>, vector<1x8x32xf32>
    %318 = vector.shape_cast %317 : vector<1x8x32xf32> to vector<8x32xf32>
    %cst_191 = arith.constant dense<0.000000e+00> : vector<8x256xf32>
    %319 = tpu.matmul %318, %316, %cst_191 {dimension_numbers = #tpu.dot_dimension_numbers<[1], [0], [0], [1], [0, 0, 1, 1], [], []>} : vector<8x32xf32>, vector<32x256xf32>, vector<8x256xf32> -> vector<8x256xf32>
    %320 = arith.addf %313, %319 : vector<8x256xf32>
    %c0_192 = arith.constant 0 : index
    %c3_193 = arith.constant 3 : index
    %c0_194 = arith.constant 0 : index
    %c0_195 = arith.constant 0 : index
    %321 = vector.load %arg6[%c0_192, %c3_193, %c0_194, %c0_195] : memref<3x4x8x1xf32, #tpu.memory_space<vmem>>, vector<1x1x8x1xf32>
    %322 = vector.shape_cast %321 : vector<1x1x8x1xf32> to vector<8x1xf32>
    %c1_196 = arith.constant 1 : index
    %c3_197 = arith.constant 3 : index
    %c0_198 = arith.constant 0 : index
    %c0_199 = arith.constant 0 : index
    %323 = vector.load %arg6[%c1_196, %c3_197, %c0_198, %c0_199] : memref<3x4x8x1xf32, #tpu.memory_space<vmem>>, vector<1x1x8x1xf32>
    %324 = vector.shape_cast %323 : vector<1x1x8x1xf32> to vector<8x1xf32>
    %c2_200 = arith.constant 2 : index
    %c3_201 = arith.constant 3 : index
    %c0_202 = arith.constant 0 : index
    %c0_203 = arith.constant 0 : index
    %325 = vector.load %arg6[%c2_200, %c3_201, %c0_202, %c0_203] : memref<3x4x8x1xf32, #tpu.memory_space<vmem>>, vector<1x1x8x1xf32>
    %326 = vector.shape_cast %325 : vector<1x1x8x1xf32> to vector<8x1xf32>
    %cst_204 = arith.constant dense<0.000000e+00> : vector<8xf32>
    %327 = vector.multi_reduction <add>, %320, %cst_204 [1] : vector<8x256xf32> to vector<8xf32>
    %328 = vector.shape_cast %327 : vector<8xf32> to vector<8x1xf32>
    %cst_205 = arith.constant 3.906250e-03 : f32
    %329 = vector.broadcast %cst_205 : f32 to vector<8x1xf32>
    %330 = arith.mulf %328, %329 : vector<8x1xf32>
    %331 = arith.mulf %320, %320 : vector<8x256xf32>
    %cst_206 = arith.constant dense<0.000000e+00> : vector<8xf32>
    %332 = vector.multi_reduction <add>, %331, %cst_206 [1] : vector<8x256xf32> to vector<8xf32>
    %333 = vector.shape_cast %332 : vector<8xf32> to vector<8x1xf32>
    %cst_207 = arith.constant 3.906250e-03 : f32
    %334 = vector.broadcast %cst_207 : f32 to vector<8x1xf32>
    %335 = arith.mulf %333, %334 : vector<8x1xf32>
    %336 = arith.mulf %330, %330 : vector<8x1xf32>
    %337 = arith.subf %335, %336 : vector<8x1xf32>
    %cst_208 = arith.constant 9.99999974E-6 : f32
    %338 = vector.broadcast %cst_208 : f32 to vector<8x1xf32>
    %339 = arith.addf %337, %338 : vector<8x1xf32>
    %340 = math.rsqrt %339 : vector<8x1xf32>
    %341 = arith.mulf %322, %340 : vector<8x1xf32>
    %342 = arith.mulf %330, %341 : vector<8x1xf32>
    %343 = arith.subf %324, %342 : vector<8x1xf32>
    %344 = vector.broadcast %341 : vector<8x1xf32> to vector<8x256xf32>
    %345 = arith.mulf %320, %344 : vector<8x256xf32>
    %346 = vector.broadcast %343 : vector<8x1xf32> to vector<8x256xf32>
    %347 = arith.addf %345, %346 : vector<8x256xf32>
    %cst_209 = arith.constant 0.000000e+00 : f32
    %348 = vector.broadcast %cst_209 : f32 to vector<8x256xf32>
    %349 = arith.cmpf oge, %347, %348 : vector<8x256xf32>
    %350 = vector.broadcast %326 : vector<8x1xf32> to vector<8x256xf32>
    %351 = arith.mulf %350, %347 : vector<8x256xf32>
    %352 = arith.select %349, %347, %351 : vector<8x256xi1>, vector<8x256xf32>
    %c0_210 = arith.constant 0 : index
    %c0_211 = arith.constant 0 : index
    %c0_212 = arith.constant 0 : index
    %353 = vector.load %arg7[%c0_210, %c0_211, %c0_212] : memref<1x8x256xf32, #tpu.memory_space<vmem>>, vector<1x8x256xf32>
    %354 = vector.shape_cast %353 : vector<1x8x256xf32> to vector<8x256xf32>
    %355 = vector.shape_cast %352 : vector<8x256xf32> to vector<1x8x256xf32>
    tpu.vector_store %arg7[%c0_210, %c0_211, %c0_212], %355 {strides = array<i32>} : memref<1x8x256xf32, #tpu.memory_space<vmem>>, vector<1x8x256xf32>,
    return
  }
  func.func @transform_0(%arg0: i32) -> (i32, i32, i32) {
    %c0_i32 = arith.constant 0 : i32
    %c0_i32_0 = arith.constant 0 : i32
    %c0_i32_1 = arith.constant 0 : i32
    return %arg0, %c0_i32, %c0_i32_0 : i32, i32, i32
  }
  func.func @transform_1(%arg0: i32) -> (i32, i32, i32) {
    %c0_i32 = arith.constant 0 : i32
    %c0_i32_0 = arith.constant 0 : i32
    %c0_i32_1 = arith.constant 0 : i32
    %c0_i32_2 = arith.constant 0 : i32
    return %c0_i32, %c0_i32_0, %c0_i32_1 : i32, i32, i32
  }
  func.func @transform_2(%arg0: i32) -> (i32, i32, i32) {
    %c0_i32 = arith.constant 0 : i32
    %c0_i32_0 = arith.constant 0 : i32
    %c0_i32_1 = arith.constant 0 : i32
    %c0_i32_2 = arith.constant 0 : i32
    return %c0_i32, %c0_i32_0, %c0_i32_1 : i32, i32, i32
  }
  func.func @transform_3(%arg0: i32) -> (i32, i32, i32) {
    %c0_i32 = arith.constant 0 : i32
    %c0_i32_0 = arith.constant 0 : i32
    %c0_i32_1 = arith.constant 0 : i32
    %c0_i32_2 = arith.constant 0 : i32
    return %c0_i32, %c0_i32_0, %c0_i32_1 : i32, i32, i32
  }
  func.func @transform_4(%arg0: i32) -> (i32, i32, i32) {
    %c0_i32 = arith.constant 0 : i32
    %c0_i32_0 = arith.constant 0 : i32
    %c0_i32_1 = arith.constant 0 : i32
    %c0_i32_2 = arith.constant 0 : i32
    return %c0_i32, %c0_i32_0, %c0_i32_1 : i32, i32, i32
  }
  func.func @transform_5(%arg0: i32) -> (i32, i32, i32, i32) {
    %c0_i32 = arith.constant 0 : i32
    %c0_i32_0 = arith.constant 0 : i32
    %c0_i32_1 = arith.constant 0 : i32
    %c0_i32_2 = arith.constant 0 : i32
    %c0_i32_3 = arith.constant 0 : i32
    return %c0_i32, %c0_i32_0, %c0_i32_1, %c0_i32_2 : i32, i32, i32, i32
  }
  func.func @transform_6(%arg0: i32) -> (i32, i32, i32) {
    %c0_i32 = arith.constant 0 : i32
    %c0_i32_0 = arith.constant 0 : i32
    %c0_i32_1 = arith.constant 0 : i32
    return %arg0, %c0_i32, %c0_i32_0 : i32, i32, i32
  }
}

</mosaic_0001>

<llo_original>
// kernel: dilated_dense_net_forward.1
$region0: #{dilated_dense_net_forward.1}
  #allocation0 [shape = 'u32[]', space=smem, size = 0x4, offset = 0x4, fixed_abs, tag = 'smem constant byte address 0x4 - core index']
  #allocation1 [shape = 'u32[144,128]{1,0:T(1,128)}', space=vmem, size = 0x12000, scoped, tag = 'internal scratch']
  #allocation2 [shape = 'f32[32,256]{1,0:T(8,128)}', space=vmem, size = 0x8000, scoped, tag = 'scratch operand']
  %s0 = inlined_call_operand.vmem [shape: f32[2,8,256], index: 0, kind: input, shape index: {}]
  %s1 = inlined_call_operand.vmem [shape: f32[6,8,8], index: 1, kind: input, shape index: {}]
  %s2 = inlined_call_operand.vmem [shape: f32[6,8,16], index: 2, kind: input, shape index: {}]
  %s3 = inlined_call_operand.vmem [shape: f32[6,8,24], index: 3, kind: input, shape index: {}]
  %s4 = inlined_call_operand.vmem [shape: f32[6,8,32], index: 4, kind: input, shape index: {}]
  %s5 = inlined_call_operand.vmem [shape: f32[3,4,8,1], index: 5, kind: input, shape index: {}]
  %s6 = inlined_call_operand.vmem [shape: f32[2,8,256], index: 6, kind: output, shape index: {}]
  %s7 = sld [smem:[#allocation0]]
  $region57: #{dilated_dense_net_forward.1} parent=0
    _
  %s9 = ssub.s32 1, %s7
  %s10 = scalar_select 0, %s9, %s7
  loop: start=0, step=1, limit=4
  $region2: #{dilated_dense_net_forward.1} parent=0 // loop_pre_header
    _
  $region3: #{dilated_dense_net_forward.1} parent=0 // loop_header
    %s12 = sphi 0, %s16
    %p13 = scmp.ge.s32.totalorder %s12, 4
    %s22 = sphi 0, %s24
    %s25 = sphi 0, %s22
    %s26 = sphi 0, %s25
    %s42 = sphi 0, %s26
    %s46 = sphi 0, %s46
    %s48 = sphi 0, %s46
    %s49 = sphi 0, %s48
    %s63 = sphi 0, %s49
    %s67 = sphi 0, %s67
    %s69 = sphi 0, %s67
    %s70 = sphi 0, %s69
    %s84 = sphi 0, %s70
    %s88 = sphi 0, %s88
    %s90 = sphi 0, %s88
    %s91 = sphi 0, %s90
    %s105 = sphi 0, %s91
    %s109 = sphi 0, %s109
    %s111 = sphi 0, %s109
    %s112 = sphi 0, %s111
    %s126 = sphi 0, %s112
    %s130 = sphi 0, %s130
    %s132 = sphi 0, %s130
    %s133 = sphi 0, %s132
    %s147 = sphi 0, %s133
    %s153 = sphi 0, %s155
    %s156 = sphi 0, %s153
    %s157 = sphi 0, %s156
    %s173 = sphi 0, %s157
  $region4: #{dilated_dense_net_forward.1} parent=0 // loop_header_branch
    %15 = sbr.rel (%p13) target = $region8
  $region5: #{dilated_dense_net_forward.1} parent=0 // loop_body
    %s17 = ssub.s32 %s12, 1
    %s18 = ssub.s32 %s12, 2
    %s19 = sadd.s32 %s12, 1
    %s20 = ssub.s32 %s12, %s19
    %p21 = scmp.eq.s32.totalorder %s20, 0
    %s23 = sadd.s32 %s22, 1
    %s24 = scalar_select %p21, %s22, %s23
    %p27 = pneg %p21
    %p28 = scmp.eq.s32.totalorder %s12, 1
    %p29 = por %p27, %p28
    %p30 = scmp.ne.s32.totalorder %s22, %s25
    %p31 = scmp.eq.s32.totalorder %s12, 0
    %p32 = por %p30, %p31
    %p33 = scmp.ne.s32.totalorder %s22, %s25
    %p34 = scmp.eq.s32.totalorder %s17, 1
    %p35 = por %p33, %p34
    %p36 = scmp.ne.s32.totalorder %s25, %s26
    %p37 = scmp.eq.s32.totalorder %s17, 0
    %p38 = por %p36, %p37
    %p39 = scmp.ne.s32.totalorder %s25, %s26
    %p40 = scmp.eq.s32.totalorder %s18, 1
    %p41 = por %p39, %p40
    %p43 = scmp.ne.s32.totalorder %s26, %s42
    %p44 = scmp.eq.s32.totalorder %s18, 0
    %p45 = por %p43, %p44
    %s47 = sadd.s32 %s46, 1
    %p50 = scmp.eq.s32.totalorder %s12, 1
    %p51 = scmp.ne.s32.totalorder %s46, %s48
    %p52 = scmp.eq.s32.totalorder %s12, 0
    %p53 = por %p51, %p52
    %p54 = scmp.ne.s32.totalorder %s46, %s48
    %p55 = scmp.eq.s32.totalorder %s17, 1
    %p56 = por %p54, %p55
    %p57 = scmp.ne.s32.totalorder %s48, %s49
    %p58 = scmp.eq.s32.totalorder %s17, 0
    %p59 = por %p57, %p58
    %p60 = scmp.ne.s32.totalorder %s48, %s49
    %p61 = scmp.eq.s32.totalorder %s18, 1
    %p62 = por %p60, %p61
    %p64 = scmp.ne.s32.totalorder %s49, %s63
    %p65 = scmp.eq.s32.totalorder %s18, 0
    %p66 = por %p64, %p65
    %s68 = sadd.s32 %s67, 1
    %p71 = scmp.eq.s32.totalorder %s12, 1
    %p72 = scmp.ne.s32.totalorder %s67, %s69
    %p73 = scmp.eq.s32.totalorder %s12, 0
    %p74 = por %p72, %p73
    %p75 = scmp.ne.s32.totalorder %s67, %s69
    %p76 = scmp.eq.s32.totalorder %s17, 1
    %p77 = por %p75, %p76
    %p78 = scmp.ne.s32.totalorder %s69, %s70
    %p79 = scmp.eq.s32.totalorder %s17, 0
    %p80 = por %p78, %p79
    %p81 = scmp.ne.s32.totalorder %s69, %s70
    %p82 = scmp.eq.s32.totalorder %s18, 1
    %p83 = por %p81, %p82
    %p85 = scmp.ne.s32.totalorder %s70, %s84
    %p86 = scmp.eq.s32.totalorder %s18, 0
    %p87 = por %p85, %p86
    %s89 = sadd.s32 %s88, 1
    %p92 = scmp.eq.s32.totalorder %s12, 1
    %p93 = scmp.ne.s32.totalorder %s88, %s90
    %p94 = scmp.eq.s32.totalorder %s12, 0
    %p95 = por %p93, %p94
    %p96 = scmp.ne.s32.totalorder %s88, %s90
    %p97 = scmp.eq.s32.totalorder %s17, 1
    %p98 = por %p96, %p97
    %p99 = scmp.ne.s32.totalorder %s90, %s91
    %p100 = scmp.eq.s32.totalorder %s17, 0
    %p101 = por %p99, %p100
    %p102 = scmp.ne.s32.totalorder %s90, %s91
    %p103 = scmp.eq.s32.totalorder %s18, 1
    %p104 = por %p102, %p103
    %p106 = scmp.ne.s32.totalorder %s91, %s105
    %p107 = scmp.eq.s32.totalorder %s18, 0
    %p108 = por %p106, %p107
    %s110 = sadd.s32 %s109, 1
    %p113 = scmp.eq.s32.totalorder %s12, 1
    %p114 = scmp.ne.s32.totalorder %s109, %s111
    %p115 = scmp.eq.s32.totalorder %s12, 0
    %p116 = por %p114, %p115
    %p117 = scmp.ne.s32.totalorder %s109, %s111
    %p118 = scmp.eq.s32.totalorder %s17, 1
    %p119 = por %p117, %p118
    %p120 = scmp.ne.s32.totalorder %s111, %s112
    %p121 = scmp.eq.s32.totalorder %s17, 0
    %p122 = por %p120, %p121
    %p123 = scmp.ne.s32.totalorder %s111, %s112
    %p124 = scmp.eq.s32.totalorder %s18, 1
    %p125 = por %p123, %p124
    %p127 = scmp.ne.s32.totalorder %s112, %s126
    %p128 = scmp.eq.s32.totalorder %s18, 0
    %p129 = por %p127, %p128
    %s131 = sadd.s32 %s130, 1
    %p134 = scmp.eq.s32.totalorder %s12, 1
    %p135 = scmp.ne.s32.totalorder %s130, %s132
    %p136 = scmp.eq.s32.totalorder %s12, 0
    %p137 = por %p135, %p136
    %p138 = scmp.ne.s32.totalorder %s130, %s132
    %p139 = scmp.eq.s32.totalorder %s17, 1
    %p140 = por %p138, %p139
    %p141 = scmp.ne.s32.totalorder %s132, %s133
    %p142 = scmp.eq.s32.totalorder %s17, 0
    %p143 = por %p141, %p142
    %p144 = scmp.ne.s32.totalorder %s132, %s133
    %p145 = scmp.eq.s32.totalorder %s18, 1
    %p146 = por %p144, %p145
    %p148 = scmp.ne.s32.totalorder %s133, %s147
    %p149 = scmp.eq.s32.totalorder %s18, 0
    %p150 = por %p148, %p149
    %s151 = ssub.s32 %s12, %s19
    %p152 = scmp.eq.s32.totalorder %s151, 0
    %s154 = sadd.s32 %s153, 1
    %s155 = scalar_select %p152, %s153, %s154
    %p158 = pneg %p152
    %p159 = scmp.eq.s32.totalorder %s12, 1
    %p160 = por %p158, %p159
    %p161 = scmp.ne.s32.totalorder %s153, %s156
    %p162 = scmp.eq.s32.totalorder %s12, 0
    %p163 = por %p161, %p162
    %p164 = scmp.ne.s32.totalorder %s153, %s156
    %p165 = scmp.eq.s32.totalorder %s17, 1
    %p166 = por %p164, %p165
    %p167 = scmp.ne.s32.totalorder %s156, %s157
    %p168 = scmp.eq.s32.totalorder %s17, 0
    %p169 = por %p167, %p168
    %p170 = scmp.ne.s32.totalorder %s156, %s157
    %p171 = scmp.eq.s32.totalorder %s18, 1
    %p172 = por %p170, %p171
    %p174 = scmp.ne.s32.totalorder %s157, %s173
    %p175 = scmp.eq.s32.totalorder %s18, 0
    %p176 = por %p174, %p175
    %p177 = scmp.le.s32.totalorder 1, %s12
    %p178 = scmp.lt.s32.totalorder %s12, 3
    %p179 = pnand %p177, %p178
    %p180 = pneg %p179
    // Predicated region
    $region9: #{dilated_dense_net_forward.1} parent=5 // pred_check
      _
    $region10: #{dilated_dense_net_forward.1} parent=5 // pred_check_branch
      %182 = sbr.rel (%p179) target = $region12
    $region11: #{dilated_dense_net_forward.1} parent=5 // pred_region
      %s183 = ssub.s32 %s12, 1
      // Predicated region
      $region13: #{dilated_dense_net_forward.1} parent=11 // pred_check
        %p184 = pneg %p59
      $region14: #{dilated_dense_net_forward.1} parent=11 // pred_check_branch
        %186 = sbr.rel (%p184) target = $region16
      $region15: #{dilated_dense_net_forward.1} parent=11 // pred_region
        _
      $region16: #{dilated_dense_net_forward.1} parent=11 // pred_fallthru
        _
      // Predicated region
      $region17: #{dilated_dense_net_forward.1} parent=11 // pred_check
        %p187 = pneg %p80
      $region18: #{dilated_dense_net_forward.1} parent=11 // pred_check_branch
        %189 = sbr.rel (%p187) target = $region20
      $region19: #{dilated_dense_net_forward.1} parent=11 // pred_region
        _
      $region20: #{dilated_dense_net_forward.1} parent=11 // pred_fallthru
        _
      // Predicated region
      $region21: #{dilated_dense_net_forward.1} parent=11 // pred_check
        %p190 = pneg %p101
      $region22: #{dilated_dense_net_forward.1} parent=11 // pred_check_branch
        %192 = sbr.rel (%p190) target = $region24
      $region23: #{dilated_dense_net_forward.1} parent=11 // pred_region
        _
      $region24: #{dilated_dense_net_forward.1} parent=11 // pred_fallthru
        _
      // Predicated region
      $region25: #{dilated_dense_net_forward.1} parent=11 // pred_check
        %p193 = pneg %p122
      $region26: #{dilated_dense_net_forward.1} parent=11 // pred_check_branch
        %195 = sbr.rel (%p193) target = $region28
      $region27: #{dilated_dense_net_forward.1} parent=11 // pred_region
        _
      $region28: #{dilated_dense_net_forward.1} parent=11 // pred_fallthru
        _
      // Predicated region
      $region29: #{dilated_dense_net_forward.1} parent=11 // pred_check
        %p196 = pneg %p143
      $region30: #{dilated_dense_net_forward.1} parent=11 // pred_check_branch
        %198 = sbr.rel (%p196) target = $region32
      $region31: #{dilated_dense_net_forward.1} parent=11 // pred_region
        _
      $region32: #{dilated_dense_net_forward.1} parent=11 // pred_fallthru
        _
    $region12: #{dilated_dense_net_forward.1} parent=5 // pred_fallthru
      _
    %p199 = scmp.lt.s32.totalorder %s12, 2
    // Predicated region
    $region33: #{dilated_dense_net_forward.1} parent=5 // pred_check
      %p200 = pneg %p199
    $region34: #{dilated_dense_net_forward.1} parent=5 // pred_check_branch
      %202 = sbr.rel (%p200) target = $region36
    $region35: #{dilated_dense_net_forward.1} parent=5 // pred_region
      // Predicated region
      $region37: #{dilated_dense_net_forward.1} parent=35 // pred_check
        %p203 = pneg %p32
      $region38: #{dilated_dense_net_forward.1} parent=35 // pred_check_branch
        %205 = sbr.rel (%p203) target = $region40
      $region39: #{dilated_dense_net_forward.1} parent=35 // pred_region
        %p206 = scmp.lt.s32.totalorder %s12, 1
        %s207 = scalar_select %p206, %s12, 1
        %s208 = smul.addr %s207, 2
        %s209 = smul.addr %s208, 8
        %s210 = scalar_lea.vmem %s0, %s209
      $region40: #{dilated_dense_net_forward.1} parent=35 // pred_fallthru
        _
    $region36: #{dilated_dense_net_forward.1} parent=5 // pred_fallthru
      _
    %p211 = scmp.le.s32.totalorder 1, %s12
    %p212 = scmp.lt.s32.totalorder %s12, 3
    %p213 = pnand %p211, %p212
    %p214 = pneg %p213
    // Predicated region
    $region41: #{dilated_dense_net_forward.1} parent=5 // pred_check
      _
    $region42: #{dilated_dense_net_forward.1} parent=5 // pred_check_branch
      %216 = sbr.rel (%p213) target = $region44
    $region43: #{dilated_dense_net_forward.1} parent=5 // pred_region
      %s217 = ssub.s32 %s12, 1
      %p218 = scmp.lt.s32.totalorder %s17, 1
      %s219 = scalar_select %p218, %s17, 1
      %s220 = smul.addr %s219, 2
      %s221 = smul.addr %s220, 8
      %s222 = scalar_lea.vmem %s0, %s221
      %p223 = pneg %p38
      %p224 = pneg %p35
      %p225 = pneg %p59
      %p226 = pneg %p56
      %p227 = pneg %p80
      %p228 = pneg %p77
      %p229 = pneg %p101
      %p230 = pneg %p98
      %p231 = pneg %p122
      %p232 = pneg %p119
      %p233 = pneg %p143
      %p234 = pneg %p140
      %p235 = pneg %p169
      %p236 = pneg %p166
      %p237 = scmp.lt.s32.totalorder %s17, 1
      %s238 = scalar_select %p237, %s17, 1
      %s239 = smul.addr %s238, 2
      %s240 = smul.addr %s239, 8
      %s241 = scalar_lea.vmem %s6, %s240
      %p242 = scmp.lt.s32.totalorder %s17, 1
      %s243 = scalar_select %p242, %s17, 1
      %s244 = smul.addr %s243, 2
      %s245 = smul.addr %s244, 8
      %s246 = scalar_lea.vmem %s0, %s245
      %p247 = scmp.lt.s32.totalorder %s17, 1
      %s248 = scalar_select %p247, %s17, 1
      %s249 = smul.addr %s248, 2
      %s250 = smul.addr %s249, 8
      %s251 = scalar_lea.vmem %s6, %s250
      %v252 = vld [vmem:[%s246] sm:$0xff]
      %v253 = vld [vmem:[%s246 + $0x8] sm:$0xff]
      %254 = vst [vmem:[#allocation2 + $0x30] sm:$0xff] %v252
      %255 = vst [vmem:[#allocation2 + $0x38] sm:$0xff] %v253
      %v256 = vlaneseq
      %v257 = vand.u32 %v256, 127
      %v258 = vadd.s32 %v257, 128
      %vm259 = vcmp.lt.s32.totalorder %v257, 0
      %v260 = vsub.s32 0, %v257
      %v261 = vsel %vm259, %v260, %v257
      %v262 = vshrl.u32 %v261, 4
      %v263 = vand.u32 %v261, 15
      %v264 = vsub.s32 0, %v263
      %v265 = vsel %vm259, %v264, %v263
      %vm266 = vcmp.lt.s32.totalorder %v258, 0
      %v267 = vsub.s32 0, %v258
      %v268 = vsel %vm266, %v267, %v258
      %v269 = vshrl.u32 %v268, 4
      %v270 = vand.u32 %v268, 15
      %v271 = vsub.s32 0, %v270
      %v272 = vsel %vm266, %v271, %v270
      %vm273 = vcmp.ne.s32.totalorder %v265, 0
      %vm274 = vcmp.ne.s32.totalorder %v272, 0
      %vm275 = vcmp.lt.s32.totalorder %v265, 0
      %vm276 = vcmp.lt.s32.totalorder %v272, 0
      %vm277 = vmand %vm275, %vm273
      %vm278 = vmand %vm276, %vm274
      %v279 = vadd.s32 %v265, 16
      %v280 = vadd.s32 %v272, 16
      %v281 = vsel %vm277, %v279, %v265
      %v282 = vsel %vm278, %v280, %v272
      %vm283 = vcmp.eq.s32.totalorder %v281, 0
      %vm284 = vcmp.eq.s32.totalorder %v282, 0
      %v285 = vsel %vm283, 0.0, 1.0
      %v286 = vsel %vm284, 0.0, 1.0
      %vm287 = vcmp.eq.s32.totalorder %v281, 15
      %vm288 = vcmp.eq.s32.totalorder %v282, 15
      %v289 = vsel %vm287, 0.0, 1.0
      %v290 = vsel %vm288, 0.0, 1.0
      %v291 = vld [vmem:[#allocation2 + $0x30] sm:$0xff]
      %v292 = vld [vmem:[#allocation2 + $0x38] sm:$0xff]
      %vm293 = vcmp.ge.s32.totalorder %v257, 16
      %vm294 = vcmp.ge.s32.totalorder %v258, 16
      %v295 = vsel %vm293, 1.0, 0.0
      %v296 = vsel %vm294, 1.0, 0.0
      %297 = vrot.lane.b32.xlu0 %v291, 17
      %v298 = vpop.permute.xlu0 %297
      %299 = vrot.lane.b32.xlu0 %v292, 17
      %v300 = vpop.permute.xlu0 %299
      %vm301 = vcmp.lt.s32.totalorder %v257, 17
      %v302 = vsel %vm301, %v298, %v300
      %v303 = vsel %vm301, %v300, %v298
      %v304 = vmul.f32 %v295, %v285
      %v305 = vmul.f32 %v296, %v286
      %v306 = vmul.f32 %v303, %v304
      %v307 = vmul.f32 %v302, %v305
      %v308 = vld [vmem:[%s1] sm:$0xff]
      %309 = vrot.lane.b32.xlu0 %v291, 16
      %v310 = vpop.permute.xlu0 %309
      %311 = vrot.lane.b32.xlu0 %v292, 16
      %v312 = vpop.permute.xlu0 %311
      %vm313 = vcmp.lt.s32.totalorder %v257, 16
      %v314 = vsel %vm313, %v310, %v312
      %v315 = vsel %vm313, %v312, %v310
      %v316 = vmul.f32 %v315, %v295
      %v317 = vmul.f32 %v314, %v296
      %s318 = scalar_lea.vmem %s1, 8
      %v319 = vld [vmem:[%s318] sm:$0xff]
      %vm320 = vcmask 64512
      %v322 = vsel %vm320, %v319, 0
      %324 = vmatprep.subr.mxu0 0.0
      %325 = vmatpush1.msra.mxu0 0.0
      %326 = vmatprep.subr.mxu0 0.0
      %327 = vmatpush1.msra.mxu0 0.0
      %328 = vmatprep.subr.mxu0 0.0
      %329 = vmatpush1.msra.mxu0 0.0
      %330 = vmatprep.subr.mxu0 0.0
      %331 = vmatpush1.msra.mxu0 0.0
      %332 = vmatprep.subr.mxu0 0.0
      %333 = vmatpush1.msra.mxu0 0.0
      %334 = vmatprep.subr.mxu0 0.0
      %335 = vmatpush1.msra.mxu0 0.0
      %336 = vmatprep.subr.mxu0 0.0
      %337 = vmatpush1.msra.mxu0 0.0
      %338 = vmatprep.subr.mxu0 0.0
      %339 = vmatpush1.msra.mxu0 0.0
      %340 = vmatprep.subr.mxu0 0.0
      %341 = vmatpush1.msra.mxu0 0.0
      %342 = vmatprep.subr.mxu0 0.0
      %343 = vmatpush1.msra.mxu0 0.0
      %344 = vmatprep.subr.mxu0 0.0
      %345 = vmatpush1.msra.mxu0 0.0
      %346 = vmatprep.subr.mxu0 0.0
      %347 = vmatpush1.msra.mxu0 0.0
      %348 = vmatprep.subr.mxu0 0.0
      %349 = vmatpush1.msra.mxu0 0.0
      %350 = vmatprep.subr.mxu0 0.0
      %351 = vmatpush1.msra.mxu0 0.0
      %352 = vmatprep.subr.mxu0 0.0
      %353 = vmatpush1.msra.mxu0 0.0
      %354 = vmatprep.subr.mxu0 %v317
      %355 = vmatpush1.msra.mxu0 %v316
      %356 = vmatprep.subr.mxu0 0.0
      %357 = vmatpush2.msra.mxu0 0.0
      %358 = vmatprep.subr.mxu0 0.0
      %359 = vmatpush2.msra.mxu0 0.0
      %360 = vmatprep.subr.mxu0 0.0
      %361 = vmatpush2.msra.mxu0 0.0
      %362 = vmatprep.subr.mxu0 0.0
      %363 = vmatpush2.msra.mxu0 0.0
      %364 = vmatprep.subr.mxu0 0.0
      %365 = vmatpush2.msra.mxu0 0.0
      %366 = vmatprep.subr.mxu0 0.0
      %367 = vmatpush2.msra.mxu0 0.0
      %368 = vmatprep.subr.mxu0 0.0
      %369 = vmatpush2.msra.mxu0 0.0
      %370 = vmatprep.subr.mxu0 0.0
      %371 = vmatpush2.msra.mxu0 0.0
      %372 = vmatprep.subr.mxu0 0.0
      %373 = vmatpush2.msra.mxu0 0.0
      %374 = vmatprep.subr.mxu0 0.0
      %375 = vmatpush2.msra.mxu0 0.0
      %376 = vmatprep.subr.mxu0 0.0
      %377 = vmatpush2.msra.mxu0 0.0
      %378 = vmatprep.subr.mxu0 0.0
      %379 = vmatpush2.msra.mxu0 0.0
      %380 = vmatprep.subr.mxu0 0.0
      %381 = vmatpush2.msra.mxu0 0.0
      %382 = vmatprep.subr.mxu0 0.0
      %383 = vmatpush2.msra.mxu0 0.0
      %384 = vmatprep.subr.mxu0 0.0
      %385 = vmatpush2.msra.mxu0 0.0
      %386 = vmatprep.subr.mxu0 0.0
      %387 = vmatpush2.msra.mxu0 0.0
      %388 = vmatprep.mubr.f32.mxu0 0.0
      %389 = vmatmul.mubr.f32.gmra.mxu0 %v322
      %v390 = vpop.f32.mrf.mxu0
      %v391 = vadd.f32 0.0, %v390
      %v392 = vpop.f32.mrf.mxu0
      %v393 = vadd.f32 0.0, %v392
      %394 = vdwg.mxu0
      %v396 = vsel %vm320, %v308, 0
      %398 = vmatprep.subr.mxu0 0.0
      %399 = vmatpush1.msra.mxu0 0.0
      %400 = vmatprep.subr.mxu0 0.0
      %401 = vmatpush1.msra.mxu0 0.0
      %402 = vmatprep.subr.mxu0 0.0
      %403 = vmatpush1.msra.mxu0 0.0
      %404 = vmatprep.subr.mxu0 0.0
      %405 = vmatpush1.msra.mxu0 0.0
      %406 = vmatprep.subr.mxu0 0.0
      %407 = vmatpush1.msra.mxu0 0.0
      %408 = vmatprep.subr.mxu0 0.0
      %409 = vmatpush1.msra.mxu0 0.0
      %410 = vmatprep.subr.mxu0 0.0
      %411 = vmatpush1.msra.mxu0 0.0
      %412 = vmatprep.subr.mxu0 0.0
      %413 = vmatpush1.msra.mxu0 0.0
      %414 = vmatprep.subr.mxu0 0.0
      %415 = vmatpush1.msra.mxu0 0.0
      %416 = vmatprep.subr.mxu0 0.0
      %417 = vmatpush1.msra.mxu0 0.0
      %418 = vmatprep.subr.mxu0 0.0
      %419 = vmatpush1.msra.mxu0 0.0
      %420 = vmatprep.subr.mxu0 0.0
      %421 = vmatpush1.msra.mxu0 0.0
      %422 = vmatprep.subr.mxu0 0.0
      %423 = vmatpush1.msra.mxu0 0.0
      %424 = vmatprep.subr.mxu0 0.0
      %425 = vmatpush1.msra.mxu0 0.0
      %426 = vmatprep.subr.mxu0 0.0
      %427 = vmatpush1.msra.mxu0 0.0
      %428 = vmatprep.subr.mxu0 %v307
      %429 = vmatpush1.msra.mxu0 %v306
      %430 = vmatprep.subr.mxu0 0.0
      %431 = vmatpush2.msra.mxu0 0.0
      %432 = vmatprep.subr.mxu0 0.0
      %433 = vmatpush2.msra.mxu0 0.0
      %434 = vmatprep.subr.mxu0 0.0
      %435 = vmatpush2.msra.mxu0 0.0
      %436 = vmatprep.subr.mxu0 0.0
      %437 = vmatpush2.msra.mxu0 0.0
      %438 = vmatprep.subr.mxu0 0.0
      %439 = vmatpush2.msra.mxu0 0.0
      %440 = vmatprep.subr.mxu0 0.0
      %441 = vmatpush2.msra.mxu0 0.0
      %442 = vmatprep.subr.mxu0 0.0
      %443 = vmatpush2.msra.mxu0 0.0
      %444 = vmatprep.subr.mxu0 0.0
      %445 = vmatpush2.msra.mxu0 0.0
      %446 = vmatprep.subr.mxu0 0.0
      %447 = vmatpush2.msra.mxu0 0.0
      %448 = vmatprep.subr.mxu0 0.0
      %449 = vmatpush2.msra.mxu0 0.0
      %450 = vmatprep.subr.mxu0 0.0
      %451 = vmatpush2.msra.mxu0 0.0
      %452 = vmatprep.subr.mxu0 0.0
      %453 = vmatpush2.msra.mxu0 0.0
      %454 = vmatprep.subr.mxu0 0.0
      %455 = vmatpush2.msra.mxu0 0.0
      %456 = vmatprep.subr.mxu0 0.0
      %457 = vmatpush2.msra.mxu0 0.0
      %458 = vmatprep.subr.mxu0 0.0
      %459 = vmatpush2.msra.mxu0 0.0
      %460 = vmatprep.subr.mxu0 0.0
      %461 = vmatpush2.msra.mxu0 0.0
      %462 = vmatprep.mubr.f32.mxu0 0.0
      %463 = vmatmul.mubr.f32.gmra.mxu0 %v396
      %v464 = vpop.f32.mrf.mxu0
      %v465 = vadd.f32 %v391, %v464
      %v466 = vpop.f32.mrf.mxu0
      %v467 = vadd.f32 %v393, %v466
      %468 = vdwg.mxu0
      %469 = vrot.lane.b32.xlu0 %v291, 15
      %v470 = vpop.permute.xlu0 %469
      %471 = vrot.lane.b32.xlu0 %v292, 15
      %v472 = vpop.permute.xlu0 %471
      %vm473 = vcmp.lt.s32.totalorder %v257, 15
      %v474 = vsel %vm473, %v470, %v472
      %v475 = vsel %vm473, %v472, %v470
      %v476 = vmul.f32 %v295, %v289
      %v477 = vmul.f32 %v296, %v290
      %v478 = vmul.f32 %v475, %v476
      %v479 = vmul.f32 %v474, %v477
      %s480 = scalar_lea.vmem %s1, 16
      %v481 = vld [vmem:[%s480] sm:$0xff]
      %v483 = vsel %vm320, %v481, 0
      %485 = vmatprep.subr.mxu0 0.0
      %486 = vmatpush1.msra.mxu0 0.0
      %487 = vmatprep.subr.mxu0 0.0
      %488 = vmatpush1.msra.mxu0 0.0
      %489 = vmatprep.subr.mxu0 0.0
      %490 = vmatpush1.msra.mxu0 0.0
      %491 = vmatprep.subr.mxu0 0.0
      %492 = vmatpush1.msra.mxu0 0.0
      %493 = vmatprep.subr.mxu0 0.0
      %494 = vmatpush1.msra.mxu0 0.0
      %495 = vmatprep.subr.mxu0 0.0
      %496 = vmatpush1.msra.mxu0 0.0
      %497 = vmatprep.subr.mxu0 0.0
      %498 = vmatpush1.msra.mxu0 0.0
      %499 = vmatprep.subr.mxu0 0.0
      %500 = vmatpush1.msra.mxu0 0.0
      %501 = vmatprep.subr.mxu0 0.0
      %502 = vmatpush1.msra.mxu0 0.0
      %503 = vmatprep.subr.mxu0 0.0
      %504 = vmatpush1.msra.mxu0 0.0
      %505 = vmatprep.subr.mxu0 0.0
      %506 = vmatpush1.msra.mxu0 0.0
      %507 = vmatprep.subr.mxu0 0.0
      %508 = vmatpush1.msra.mxu0 0.0
      %509 = vmatprep.subr.mxu0 0.0
      %510 = vmatpush1.msra.mxu0 0.0
      %511 = vmatprep.subr.mxu0 0.0
      %512 = vmatpush1.msra.mxu0 0.0
      %513 = vmatprep.subr.mxu0 0.0
      %514 = vmatpush1.msra.mxu0 0.0
      %515 = vmatprep.subr.mxu0 %v479
      %516 = vmatpush1.msra.mxu0 %v478
      %517 = vmatprep.subr.mxu0 0.0
      %518 = vmatpush2.msra.mxu0 0.0
      %519 = vmatprep.subr.mxu0 0.0
      %520 = vmatpush2.msra.mxu0 0.0
      %521 = vmatprep.subr.mxu0 0.0
      %522 = vmatpush2.msra.mxu0 0.0
      %523 = vmatprep.subr.mxu0 0.0
      %524 = vmatpush2.msra.mxu0 0.0
      %525 = vmatprep.subr.mxu0 0.0
      %526 = vmatpush2.msra.mxu0 0.0
      %527 = vmatprep.subr.mxu0 0.0
      %528 = vmatpush2.msra.mxu0 0.0
      %529 = vmatprep.subr.mxu0 0.0
      %530 = vmatpush2.msra.mxu0 0.0
      %531 = vmatprep.subr.mxu0 0.0
      %532 = vmatpush2.msra.mxu0 0.0
      %533 = vmatprep.subr.mxu0 0.0
      %534 = vmatpush2.msra.mxu0 0.0
      %535 = vmatprep.subr.mxu0 0.0
      %536 = vmatpush2.msra.mxu0 0.0
      %537 = vmatprep.subr.mxu0 0.0
      %538 = vmatpush2.msra.mxu0 0.0
      %539 = vmatprep.subr.mxu0 0.0
      %540 = vmatpush2.msra.mxu0 0.0
      %541 = vmatprep.subr.mxu0 0.0
      %542 = vmatpush2.msra.mxu0 0.0
      %543 = vmatprep.subr.mxu0 0.0
      %544 = vmatpush2.msra.mxu0 0.0
      %545 = vmatprep.subr.mxu0 0.0
      %546 = vmatpush2.msra.mxu0 0.0
      %547 = vmatprep.subr.mxu0 0.0
      %548 = vmatpush2.msra.mxu0 0.0
      %549 = vmatprep.mubr.f32.mxu0 0.0
      %550 = vmatmul.mubr.f32.gmra.mxu0 %v483
      %v551 = vpop.f32.mrf.mxu0
      %v552 = vadd.f32 0.0, %v551
      %v553 = vpop.f32.mrf.mxu0
      %v554 = vadd.f32 0.0, %v553
      %555 = vdwg.mxu0
      %v556 = vadd.f32 %v465, %v552
      %v557 = vadd.f32 %v467, %v554
      %558 = vrot.lane.b32.xlu0 %v291, 1
      %v559 = vpop.permute.xlu0 %558
      %560 = vrot.lane.b32.xlu0 %v292, 1
      %v561 = vpop.permute.xlu0 %560
      %vm562 = vcmp.lt.s32.totalorder %v257, 1
      %v563 = vsel %vm562, %v559, %v561
      %v564 = vsel %vm562, %v561, %v559
      %v565 = vmul.f32 %v564, %v285
      %v566 = vmul.f32 %v563, %v286
      %s567 = scalar_lea.vmem %s1, 24
      %v568 = vld [vmem:[%s567] sm:$0xff]
      %v570 = vsel %vm320, %v568, 0
      %572 = vmatprep.subr.mxu0 0.0
      %573 = vmatpush1.msra.mxu0 0.0
      %574 = vmatprep.subr.mxu0 0.0
      %575 = vmatpush1.msra.mxu0 0.0
      %576 = vmatprep.subr.mxu0 0.0
      %577 = vmatpush1.msra.mxu0 0.0
      %578 = vmatprep.subr.mxu0 0.0
      %579 = vmatpush1.msra.mxu0 0.0
      %580 = vmatprep.subr.mxu0 0.0
      %581 = vmatpush1.msra.mxu0 0.0
      %582 = vmatprep.subr.mxu0 0.0
      %583 = vmatpush1.msra.mxu0 0.0
      %584 = vmatprep.subr.mxu0 0.0
      %585 = vmatpush1.msra.mxu0 0.0
      %586 = vmatprep.subr.mxu0 0.0
      %587 = vmatpush1.msra.mxu0 0.0
      %588 = vmatprep.subr.mxu0 0.0
      %589 = vmatpush1.msra.mxu0 0.0
      %590 = vmatprep.subr.mxu0 0.0
      %591 = vmatpush1.msra.mxu0 0.0
      %592 = vmatprep.subr.mxu0 0.0
      %593 = vmatpush1.msra.mxu0 0.0
      %594 = vmatprep.subr.mxu0 0.0
      %595 = vmatpush1.msra.mxu0 0.0
      %596 = vmatprep.subr.mxu0 0.0
      %597 = vmatpush1.msra.mxu0 0.0
      %598 = vmatprep.subr.mxu0 0.0
      %599 = vmatpush1.msra.mxu0 0.0
      %600 = vmatprep.subr.mxu0 0.0
      %601 = vmatpush1.msra.mxu0 0.0
      %602 = vmatprep.subr.mxu0 %v566
      %603 = vmatpush1.msra.mxu0 %v565
      %604 = vmatprep.subr.mxu0 0.0
      %605 = vmatpush2.msra.mxu0 0.0
      %606 = vmatprep.subr.mxu0 0.0
      %607 = vmatpush2.msra.mxu0 0.0
      %608 = vmatprep.subr.mxu0 0.0
      %609 = vmatpush2.msra.mxu0 0.0
      %610 = vmatprep.subr.mxu0 0.0
      %611 = vmatpush2.msra.mxu0 0.0
      %612 = vmatprep.subr.mxu0 0.0
      %613 = vmatpush2.msra.mxu0 0.0
      %614 = vmatprep.subr.mxu0 0.0
      %615 = vmatpush2.msra.mxu0 0.0
      %616 = vmatprep.subr.mxu0 0.0
      %617 = vmatpush2.msra.mxu0 0.0
      %618 = vmatprep.subr.mxu0 0.0
      %619 = vmatpush2.msra.mxu0 0.0
      %620 = vmatprep.subr.mxu0 0.0
      %621 = vmatpush2.msra.mxu0 0.0
      %622 = vmatprep.subr.mxu0 0.0
      %623 = vmatpush2.msra.mxu0 0.0
      %624 = vmatprep.subr.mxu0 0.0
      %625 = vmatpush2.msra.mxu0 0.0
      %626 = vmatprep.subr.mxu0 0.0
      %627 = vmatpush2.msra.mxu0 0.0
      %628 = vmatprep.subr.mxu0 0.0
      %629 = vmatpush2.msra.mxu0 0.0
      %630 = vmatprep.subr.mxu0 0.0
      %631 = vmatpush2.msra.mxu0 0.0
      %632 = vmatprep.subr.mxu0 0.0
      %633 = vmatpush2.msra.mxu0 0.0
      %634 = vmatprep.subr.mxu0 0.0
      %635 = vmatpush2.msra.mxu0 0.0
      %636 = vmatprep.mubr.f32.mxu0 0.0
      %637 = vmatmul.mubr.f32.gmra.mxu0 %v570
      %v638 = vpop.f32.mrf.mxu0
      %v639 = vadd.f32 0.0, %v638
      %v640 = vpop.f32.mrf.mxu0
      %v641 = vadd.f32 0.0, %v640
      %642 = vdwg.mxu0
      %v643 = vadd.f32 %v556, %v639
      %v644 = vadd.f32 %v557, %v641
      %s645 = scalar_lea.vmem %s1, 32
      %v646 = vld [vmem:[%s645] sm:$0xff]
      %v648 = vsel %vm320, %v646, 0
      %650 = vmatprep.subr.mxu0 0.0
      %651 = vmatpush1.msra.mxu0 0.0
      %652 = vmatprep.subr.mxu0 0.0
      %653 = vmatpush1.msra.mxu0 0.0
      %654 = vmatprep.subr.mxu0 0.0
      %655 = vmatpush1.msra.mxu0 0.0
      %656 = vmatprep.subr.mxu0 0.0
      %657 = vmatpush1.msra.mxu0 0.0
      %658 = vmatprep.subr.mxu0 0.0
      %659 = vmatpush1.msra.mxu0 0.0
      %660 = vmatprep.subr.mxu0 0.0
      %661 = vmatpush1.msra.mxu0 0.0
      %662 = vmatprep.subr.mxu0 0.0
      %663 = vmatpush1.msra.mxu0 0.0
      %664 = vmatprep.subr.mxu0 0.0
      %665 = vmatpush1.msra.mxu0 0.0
      %666 = vmatprep.subr.mxu0 0.0
      %667 = vmatpush1.msra.mxu0 0.0
      %668 = vmatprep.subr.mxu0 0.0
      %669 = vmatpush1.msra.mxu0 0.0
      %670 = vmatprep.subr.mxu0 0.0
      %671 = vmatpush1.msra.mxu0 0.0
      %672 = vmatprep.subr.mxu0 0.0
      %673 = vmatpush1.msra.mxu0 0.0
      %674 = vmatprep.subr.mxu0 0.0
      %675 = vmatpush1.msra.mxu0 0.0
      %676 = vmatprep.subr.mxu0 0.0
      %677 = vmatpush1.msra.mxu0 0.0
      %678 = vmatprep.subr.mxu0 0.0
      %679 = vmatpush1.msra.mxu0 0.0
      %680 = vmatprep.subr.mxu0 %v292
      %681 = vmatpush1.msra.mxu0 %v291
      %682 = vmatprep.subr.mxu0 0.0
      %683 = vmatpush2.msra.mxu0 0.0
      %684 = vmatprep.subr.mxu0 0.0
      %685 = vmatpush2.msra.mxu0 0.0
      %686 = vmatprep.subr.mxu0 0.0
      %687 = vmatpush2.msra.mxu0 0.0
      %688 = vmatprep.subr.mxu0 0.0
      %689 = vmatpush2.msra.mxu0 0.0
      %690 = vmatprep.subr.mxu0 0.0
      %691 = vmatpush2.msra.mxu0 0.0
      %692 = vmatprep.subr.mxu0 0.0
      %693 = vmatpush2.msra.mxu0 0.0
      %694 = vmatprep.subr.mxu0 0.0
      %695 = vmatpush2.msra.mxu0 0.0
      %696 = vmatprep.subr.mxu0 0.0
      %697 = vmatpush2.msra.mxu0 0.0
      %698 = vmatprep.subr.mxu0 0.0
      %699 = vmatpush2.msra.mxu0 0.0
      %700 = vmatprep.subr.mxu0 0.0
      %701 = vmatpush2.msra.mxu0 0.0
      %702 = vmatprep.subr.mxu0 0.0
      %703 = vmatpush2.msra.mxu0 0.0
      %704 = vmatprep.subr.mxu0 0.0
      %705 = vmatpush2.msra.mxu0 0.0
      %706 = vmatprep.subr.mxu0 0.0
      %707 = vmatpush2.msra.mxu0 0.0
      %708 = vmatprep.subr.mxu0 0.0
      %709 = vmatpush2.msra.mxu0 0.0
      %710 = vmatprep.subr.mxu0 0.0
      %711 = vmatpush2.msra.mxu0 0.0
      %712 = vmatprep.subr.mxu0 0.0
      %713 = vmatpush2.msra.mxu0 0.0
      %714 = vmatprep.mubr.f32.mxu0 0.0
      %715 = vmatmul.mubr.f32.gmra.mxu0 %v648
      %v716 = vpop.f32.mrf.mxu0
      %v717 = vadd.f32 0.0, %v716
      %v718 = vpop.f32.mrf.mxu0
      %v719 = vadd.f32 0.0, %v718
      %720 = vdwg.mxu0
      %v721 = vadd.f32 %v643, %v717
      %v722 = vadd.f32 %v644, %v719
      %723 = vrot.lane.b32.xlu0 %v291, 127
      %v724 = vpop.permute.xlu0 %723
      %725 = vrot.lane.b32.xlu0 %v292, 127
      %v726 = vpop.permute.xlu0 %725
      %vm727 = vcmp.lt.s32.totalorder %v257, 127
      %v728 = vsel %vm727, %v724, %v726
      %v729 = vsel %vm727, %v726, %v724
      %v730 = vmul.f32 %v728, %v289
      %v731 = vmul.f32 %v729, %v290
      %s732 = scalar_lea.vmem %s1, 40
      %v733 = vld [vmem:[%s732] sm:$0xff]
      %v735 = vsel %vm320, %v733, 0
      %737 = vmatprep.subr.mxu0 0.0
      %738 = vmatpush1.msra.mxu0 0.0
      %739 = vmatprep.subr.mxu0 0.0
      %740 = vmatpush1.msra.mxu0 0.0
      %741 = vmatprep.subr.mxu0 0.0
      %742 = vmatpush1.msra.mxu0 0.0
      %743 = vmatprep.subr.mxu0 0.0
      %744 = vmatpush1.msra.mxu0 0.0
      %745 = vmatprep.subr.mxu0 0.0
      %746 = vmatpush1.msra.mxu0 0.0
      %747 = vmatprep.subr.mxu0 0.0
      %748 = vmatpush1.msra.mxu0 0.0
      %749 = vmatprep.subr.mxu0 0.0
      %750 = vmatpush1.msra.mxu0 0.0
      %751 = vmatprep.subr.mxu0 0.0
      %752 = vmatpush1.msra.mxu0 0.0
      %753 = vmatprep.subr.mxu0 0.0
      %754 = vmatpush1.msra.mxu0 0.0
      %755 = vmatprep.subr.mxu0 0.0
      %756 = vmatpush1.msra.mxu0 0.0
      %757 = vmatprep.subr.mxu0 0.0
      %758 = vmatpush1.msra.mxu0 0.0
      %759 = vmatprep.subr.mxu0 0.0
      %760 = vmatpush1.msra.mxu0 0.0
      %761 = vmatprep.subr.mxu0 0.0
      %762 = vmatpush1.msra.mxu0 0.0
      %763 = vmatprep.subr.mxu0 0.0
      %764 = vmatpush1.msra.mxu0 0.0
      %765 = vmatprep.subr.mxu0 0.0
      %766 = vmatpush1.msra.mxu0 0.0
      %767 = vmatprep.subr.mxu0 %v731
      %768 = vmatpush1.msra.mxu0 %v730
      %769 = vmatprep.subr.mxu0 0.0
      %770 = vmatpush2.msra.mxu0 0.0
      %771 = vmatprep.subr.mxu0 0.0
      %772 = vmatpush2.msra.mxu0 0.0
      %773 = vmatprep.subr.mxu0 0.0
      %774 = vmatpush2.msra.mxu0 0.0
      %775 = vmatprep.subr.mxu0 0.0
      %776 = vmatpush2.msra.mxu0 0.0
      %777 = vmatprep.subr.mxu0 0.0
      %778 = vmatpush2.msra.mxu0 0.0
      %779 = vmatprep.subr.mxu0 0.0
      %780 = vmatpush2.msra.mxu0 0.0
      %781 = vmatprep.subr.mxu0 0.0
      %782 = vmatpush2.msra.mxu0 0.0
      %783 = vmatprep.subr.mxu0 0.0
      %784 = vmatpush2.msra.mxu0 0.0
      %785 = vmatprep.subr.mxu0 0.0
      %786 = vmatpush2.msra.mxu0 0.0
      %787 = vmatprep.subr.mxu0 0.0
      %788 = vmatpush2.msra.mxu0 0.0
      %789 = vmatprep.subr.mxu0 0.0
      %790 = vmatpush2.msra.mxu0 0.0
      %791 = vmatprep.subr.mxu0 0.0
      %792 = vmatpush2.msra.mxu0 0.0
      %793 = vmatprep.subr.mxu0 0.0
      %794 = vmatpush2.msra.mxu0 0.0
      %795 = vmatprep.subr.mxu0 0.0
      %796 = vmatpush2.msra.mxu0 0.0
      %797 = vmatprep.subr.mxu0 0.0
      %798 = vmatpush2.msra.mxu0 0.0
      %799 = vmatprep.subr.mxu0 0.0
      %800 = vmatpush2.msra.mxu0 0.0
      %801 = vmatprep.mubr.f32.mxu0 0.0
      %802 = vmatmul.mubr.f32.gmra.mxu0 %v735
      %v803 = vpop.f32.mrf.mxu0
      %v804 = vadd.f32 0.0, %v803
      %v805 = vpop.f32.mrf.mxu0
      %v806 = vadd.f32 0.0, %v805
      %807 = vdwg.mxu0
      %v808 = vadd.f32 %v721, %v804
      %v809 = vadd.f32 %v722, %v806
      %v810 = vld [vmem:[%s5] sm:$0xff]
      %s811 = scalar_lea.vmem %s5, 32
      %v812 = vld [vmem:[%s811] sm:$0xff]
      %s813 = scalar_lea.vmem %s5, 64
      %v814 = vld [vmem:[%s813] sm:$0xff]
      %v815 = vadd.f32 %v808, %v809
      %816 = vadd.xlane.f32.xlu0 %v815
      %v817 = vpop.xlane.xlu0 %816
      %v818 = vmul.f32 %v817, 0.00390625
      %v819 = vmul.f32 %v808, %v808
      %v820 = vmul.f32 %v809, %v809
      %v821 = vadd.f32 %v819, %v820
      %822 = vadd.xlane.f32.xlu0 %v821
      %v823 = vpop.xlane.xlu0 %822
      %v824 = vmul.f32 %v823, 0.00390625
      %v825 = vmul.f32 %v818, %v818
      %v826 = vsub.f32 %v824, %v825
      %v827 = vadd.f32 %v826, 1e-05
      %v828 = vrsqrt.pop %v827
      %v829 = vmul.f32 %v810, %v828
      %v830 = vmul.f32 %v818, %v829
      %v831 = vsub.f32 %v812, %v830
      %833 = vset.pattern.permute.xlu0 0
      %834 = vperm.xlu0 %833, %v829
      %v835 = vpop.permute.xlu0 %834
      %v837 = vmul.f32 %v808, %v835
      %v838 = vmul.f32 %v809, %v835
      %840 = vset.pattern.permute.xlu0 0
      %841 = vperm.xlu0 %840, %v831
      %v842 = vpop.permute.xlu0 %841
      %v844 = vadd.f32 %v837, %v842
      %v845 = vadd.f32 %v838, %v842
      %vm846 = vcmp.ge.f32.partialorder %v844, 0.0
      %vm847 = vcmp.ge.f32.partialorder %v845, 0.0
      %849 = vset.pattern.permute.xlu0 0
      %850 = vperm.xlu0 %849, %v814
      %v851 = vpop.permute.xlu0 %850
      %v853 = vmul.f32 %v851, %v844
      %v854 = vmul.f32 %v851, %v845
      %v855 = vsel %vm846, %v844, %v853
      %v856 = vsel %vm847, %v845, %v854
      %857 = vst [vmem:[#allocation2 + $0x20] sm:$0xff] %v855
      %858 = vst [vmem:[#allocation2 + $0x28] sm:$0xff] %v856
      %v859 = vld [vmem:[#allocation2 + $0x20] sm:$0xff]
      %v860 = vld [vmem:[#allocation2 + $0x28] sm:$0xff]
      %v861 = vld [vmem:[#allocation2 + $0x30] sm:$0xff]
      %v862 = vld [vmem:[#allocation2 + $0x38] sm:$0xff]
      %vm863 = vcmp.ge.s32.totalorder %v257, 32
      %vm864 = vcmp.ge.s32.totalorder %v258, 32
      %v865 = vsel %vm863, 1.0, 0.0
      %v866 = vsel %vm864, 1.0, 0.0
      %867 = vrot.lane.b32.xlu0 %v859, 33
      %v868 = vpop.permute.xlu0 %867
      %869 = vrot.lane.b32.xlu0 %v861, 33
      %v870 = vpop.permute.xlu0 %869
      %871 = vrot.lane.b32.xlu0 %v860, 33
      %v872 = vpop.permute.xlu0 %871
      %873 = vrot.lane.b32.xlu0 %v862, 33
      %v874 = vpop.permute.xlu0 %873
      %vm875 = vcmp.lt.s32.totalorder %v257, 33
      %v876 = vsel %vm875, %v868, %v872
      %v877 = vsel %vm875, %v870, %v874
      %v878 = vsel %vm875, %v872, %v868
      %v879 = vsel %vm875, %v874, %v870
      %v880 = vmul.f32 %v865, %v285
      %v881 = vmul.f32 %v866, %v286
      %v882 = vmul.f32 %v878, %v880
      %v883 = vmul.f32 %v876, %v881
      %v884 = vmul.f32 %v879, %v880
      %v885 = vmul.f32 %v877, %v881
      %v886 = vld [vmem:[%s2] sm:$0xff]
      %887 = vrot.lane.b32.xlu0 %v859, 32
      %v888 = vpop.permute.xlu0 %887
      %889 = vrot.lane.b32.xlu0 %v861, 32
      %v890 = vpop.permute.xlu0 %889
      %891 = vrot.lane.b32.xlu0 %v860, 32
      %v892 = vpop.permute.xlu0 %891
      %893 = vrot.lane.b32.xlu0 %v862, 32
      %v894 = vpop.permute.xlu0 %893
      %vm895 = vcmp.lt.s32.totalorder %v257, 32
      %v896 = vsel %vm895, %v888, %v892
      %v897 = vsel %vm895, %v890, %v894
      %v898 = vsel %vm895, %v892, %v888
      %v899 = vsel %vm895, %v894, %v890
      %v900 = vmul.f32 %v898, %v865
      %v901 = vmul.f32 %v896, %v866
      %v902 = vmul.f32 %v899, %v865
      %v903 = vmul.f32 %v897, %v866
      %s904 = scalar_lea.vmem %s2, 8
      %v905 = vld [vmem:[%s904] sm:$0xff]
      %vm906 = vcmask 130048
      %v908 = vsel %vm906, %v905, 0
      %910 = vmatprep.subr.mxu0 0.0
      %911 = vmatpush1.msra.mxu0 0.0
      %912 = vmatprep.subr.mxu0 0.0
      %913 = vmatpush1.msra.mxu0 0.0
      %914 = vmatprep.subr.mxu0 0.0
      %915 = vmatpush1.msra.mxu0 0.0
      %916 = vmatprep.subr.mxu0 0.0
      %917 = vmatpush1.msra.mxu0 0.0
      %918 = vmatprep.subr.mxu0 0.0
      %919 = vmatpush1.msra.mxu0 0.0
      %920 = vmatprep.subr.mxu0 0.0
      %921 = vmatpush1.msra.mxu0 0.0
      %922 = vmatprep.subr.mxu0 0.0
      %923 = vmatpush1.msra.mxu0 0.0
      %924 = vmatprep.subr.mxu0 0.0
      %925 = vmatpush1.msra.mxu0 0.0
      %926 = vmatprep.subr.mxu0 0.0
      %927 = vmatpush1.msra.mxu0 0.0
      %928 = vmatprep.subr.mxu0 0.0
      %929 = vmatpush1.msra.mxu0 0.0
      %930 = vmatprep.subr.mxu0 0.0
      %931 = vmatpush1.msra.mxu0 0.0
      %932 = vmatprep.subr.mxu0 0.0
      %933 = vmatpush1.msra.mxu0 0.0
      %934 = vmatprep.subr.mxu0 0.0
      %935 = vmatpush1.msra.mxu0 0.0
      %936 = vmatprep.subr.mxu0 0.0
      %937 = vmatpush1.msra.mxu0 0.0
      %938 = vmatprep.subr.mxu0 %v903
      %939 = vmatpush1.msra.mxu0 %v902
      %940 = vmatprep.subr.mxu0 %v901
      %941 = vmatpush1.msra.mxu0 %v900
      %942 = vmatprep.subr.mxu0 0.0
      %943 = vmatpush2.msra.mxu0 0.0
      %944 = vmatprep.subr.mxu0 0.0
      %945 = vmatpush2.msra.mxu0 0.0
      %946 = vmatprep.subr.mxu0 0.0
      %947 = vmatpush2.msra.mxu0 0.0
      %948 = vmatprep.subr.mxu0 0.0
      %949 = vmatpush2.msra.mxu0 0.0
      %950 = vmatprep.subr.mxu0 0.0
      %951 = vmatpush2.msra.mxu0 0.0
      %952 = vmatprep.subr.mxu0 0.0
      %953 = vmatpush2.msra.mxu0 0.0
      %954 = vmatprep.subr.mxu0 0.0
      %955 = vmatpush2.msra.mxu0 0.0
      %956 = vmatprep.subr.mxu0 0.0
      %957 = vmatpush2.msra.mxu0 0.0
      %958 = vmatprep.subr.mxu0 0.0
      %959 = vmatpush2.msra.mxu0 0.0
      %960 = vmatprep.subr.mxu0 0.0
      %961 = vmatpush2.msra.mxu0 0.0
      %962 = vmatprep.subr.mxu0 0.0
      %963 = vmatpush2.msra.mxu0 0.0
      %964 = vmatprep.subr.mxu0 0.0
      %965 = vmatpush2.msra.mxu0 0.0
      %966 = vmatprep.subr.mxu0 0.0
      %967 = vmatpush2.msra.mxu0 0.0
      %968 = vmatprep.subr.mxu0 0.0
      %969 = vmatpush2.msra.mxu0 0.0
      %970 = vmatprep.subr.mxu0 0.0
      %971 = vmatpush2.msra.mxu0 0.0
      %972 = vmatprep.subr.mxu0 0.0
      %973 = vmatpush2.msra.mxu0 0.0
      %974 = vmatprep.mubr.f32.mxu0 0.0
      %975 = vmatmul.mubr.f32.gmra.mxu0 %v908
      %v976 = vpop.f32.mrf.mxu0
      %v977 = vadd.f32 0.0, %v976
      %v978 = vpop.f32.mrf.mxu0
      %v979 = vadd.f32 0.0, %v978
      %980 = vdwg.mxu0
      %v982 = vsel %vm906, %v886, 0
      %984 = vmatprep.subr.mxu0 0.0
      %985 = vmatpush1.msra.mxu0 0.0
      %986 = vmatprep.subr.mxu0 0.0
      %987 = vmatpush1.msra.mxu0 0.0
      %988 = vmatprep.subr.mxu0 0.0
      %989 = vmatpush1.msra.mxu0 0.0
      %990 = vmatprep.subr.mxu0 0.0
      %991 = vmatpush1.msra.mxu0 0.0
      %992 = vmatprep.subr.mxu0 0.0
      %993 = vmatpush1.msra.mxu0 0.0
      %994 = vmatprep.subr.mxu0 0.0
      %995 = vmatpush1.msra.mxu0 0.0
      %996 = vmatprep.subr.mxu0 0.0
      %997 = vmatpush1.msra.mxu0 0.0
      %998 = vmatprep.subr.mxu0 0.0
      %999 = vmatpush1.msra.mxu0 0.0
      %1000 = vmatprep.subr.mxu0 0.0
      %1001 = vmatpush1.msra.mxu0 0.0
      %1002 = vmatprep.subr.mxu0 0.0
      %1003 = vmatpush1.msra.mxu0 0.0
      %1004 = vmatprep.subr.mxu0 0.0
      %1005 = vmatpush1.msra.mxu0 0.0
      %1006 = vmatprep.subr.mxu0 0.0
      %1007 = vmatpush1.msra.mxu0 0.0
      %1008 = vmatprep.subr.mxu0 0.0
      %1009 = vmatpush1.msra.mxu0 0.0
      %1010 = vmatprep.subr.mxu0 0.0
      %1011 = vmatpush1.msra.mxu0 0.0
      %1012 = vmatprep.subr.mxu0 %v885
      %1013 = vmatpush1.msra.mxu0 %v884
      %1014 = vmatprep.subr.mxu0 %v883
      %1015 = vmatpush1.msra.mxu0 %v882
      %1016 = vmatprep.subr.mxu0 0.0
      %1017 = vmatpush2.msra.mxu0 0.0
      %1018 = vmatprep.subr.mxu0 0.0
      %1019 = vmatpush2.msra.mxu0 0.0
      %1020 = vmatprep.subr.mxu0 0.0
      %1021 = vmatpush2.msra.mxu0 0.0
      %1022 = vmatprep.subr.mxu0 0.0
      %1023 = vmatpush2.msra.mxu0 0.0
      %1024 = vmatprep.subr.mxu0 0.0
      %1025 = vmatpush2.msra.mxu0 0.0
      %1026 = vmatprep.subr.mxu0 0.0
      %1027 = vmatpush2.msra.mxu0 0.0
      %1028 = vmatprep.subr.mxu0 0.0
      %1029 = vmatpush2.msra.mxu0 0.0
      %1030 = vmatprep.subr.mxu0 0.0
      %1031 = vmatpush2.msra.mxu0 0.0
      %1032 = vmatprep.subr.mxu0 0.0
      %1033 = vmatpush2.msra.mxu0 0.0
      %1034 = vmatprep.subr.mxu0 0.0
      %1035 = vmatpush2.msra.mxu0 0.0
      %1036 = vmatprep.subr.mxu0 0.0
      %1037 = vmatpush2.msra.mxu0 0.0
      %1038 = vmatprep.subr.mxu0 0.0
      %1039 = vmatpush2.msra.mxu0 0.0
      %1040 = vmatprep.subr.mxu0 0.0
      %1041 = vmatpush2.msra.mxu0 0.0
      %1042 = vmatprep.subr.mxu0 0.0
      %1043 = vmatpush2.msra.mxu0 0.0
      %1044 = vmatprep.subr.mxu0 0.0
      %1045 = vmatpush2.msra.mxu0 0.0
      %1046 = vmatprep.subr.mxu0 0.0
      %1047 = vmatpush2.msra.mxu0 0.0
      %1048 = vmatprep.mubr.f32.mxu0 0.0
      %1049 = vmatmul.mubr.f32.gmra.mxu0 %v982
      %v1050 = vpop.f32.mrf.mxu0
      %v1051 = vadd.f32 %v977, %v1050
      %v1052 = vpop.f32.mrf.mxu0
      %v1053 = vadd.f32 %v979, %v1052
      %1054 = vdwg.mxu0
      %1055 = vrot.lane.b32.xlu0 %v859, 31
      %v1056 = vpop.permute.xlu0 %1055
      %1057 = vrot.lane.b32.xlu0 %v861, 31
      %v1058 = vpop.permute.xlu0 %1057
      %1059 = vrot.lane.b32.xlu0 %v860, 31
      %v1060 = vpop.permute.xlu0 %1059
      %1061 = vrot.lane.b32.xlu0 %v862, 31
      %v1062 = vpop.permute.xlu0 %1061
      %vm1063 = vcmp.lt.s32.totalorder %v257, 31
      %v1064 = vsel %vm1063, %v1056, %v1060
      %v1065 = vsel %vm1063, %v1058, %v1062
      %v1066 = vsel %vm1063, %v1060, %v1056
      %v1067 = vsel %vm1063, %v1062, %v1058
      %v1068 = vmul.f32 %v865, %v289
      %v1069 = vmul.f32 %v866, %v290
      %v1070 = vmul.f32 %v1066, %v1068
      %v1071 = vmul.f32 %v1064, %v1069
      %v1072 = vmul.f32 %v1067, %v1068
      %v1073 = vmul.f32 %v1065, %v1069
      %s1074 = scalar_lea.vmem %s2, 16
      %v1075 = vld [vmem:[%s1074] sm:$0xff]
      %v1077 = vsel %vm906, %v1075, 0
      %1079 = vmatprep.subr.mxu0 0.0
      %1080 = vmatpush1.msra.mxu0 0.0
      %1081 = vmatprep.subr.mxu0 0.0
      %1082 = vmatpush1.msra.mxu0 0.0
      %1083 = vmatprep.subr.mxu0 0.0
      %1084 = vmatpush1.msra.mxu0 0.0
      %1085 = vmatprep.subr.mxu0 0.0
      %1086 = vmatpush1.msra.mxu0 0.0
      %1087 = vmatprep.subr.mxu0 0.0
      %1088 = vmatpush1.msra.mxu0 0.0
      %1089 = vmatprep.subr.mxu0 0.0
      %1090 = vmatpush1.msra.mxu0 0.0
      %1091 = vmatprep.subr.mxu0 0.0
      %1092 = vmatpush1.msra.mxu0 0.0
      %1093 = vmatprep.subr.mxu0 0.0
      %1094 = vmatpush1.msra.mxu0 0.0
      %1095 = vmatprep.subr.mxu0 0.0
      %1096 = vmatpush1.msra.mxu0 0.0
      %1097 = vmatprep.subr.mxu0 0.0
      %1098 = vmatpush1.msra.mxu0 0.0
      %1099 = vmatprep.subr.mxu0 0.0
      %1100 = vmatpush1.msra.mxu0 0.0
      %1101 = vmatprep.subr.mxu0 0.0
      %1102 = vmatpush1.msra.mxu0 0.0
      %1103 = vmatprep.subr.mxu0 0.0
      %1104 = vmatpush1.msra.mxu0 0.0
      %1105 = vmatprep.subr.mxu0 0.0
      %1106 = vmatpush1.msra.mxu0 0.0
      %1107 = vmatprep.subr.mxu0 %v1073
      %1108 = vmatpush1.msra.mxu0 %v1072
      %1109 = vmatprep.subr.mxu0 %v1071
      %1110 = vmatpush1.msra.mxu0 %v1070
      %1111 = vmatprep.subr.mxu0 0.0
      %1112 = vmatpush2.msra.mxu0 0.0
      %1113 = vmatprep.subr.mxu0 0.0
      %1114 = vmatpush2.msra.mxu0 0.0
      %1115 = vmatprep.subr.mxu0 0.0
      %1116 = vmatpush2.msra.mxu0 0.0
      %1117 = vmatprep.subr.mxu0 0.0
      %1118 = vmatpush2.msra.mxu0 0.0
      %1119 = vmatprep.subr.mxu0 0.0
      %1120 = vmatpush2.msra.mxu0 0.0
      %1121 = vmatprep.subr.mxu0 0.0
      %1122 = vmatpush2.msra.mxu0 0.0
      %1123 = vmatprep.subr.mxu0 0.0
      %1124 = vmatpush2.msra.mxu0 0.0
      %1125 = vmatprep.subr.mxu0 0.0
      %1126 = vmatpush2.msra.mxu0 0.0
      %1127 = vmatprep.subr.mxu0 0.0
      %1128 = vmatpush2.msra.mxu0 0.0
      %1129 = vmatprep.subr.mxu0 0.0
      %1130 = vmatpush2.msra.mxu0 0.0
      %1131 = vmatprep.subr.mxu0 0.0
      %1132 = vmatpush2.msra.mxu0 0.0
      %1133 = vmatprep.subr.mxu0 0.0
      %1134 = vmatpush2.msra.mxu0 0.0
      %1135 = vmatprep.subr.mxu0 0.0
      %1136 = vmatpush2.msra.mxu0 0.0
      %1137 = vmatprep.subr.mxu0 0.0
      %1138 = vmatpush2.msra.mxu0 0.0
      %1139 = vmatprep.subr.mxu0 0.0
      %1140 = vmatpush2.msra.mxu0 0.0
      %1141 = vmatprep.subr.mxu0 0.0
      %1142 = vmatpush2.msra.mxu0 0.0
      %1143 = vmatprep.mubr.f32.mxu0 0.0
      %1144 = vmatmul.mubr.f32.gmra.mxu0 %v1077
      %v1145 = vpop.f32.mrf.mxu0
      %v1146 = vadd.f32 0.0, %v1145
      %v1147 = vpop.f32.mrf.mxu0
      %v1148 = vadd.f32 0.0, %v1147
      %1149 = vdwg.mxu0
      %v1150 = vadd.f32 %v1051, %v1146
      %v1151 = vadd.f32 %v1053, %v1148
      %1152 = vrot.lane.b32.xlu0 %v859, 1
      %v1153 = vpop.permute.xlu0 %1152
      %1154 = vrot.lane.b32.xlu0 %v861, 1
      %v1155 = vpop.permute.xlu0 %1154
      %1156 = vrot.lane.b32.xlu0 %v860, 1
      %v1157 = vpop.permute.xlu0 %1156
      %1158 = vrot.lane.b32.xlu0 %v862, 1
      %v1159 = vpop.permute.xlu0 %1158
      %v1160 = vsel %vm562, %v1153, %v1157
      %v1161 = vsel %vm562, %v1155, %v1159
      %v1162 = vsel %vm562, %v1157, %v1153
      %v1163 = vsel %vm562, %v1159, %v1155
      %v1164 = vmul.f32 %v1162, %v285
      %v1165 = vmul.f32 %v1160, %v286
      %v1166 = vmul.f32 %v1163, %v285
      %v1167 = vmul.f32 %v1161, %v286
      %s1168 = scalar_lea.vmem %s2, 24
      %v1169 = vld [vmem:[%s1168] sm:$0xff]
      %v1171 = vsel %vm906, %v1169, 0
      %1173 = vmatprep.subr.mxu0 0.0
      %1174 = vmatpush1.msra.mxu0 0.0
      %1175 = vmatprep.subr.mxu0 0.0
      %1176 = vmatpush1.msra.mxu0 0.0
      %1177 = vmatprep.subr.mxu0 0.0
      %1178 = vmatpush1.msra.mxu0 0.0
      %1179 = vmatprep.subr.mxu0 0.0
      %1180 = vmatpush1.msra.mxu0 0.0
      %1181 = vmatprep.subr.mxu0 0.0
      %1182 = vmatpush1.msra.mxu0 0.0
      %1183 = vmatprep.subr.mxu0 0.0
      %1184 = vmatpush1.msra.mxu0 0.0
      %1185 = vmatprep.subr.mxu0 0.0
      %1186 = vmatpush1.msra.mxu0 0.0
      %1187 = vmatprep.subr.mxu0 0.0
      %1188 = vmatpush1.msra.mxu0 0.0
      %1189 = vmatprep.subr.mxu0 0.0
      %1190 = vmatpush1.msra.mxu0 0.0
      %1191 = vmatprep.subr.mxu0 0.0
      %1192 = vmatpush1.msra.mxu0 0.0
      %1193 = vmatprep.subr.mxu0 0.0
      %1194 = vmatpush1.msra.mxu0 0.0
      %1195 = vmatprep.subr.mxu0 0.0
      %1196 = vmatpush1.msra.mxu0 0.0
      %1197 = vmatprep.subr.mxu0 0.0
      %1198 = vmatpush1.msra.mxu0 0.0
      %1199 = vmatprep.subr.mxu0 0.0
      %1200 = vmatpush1.msra.mxu0 0.0
      %1201 = vmatprep.subr.mxu0 %v1167
      %1202 = vmatpush1.msra.mxu0 %v1166
      %1203 = vmatprep.subr.mxu0 %v1165
      %1204 = vmatpush1.msra.mxu0 %v1164
      %1205 = vmatprep.subr.mxu0 0.0
      %1206 = vmatpush2.msra.mxu0 0.0
      %1207 = vmatprep.subr.mxu0 0.0
      %1208 = vmatpush2.msra.mxu0 0.0
      %1209 = vmatprep.subr.mxu0 0.0
      %1210 = vmatpush2.msra.mxu0 0.0
      %1211 = vmatprep.subr.mxu0 0.0
      %1212 = vmatpush2.msra.mxu0 0.0
      %1213 = vmatprep.subr.mxu0 0.0
      %1214 = vmatpush2.msra.mxu0 0.0
      %1215 = vmatprep.subr.mxu0 0.0
      %1216 = vmatpush2.msra.mxu0 0.0
      %1217 = vmatprep.subr.mxu0 0.0
      %1218 = vmatpush2.msra.mxu0 0.0
      %1219 = vmatprep.subr.mxu0 0.0
      %1220 = vmatpush2.msra.mxu0 0.0
      %1221 = vmatprep.subr.mxu0 0.0
      %1222 = vmatpush2.msra.mxu0 0.0
      %1223 = vmatprep.subr.mxu0 0.0
      %1224 = vmatpush2.msra.mxu0 0.0
      %1225 = vmatprep.subr.mxu0 0.0
      %1226 = vmatpush2.msra.mxu0 0.0
      %1227 = vmatprep.subr.mxu0 0.0
      %1228 = vmatpush2.msra.mxu0 0.0
      %1229 = vmatprep.subr.mxu0 0.0
      %1230 = vmatpush2.msra.mxu0 0.0
      %1231 = vmatprep.subr.mxu0 0.0
      %1232 = vmatpush2.msra.mxu0 0.0
      %1233 = vmatprep.subr.mxu0 0.0
      %1234 = vmatpush2.msra.mxu0 0.0
      %1235 = vmatprep.subr.mxu0 0.0
      %1236 = vmatpush2.msra.mxu0 0.0
      %1237 = vmatprep.mubr.f32.mxu0 0.0
      %1238 = vmatmul.mubr.f32.gmra.mxu0 %v1171
      %v1239 = vpop.f32.mrf.mxu0
      %v1240 = vadd.f32 0.0, %v1239
      %v1241 = vpop.f32.mrf.mxu0
      %v1242 = vadd.f32 0.0, %v1241
      %1243 = vdwg.mxu0
      %v1244 = vadd.f32 %v1150, %v1240
      %v1245 = vadd.f32 %v1151, %v1242
      %s1246 = scalar_lea.vmem %s2, 32
      %v1247 = vld [vmem:[%s1246] sm:$0xff]
      %v1249 = vsel %vm906, %v1247, 0
      %1251 = vmatprep.subr.mxu0 0.0
      %1252 = vmatpush1.msra.mxu0 0.0
      %1253 = vmatprep.subr.mxu0 0.0
      %1254 = vmatpush1.msra.mxu0 0.0
      %1255 = vmatprep.subr.mxu0 0.0
      %1256 = vmatpush1.msra.mxu0 0.0
      %1257 = vmatprep.subr.mxu0 0.0
      %1258 = vmatpush1.msra.mxu0 0.0
      %1259 = vmatprep.subr.mxu0 0.0
      %1260 = vmatpush1.msra.mxu0 0.0
      %1261 = vmatprep.subr.mxu0 0.0
      %1262 = vmatpush1.msra.mxu0 0.0
      %1263 = vmatprep.subr.mxu0 0.0
      %1264 = vmatpush1.msra.mxu0 0.0
      %1265 = vmatprep.subr.mxu0 0.0
      %1266 = vmatpush1.msra.mxu0 0.0
      %1267 = vmatprep.subr.mxu0 0.0
      %1268 = vmatpush1.msra.mxu0 0.0
      %1269 = vmatprep.subr.mxu0 0.0
      %1270 = vmatpush1.msra.mxu0 0.0
      %1271 = vmatprep.subr.mxu0 0.0
      %1272 = vmatpush1.msra.mxu0 0.0
      %1273 = vmatprep.subr.mxu0 0.0
      %1274 = vmatpush1.msra.mxu0 0.0
      %1275 = vmatprep.subr.mxu0 0.0
      %1276 = vmatpush1.msra.mxu0 0.0
      %1277 = vmatprep.subr.mxu0 0.0
      %1278 = vmatpush1.msra.mxu0 0.0
      %1279 = vmatprep.subr.mxu0 %v862
      %1280 = vmatpush1.msra.mxu0 %v861
      %1281 = vmatprep.subr.mxu0 %v860
      %1282 = vmatpush1.msra.mxu0 %v859
      %1283 = vmatprep.subr.mxu0 0.0
      %1284 = vmatpush2.msra.mxu0 0.0
      %1285 = vmatprep.subr.mxu0 0.0
      %1286 = vmatpush2.msra.mxu0 0.0
      %1287 = vmatprep.subr.mxu0 0.0
      %1288 = vmatpush2.msra.mxu0 0.0
      %1289 = vmatprep.subr.mxu0 0.0
      %1290 = vmatpush2.msra.mxu0 0.0
      %1291 = vmatprep.subr.mxu0 0.0
      %1292 = vmatpush2.msra.mxu0 0.0
      %1293 = vmatprep.subr.mxu0 0.0
      %1294 = vmatpush2.msra.mxu0 0.0
      %1295 = vmatprep.subr.mxu0 0.0
      %1296 = vmatpush2.msra.mxu0 0.0
      %1297 = vmatprep.subr.mxu0 0.0
      %1298 = vmatpush2.msra.mxu0 0.0
      %1299 = vmatprep.subr.mxu0 0.0
      %1300 = vmatpush2.msra.mxu0 0.0
      %1301 = vmatprep.subr.mxu0 0.0
      %1302 = vmatpush2.msra.mxu0 0.0
      %1303 = vmatprep.subr.mxu0 0.0
      %1304 = vmatpush2.msra.mxu0 0.0
      %1305 = vmatprep.subr.mxu0 0.0
      %1306 = vmatpush2.msra.mxu0 0.0
      %1307 = vmatprep.subr.mxu0 0.0
      %1308 = vmatpush2.msra.mxu0 0.0
      %1309 = vmatprep.subr.mxu0 0.0
      %1310 = vmatpush2.msra.mxu0 0.0
      %1311 = vmatprep.subr.mxu0 0.0
      %1312 = vmatpush2.msra.mxu0 0.0
      %1313 = vmatprep.subr.mxu0 0.0
      %1314 = vmatpush2.msra.mxu0 0.0
      %1315 = vmatprep.mubr.f32.mxu0 0.0
      %1316 = vmatmul.mubr.f32.gmra.mxu0 %v1249
      %v1317 = vpop.f32.mrf.mxu0
      %v1318 = vadd.f32 0.0, %v1317
      %v1319 = vpop.f32.mrf.mxu0
      %v1320 = vadd.f32 0.0, %v1319
      %1321 = vdwg.mxu0
      %v1322 = vadd.f32 %v1244, %v1318
      %v1323 = vadd.f32 %v1245, %v1320
      %1324 = vrot.lane.b32.xlu0 %v859, 127
      %v1325 = vpop.permute.xlu0 %1324
      %1326 = vrot.lane.b32.xlu0 %v861, 127
      %v1327 = vpop.permute.xlu0 %1326
      %1328 = vrot.lane.b32.xlu0 %v860, 127
      %v1329 = vpop.permute.xlu0 %1328
      %1330 = vrot.lane.b32.xlu0 %v862, 127
      %v1331 = vpop.permute.xlu0 %1330
      %v1332 = vsel %vm727, %v1325, %v1329
      %v1333 = vsel %vm727, %v1327, %v1331
      %v1334 = vsel %vm727, %v1329, %v1325
      %v1335 = vsel %vm727, %v1331, %v1327
      %v1336 = vmul.f32 %v1332, %v289
      %v1337 = vmul.f32 %v1334, %v290
      %v1338 = vmul.f32 %v1333, %v289
      %v1339 = vmul.f32 %v1335, %v290
      %s1340 = scalar_lea.vmem %s2, 40
      %v1341 = vld [vmem:[%s1340] sm:$0xff]
      %v1343 = vsel %vm906, %v1341, 0
      %1345 = vmatprep.subr.mxu0 0.0
      %1346 = vmatpush1.msra.mxu0 0.0
      %1347 = vmatprep.subr.mxu0 0.0
      %1348 = vmatpush1.msra.mxu0 0.0
      %1349 = vmatprep.subr.mxu0 0.0
      %1350 = vmatpush1.msra.mxu0 0.0
      %1351 = vmatprep.subr.mxu0 0.0
      %1352 = vmatpush1.msra.mxu0 0.0
      %1353 = vmatprep.subr.mxu0 0.0
      %1354 = vmatpush1.msra.mxu0 0.0
      %1355 = vmatprep.subr.mxu0 0.0
      %1356 = vmatpush1.msra.mxu0 0.0
      %1357 = vmatprep.subr.mxu0 0.0
      %1358 = vmatpush1.msra.mxu0 0.0
      %1359 = vmatprep.subr.mxu0 0.0
      %1360 = vmatpush1.msra.mxu0 0.0
      %1361 = vmatprep.subr.mxu0 0.0
      %1362 = vmatpush1.msra.mxu0 0.0
      %1363 = vmatprep.subr.mxu0 0.0
      %1364 = vmatpush1.msra.mxu0 0.0
      %1365 = vmatprep.subr.mxu0 0.0
      %1366 = vmatpush1.msra.mxu0 0.0
      %1367 = vmatprep.subr.mxu0 0.0
      %1368 = vmatpush1.msra.mxu0 0.0
      %1369 = vmatprep.subr.mxu0 0.0
      %1370 = vmatpush1.msra.mxu0 0.0
      %1371 = vmatprep.subr.mxu0 0.0
      %1372 = vmatpush1.msra.mxu0 0.0
      %1373 = vmatprep.subr.mxu0 %v1339
      %1374 = vmatpush1.msra.mxu0 %v1338
      %1375 = vmatprep.subr.mxu0 %v1337
      %1376 = vmatpush1.msra.mxu0 %v1336
      %1377 = vmatprep.subr.mxu0 0.0
      %1378 = vmatpush2.msra.mxu0 0.0
      %1379 = vmatprep.subr.mxu0 0.0
      %1380 = vmatpush2.msra.mxu0 0.0
      %1381 = vmatprep.subr.mxu0 0.0
      %1382 = vmatpush2.msra.mxu0 0.0
      %1383 = vmatprep.subr.mxu0 0.0
      %1384 = vmatpush2.msra.mxu0 0.0
      %1385 = vmatprep.subr.mxu0 0.0
      %1386 = vmatpush2.msra.mxu0 0.0
      %1387 = vmatprep.subr.mxu0 0.0
      %1388 = vmatpush2.msra.mxu0 0.0
      %1389 = vmatprep.subr.mxu0 0.0
      %1390 = vmatpush2.msra.mxu0 0.0
      %1391 = vmatprep.subr.mxu0 0.0
      %1392 = vmatpush2.msra.mxu0 0.0
      %1393 = vmatprep.subr.mxu0 0.0
      %1394 = vmatpush2.msra.mxu0 0.0
      %1395 = vmatprep.subr.mxu0 0.0
      %1396 = vmatpush2.msra.mxu0 0.0
      %1397 = vmatprep.subr.mxu0 0.0
      %1398 = vmatpush2.msra.mxu0 0.0
      %1399 = vmatprep.subr.mxu0 0.0
      %1400 = vmatpush2.msra.mxu0 0.0
      %1401 = vmatprep.subr.mxu0 0.0
      %1402 = vmatpush2.msra.mxu0 0.0
      %1403 = vmatprep.subr.mxu0 0.0
      %1404 = vmatpush2.msra.mxu0 0.0
      %1405 = vmatprep.subr.mxu0 0.0
      %1406 = vmatpush2.msra.mxu0 0.0
      %1407 = vmatprep.subr.mxu0 0.0
      %1408 = vmatpush2.msra.mxu0 0.0
      %1409 = vmatprep.mubr.f32.mxu0 0.0
      %1410 = vmatmul.mubr.f32.gmra.mxu0 %v1343
      %v1411 = vpop.f32.mrf.mxu0
      %v1412 = vadd.f32 0.0, %v1411
      %v1413 = vpop.f32.mrf.mxu0
      %v1414 = vadd.f32 0.0, %v1413
      %1415 = vdwg.mxu0
      %v1416 = vadd.f32 %v1322, %v1412
      %v1417 = vadd.f32 %v1323, %v1414
      %s1418 = scalar_lea.vmem %s5, 8
      %v1419 = vld [vmem:[%s1418] sm:$0xff]
      %s1420 = scalar_lea.vmem %s5, 40
      %v1421 = vld [vmem:[%s1420] sm:$0xff]
      %s1422 = scalar_lea.vmem %s5, 72
      %v1423 = vld [vmem:[%s1422] sm:$0xff]
      %v1424 = vadd.f32 %v1416, %v1417
      %1425 = vadd.xlane.f32.xlu0 %v1424
      %v1426 = vpop.xlane.xlu0 %1425
      %v1427 = vmul.f32 %v1426, 0.00390625
      %v1428 = vmul.f32 %v1416, %v1416
      %v1429 = vmul.f32 %v1417, %v1417
      %v1430 = vadd.f32 %v1428, %v1429
      %1431 = vadd.xlane.f32.xlu0 %v1430
      %v1432 = vpop.xlane.xlu0 %1431
      %v1433 = vmul.f32 %v1432, 0.00390625
      %v1434 = vmul.f32 %v1427, %v1427
      %v1435 = vsub.f32 %v1433, %v1434
      %v1436 = vadd.f32 %v1435, 1e-05
      %v1437 = vrsqrt.pop %v1436
      %v1438 = vmul.f32 %v1419, %v1437
      %v1439 = vmul.f32 %v1427, %v1438
      %v1440 = vsub.f32 %v1421, %v1439
      %1442 = vset.pattern.permute.xlu0 0
      %1443 = vperm.xlu0 %1442, %v1438
      %v1444 = vpop.permute.xlu0 %1443
      %v1446 = vmul.f32 %v1416, %v1444
      %v1447 = vmul.f32 %v1417, %v1444
      %1449 = vset.pattern.permute.xlu0 0
      %1450 = vperm.xlu0 %1449, %v1440
      %v1451 = vpop.permute.xlu0 %1450
      %v1453 = vadd.f32 %v1446, %v1451
      %v1454 = vadd.f32 %v1447, %v1451
      %vm1455 = vcmp.ge.f32.partialorder %v1453, 0.0
      %vm1456 = vcmp.ge.f32.partialorder %v1454, 0.0
      %1458 = vset.pattern.permute.xlu0 0
      %1459 = vperm.xlu0 %1458, %v1423
      %v1460 = vpop.permute.xlu0 %1459
      %v1462 = vmul.f32 %v1460, %v1453
      %v1463 = vmul.f32 %v1460, %v1454
      %v1464 = vsel %vm1455, %v1453, %v1462
      %v1465 = vsel %vm1456, %v1454, %v1463
      %1466 = vst [vmem:[#allocation2 + $0x10] sm:$0xff] %v1464
      %1467 = vst [vmem:[#allocation2 + $0x18] sm:$0xff] %v1465
      %v1468 = vld [vmem:[#allocation2 + $0x10] sm:$0xff]
      %v1469 = vld [vmem:[#allocation2 + $0x18] sm:$0xff]
      %v1470 = vld [vmem:[#allocation2 + $0x20] sm:$0xff]
      %v1471 = vld [vmem:[#allocation2 + $0x28] sm:$0xff]
      %v1472 = vld [vmem:[#allocation2 + $0x30] sm:$0xff]
      %v1473 = vld [vmem:[#allocation2 + $0x38] sm:$0xff]
      %vm1474 = vcmp.ge.s32.totalorder %v257, 64
      %vm1475 = vcmp.ge.s32.totalorder %v258, 64
      %v1476 = vsel %vm1474, 1.0, 0.0
      %v1477 = vsel %vm1475, 1.0, 0.0
      %1478 = vrot.lane.b32.xlu0 %v1468, 65
      %v1479 = vpop.permute.xlu0 %1478
      %1480 = vrot.lane.b32.xlu0 %v1470, 65
      %v1481 = vpop.permute.xlu0 %1480
      %1482 = vrot.lane.b32.xlu0 %v1472, 65
      %v1483 = vpop.permute.xlu0 %1482
      %1484 = vrot.lane.b32.xlu0 %v1469, 65
      %v1485 = vpop.permute.xlu0 %1484
      %1486 = vrot.lane.b32.xlu0 %v1471, 65
      %v1487 = vpop.permute.xlu0 %1486
      %1488 = vrot.lane.b32.xlu0 %v1473, 65
      %v1489 = vpop.permute.xlu0 %1488
      %vm1490 = vcmp.lt.s32.totalorder %v257, 65
      %v1491 = vsel %vm1490, %v1479, %v1485
      %v1492 = vsel %vm1490, %v1481, %v1487
      %v1493 = vsel %vm1490, %v1483, %v1489
      %v1494 = vsel %vm1490, %v1485, %v1479
      %v1495 = vsel %vm1490, %v1487, %v1481
      %v1496 = vsel %vm1490, %v1489, %v1483
      %v1497 = vmul.f32 %v1476, %v285
      %v1498 = vmul.f32 %v1477, %v286
      %v1499 = vmul.f32 %v1494, %v1497
      %v1500 = vmul.f32 %v1491, %v1498
      %v1501 = vmul.f32 %v1495, %v1497
      %v1502 = vmul.f32 %v1492, %v1498
      %v1503 = vmul.f32 %v1496, %v1497
      %v1504 = vmul.f32 %v1493, %v1498
      %v1505 = vld [vmem:[%s3] sm:$0xff]
      %1506 = vrot.lane.b32.xlu0 %v1468, 64
      %v1507 = vpop.permute.xlu0 %1506
      %1508 = vrot.lane.b32.xlu0 %v1470, 64
      %v1509 = vpop.permute.xlu0 %1508
      %1510 = vrot.lane.b32.xlu0 %v1472, 64
      %v1511 = vpop.permute.xlu0 %1510
      %1512 = vrot.lane.b32.xlu0 %v1469, 64
      %v1513 = vpop.permute.xlu0 %1512
      %1514 = vrot.lane.b32.xlu0 %v1471, 64
      %v1515 = vpop.permute.xlu0 %1514
      %1516 = vrot.lane.b32.xlu0 %v1473, 64
      %v1517 = vpop.permute.xlu0 %1516
      %vm1518 = vcmp.lt.s32.totalorder %v257, 64
      %v1519 = vsel %vm1518, %v1507, %v1513
      %v1520 = vsel %vm1518, %v1509, %v1515
      %v1521 = vsel %vm1518, %v1511, %v1517
      %v1522 = vsel %vm1518, %v1513, %v1507
      %v1523 = vsel %vm1518, %v1515, %v1509
      %v1524 = vsel %vm1518, %v1517, %v1511
      %v1525 = vmul.f32 %v1522, %v1476
      %v1526 = vmul.f32 %v1519, %v1477
      %v1527 = vmul.f32 %v1523, %v1476
      %v1528 = vmul.f32 %v1520, %v1477
      %v1529 = vmul.f32 %v1524, %v1476
      %v1530 = vmul.f32 %v1521, %v1477
      %s1531 = scalar_lea.vmem %s3, 8
      %v1532 = vld [vmem:[%s1531] sm:$0xff]
      %vm1533 = vcmask 195584
      %v1535 = vsel %vm1533, %v1532, 0
      %1537 = vmatprep.subr.mxu0 0.0
      %1538 = vmatpush1.msra.mxu0 0.0
      %1539 = vmatprep.subr.mxu0 0.0
      %1540 = vmatpush1.msra.mxu0 0.0
      %1541 = vmatprep.subr.mxu0 0.0
      %1542 = vmatpush1.msra.mxu0 0.0
      %1543 = vmatprep.subr.mxu0 0.0
      %1544 = vmatpush1.msra.mxu0 0.0
      %1545 = vmatprep.subr.mxu0 0.0
      %1546 = vmatpush1.msra.mxu0 0.0
      %1547 = vmatprep.subr.mxu0 0.0
      %1548 = vmatpush1.msra.mxu0 0.0
      %1549 = vmatprep.subr.mxu0 0.0
      %1550 = vmatpush1.msra.mxu0 0.0
      %1551 = vmatprep.subr.mxu0 0.0
      %1552 = vmatpush1.msra.mxu0 0.0
      %1553 = vmatprep.subr.mxu0 0.0
      %1554 = vmatpush1.msra.mxu0 0.0
      %1555 = vmatprep.subr.mxu0 0.0
      %1556 = vmatpush1.msra.mxu0 0.0
      %1557 = vmatprep.subr.mxu0 0.0
      %1558 = vmatpush1.msra.mxu0 0.0
      %1559 = vmatprep.subr.mxu0 0.0
      %1560 = vmatpush1.msra.mxu0 0.0
      %1561 = vmatprep.subr.mxu0 0.0
      %1562 = vmatpush1.msra.mxu0 0.0
      %1563 = vmatprep.subr.mxu0 %v1530
      %1564 = vmatpush1.msra.mxu0 %v1529
      %1565 = vmatprep.subr.mxu0 %v1528
      %1566 = vmatpush1.msra.mxu0 %v1527
      %1567 = vmatprep.subr.mxu0 %v1526
      %1568 = vmatpush1.msra.mxu0 %v1525
      %1569 = vmatprep.subr.mxu0 0.0
      %1570 = vmatpush2.msra.mxu0 0.0
      %1571 = vmatprep.subr.mxu0 0.0
      %1572 = vmatpush2.msra.mxu0 0.0
      %1573 = vmatprep.subr.mxu0 0.0
      %1574 = vmatpush2.msra.mxu0 0.0
      %1575 = vmatprep.subr.mxu0 0.0
      %1576 = vmatpush2.msra.mxu0 0.0
      %1577 = vmatprep.subr.mxu0 0.0
      %1578 = vmatpush2.msra.mxu0 0.0
      %1579 = vmatprep.subr.mxu0 0.0
      %1580 = vmatpush2.msra.mxu0 0.0
      %1581 = vmatprep.subr.mxu0 0.0
      %1582 = vmatpush2.msra.mxu0 0.0
      %1583 = vmatprep.subr.mxu0 0.0
      %1584 = vmatpush2.msra.mxu0 0.0
      %1585 = vmatprep.subr.mxu0 0.0
      %1586 = vmatpush2.msra.mxu0 0.0
      %1587 = vmatprep.subr.mxu0 0.0
      %1588 = vmatpush2.msra.mxu0 0.0
      %1589 = vmatprep.subr.mxu0 0.0
      %1590 = vmatpush2.msra.mxu0 0.0
      %1591 = vmatprep.subr.mxu0 0.0
      %1592 = vmatpush2.msra.mxu0 0.0
      %1593 = vmatprep.subr.mxu0 0.0
      %1594 = vmatpush2.msra.mxu0 0.0
      %1595 = vmatprep.subr.mxu0 0.0
      %1596 = vmatpush2.msra.mxu0 0.0
      %1597 = vmatprep.subr.mxu0 0.0
      %1598 = vmatpush2.msra.mxu0 0.0
      %1599 = vmatprep.subr.mxu0 0.0
      %1600 = vmatpush2.msra.mxu0 0.0
      %1601 = vmatprep.mubr.f32.mxu0 0.0
      %1602 = vmatmul.mubr.f32.gmra.mxu0 %v1535
      %v1603 = vpop.f32.mrf.mxu0
      %v1604 = vadd.f32 0.0, %v1603
      %v1605 = vpop.f32.mrf.mxu0
      %v1606 = vadd.f32 0.0, %v1605
      %1607 = vdwg.mxu0
      %v1609 = vsel %vm1533, %v1505, 0
      %1611 = vmatprep.subr.mxu0 0.0
      %1612 = vmatpush1.msra.mxu0 0.0
      %1613 = vmatprep.subr.mxu0 0.0
      %1614 = vmatpush1.msra.mxu0 0.0
      %1615 = vmatprep.subr.mxu0 0.0
      %1616 = vmatpush1.msra.mxu0 0.0
      %1617 = vmatprep.subr.mxu0 0.0
      %1618 = vmatpush1.msra.mxu0 0.0
      %1619 = vmatprep.subr.mxu0 0.0
      %1620 = vmatpush1.msra.mxu0 0.0
      %1621 = vmatprep.subr.mxu0 0.0
      %1622 = vmatpush1.msra.mxu0 0.0
      %1623 = vmatprep.subr.mxu0 0.0
      %1624 = vmatpush1.msra.mxu0 0.0
      %1625 = vmatprep.subr.mxu0 0.0
      %1626 = vmatpush1.msra.mxu0 0.0
      %1627 = vmatprep.subr.mxu0 0.0
      %1628 = vmatpush1.msra.mxu0 0.0
      %1629 = vmatprep.subr.mxu0 0.0
      %1630 = vmatpush1.msra.mxu0 0.0
      %1631 = vmatprep.subr.mxu0 0.0
      %1632 = vmatpush1.msra.mxu0 0.0
      %1633 = vmatprep.subr.mxu0 0.0
      %1634 = vmatpush1.msra.mxu0 0.0
      %1635 = vmatprep.subr.mxu0 0.0
      %1636 = vmatpush1.msra.mxu0 0.0
      %1637 = vmatprep.subr.mxu0 %v1504
      %1638 = vmatpush1.msra.mxu0 %v1503
      %1639 = vmatprep.subr.mxu0 %v1502
      %1640 = vmatpush1.msra.mxu0 %v1501
      %1641 = vmatprep.subr.mxu0 %v1500
      %1642 = vmatpush1.msra.mxu0 %v1499
      %1643 = vmatprep.subr.mxu0 0.0
      %1644 = vmatpush2.msra.mxu0 0.0
      %1645 = vmatprep.subr.mxu0 0.0
      %1646 = vmatpush2.msra.mxu0 0.0
      %1647 = vmatprep.subr.mxu0 0.0
      %1648 = vmatpush2.msra.mxu0 0.0
      %1649 = vmatprep.subr.mxu0 0.0
      %1650 = vmatpush2.msra.mxu0 0.0
      %1651 = vmatprep.subr.mxu0 0.0
      %1652 = vmatpush2.msra.mxu0 0.0
      %1653 = vmatprep.subr.mxu0 0.0
      %1654 = vmatpush2.msra.mxu0 0.0
      %1655 = vmatprep.subr.mxu0 0.0
      %1656 = vmatpush2.msra.mxu0 0.0
      %1657 = vmatprep.subr.mxu0 0.0
      %1658 = vmatpush2.msra.mxu0 0.0
      %1659 = vmatprep.subr.mxu0 0.0
      %1660 = vmatpush2.msra.mxu0 0.0
      %1661 = vmatprep.subr.mxu0 0.0
      %1662 = vmatpush2.msra.mxu0 0.0
      %1663 = vmatprep.subr.mxu0 0.0
      %1664 = vmatpush2.msra.mxu0 0.0
      %1665 = vmatprep.subr.mxu0 0.0
      %1666 = vmatpush2.msra.mxu0 0.0
      %1667 = vmatprep.subr.mxu0 0.0
      %1668 = vmatpush2.msra.mxu0 0.0
      %1669 = vmatprep.subr.mxu0 0.0
      %1670 = vmatpush2.msra.mxu0 0.0
      %1671 = vmatprep.subr.mxu0 0.0
      %1672 = vmatpush2.msra.mxu0 0.0
      %1673 = vmatprep.subr.mxu0 0.0
      %1674 = vmatpush2.msra.mxu0 0.0
      %1675 = vmatprep.mubr.f32.mxu0 0.0
      %1676 = vmatmul.mubr.f32.gmra.mxu0 %v1609
      %v1677 = vpop.f32.mrf.mxu0
      %v1678 = vadd.f32 %v1604, %v1677
      %v1679 = vpop.f32.mrf.mxu0
      %v1680 = vadd.f32 %v1606, %v1679
      %1681 = vdwg.mxu0
      %1682 = vrot.lane.b32.xlu0 %v1468, 63
      %v1683 = vpop.permute.xlu0 %1682
      %1684 = vrot.lane.b32.xlu0 %v1470, 63
      %v1685 = vpop.permute.xlu0 %1684
      %1686 = vrot.lane.b32.xlu0 %v1472, 63
      %v1687 = vpop.permute.xlu0 %1686
      %1688 = vrot.lane.b32.xlu0 %v1469, 63
      %v1689 = vpop.permute.xlu0 %1688
      %1690 = vrot.lane.b32.xlu0 %v1471, 63
      %v1691 = vpop.permute.xlu0 %1690
      %1692 = vrot.lane.b32.xlu0 %v1473, 63
      %v1693 = vpop.permute.xlu0 %1692
      %vm1694 = vcmp.lt.s32.totalorder %v257, 63
      %v1695 = vsel %vm1694, %v1683, %v1689
      %v1696 = vsel %vm1694, %v1685, %v1691
      %v1697 = vsel %vm1694, %v1687, %v1693
      %v1698 = vsel %vm1694, %v1689, %v1683
      %v1699 = vsel %vm1694, %v1691, %v1685
      %v1700 = vsel %vm1694, %v1693, %v1687
      %v1701 = vmul.f32 %v1476, %v289
      %v1702 = vmul.f32 %v1477, %v290
      %v1703 = vmul.f32 %v1698, %v1701
      %v1704 = vmul.f32 %v1695, %v1702
      %v1705 = vmul.f32 %v1699, %v1701
      %v1706 = vmul.f32 %v1696, %v1702
      %v1707 = vmul.f32 %v1700, %v1701
      %v1708 = vmul.f32 %v1697, %v1702
      %s1709 = scalar_lea.vmem %s3, 16
      %v1710 = vld [vmem:[%s1709] sm:$0xff]
      %v1712 = vsel %vm1533, %v1710, 0
      %1714 = vmatprep.subr.mxu0 0.0
      %1715 = vmatpush1.msra.mxu0 0.0
      %1716 = vmatprep.subr.mxu0 0.0
      %1717 = vmatpush1.msra.mxu0 0.0
      %1718 = vmatprep.subr.mxu0 0.0
      %1719 = vmatpush1.msra.mxu0 0.0
      %1720 = vmatprep.subr.mxu0 0.0
      %1721 = vmatpush1.msra.mxu0 0.0
      %1722 = vmatprep.subr.mxu0 0.0
      %1723 = vmatpush1.msra.mxu0 0.0
      %1724 = vmatprep.subr.mxu0 0.0
      %1725 = vmatpush1.msra.mxu0 0.0
      %1726 = vmatprep.subr.mxu0 0.0
      %1727 = vmatpush1.msra.mxu0 0.0
      %1728 = vmatprep.subr.mxu0 0.0
      %1729 = vmatpush1.msra.mxu0 0.0
      %1730 = vmatprep.subr.mxu0 0.0
      %1731 = vmatpush1.msra.mxu0 0.0
      %1732 = vmatprep.subr.mxu0 0.0
      %1733 = vmatpush1.msra.mxu0 0.0
      %1734 = vmatprep.subr.mxu0 0.0
      %1735 = vmatpush1.msra.mxu0 0.0
      %1736 = vmatprep.subr.mxu0 0.0
      %1737 = vmatpush1.msra.mxu0 0.0
      %1738 = vmatprep.subr.mxu0 0.0
      %1739 = vmatpush1.msra.mxu0 0.0
      %1740 = vmatprep.subr.mxu0 %v1708
      %1741 = vmatpush1.msra.mxu0 %v1707
      %1742 = vmatprep.subr.mxu0 %v1706
      %1743 = vmatpush1.msra.mxu0 %v1705
      %1744 = vmatprep.subr.mxu0 %v1704
      %1745 = vmatpush1.msra.mxu0 %v1703
      %1746 = vmatprep.subr.mxu0 0.0
      %1747 = vmatpush2.msra.mxu0 0.0
      %1748 = vmatprep.subr.mxu0 0.0
      %1749 = vmatpush2.msra.mxu0 0.0
      %1750 = vmatprep.subr.mxu0 0.0
      %1751 = vmatpush2.msra.mxu0 0.0
      %1752 = vmatprep.subr.mxu0 0.0
      %1753 = vmatpush2.msra.mxu0 0.0
      %1754 = vmatprep.subr.mxu0 0.0
      %1755 = vmatpush2.msra.mxu0 0.0
      %1756 = vmatprep.subr.mxu0 0.0
      %1757 = vmatpush2.msra.mxu0 0.0
      %1758 = vmatprep.subr.mxu0 0.0
      %1759 = vmatpush2.msra.mxu0 0.0
      %1760 = vmatprep.subr.mxu0 0.0
      %1761 = vmatpush2.msra.mxu0 0.0
      %1762 = vmatprep.subr.mxu0 0.0
      %1763 = vmatpush2.msra.mxu0 0.0
      %1764 = vmatprep.subr.mxu0 0.0
      %1765 = vmatpush2.msra.mxu0 0.0
      %1766 = vmatprep.subr.mxu0 0.0
      %1767 = vmatpush2.msra.mxu0 0.0
      %1768 = vmatprep.subr.mxu0 0.0
      %1769 = vmatpush2.msra.mxu0 0.0
      %1770 = vmatprep.subr.mxu0 0.0
      %1771 = vmatpush2.msra.mxu0 0.0
      %1772 = vmatprep.subr.mxu0 0.0
      %1773 = vmatpush2.msra.mxu0 0.0
      %1774 = vmatprep.subr.mxu0 0.0
      %1775 = vmatpush2.msra.mxu0 0.0
      %1776 = vmatprep.subr.mxu0 0.0
      %1777 = vmatpush2.msra.mxu0 0.0
      %1778 = vmatprep.mubr.f32.mxu0 0.0
      %1779 = vmatmul.mubr.f32.gmra.mxu0 %v1712
      %v1780 = vpop.f32.mrf.mxu0
      %v1781 = vadd.f32 0.0, %v1780
      %v1782 = vpop.f32.mrf.mxu0
      %v1783 = vadd.f32 0.0, %v1782
      %1784 = vdwg.mxu0
      %v1785 = vadd.f32 %v1678, %v1781
      %v1786 = vadd.f32 %v1680, %v1783
      %1787 = vrot.lane.b32.xlu0 %v1468, 1
      %v1788 = vpop.permute.xlu0 %1787
      %1789 = vrot.lane.b32.xlu0 %v1470, 1
      %v1790 = vpop.permute.xlu0 %1789
      %1791 = vrot.lane.b32.xlu0 %v1472, 1
      %v1792 = vpop.permute.xlu0 %1791
      %1793 = vrot.lane.b32.xlu0 %v1469, 1
      %v1794 = vpop.permute.xlu0 %1793
      %1795 = vrot.lane.b32.xlu0 %v1471, 1
      %v1796 = vpop.permute.xlu0 %1795
      %1797 = vrot.lane.b32.xlu0 %v1473, 1
      %v1798 = vpop.permute.xlu0 %1797
      %v1799 = vsel %vm562, %v1788, %v1794
      %v1800 = vsel %vm562, %v1790, %v1796
      %v1801 = vsel %vm562, %v1792, %v1798
      %v1802 = vsel %vm562, %v1794, %v1788
      %v1803 = vsel %vm562, %v1796, %v1790
      %v1804 = vsel %vm562, %v1798, %v1792
      %v1805 = vmul.f32 %v1802, %v285
      %v1806 = vmul.f32 %v1799, %v286
      %v1807 = vmul.f32 %v1803, %v285
      %v1808 = vmul.f32 %v1800, %v286
      %v1809 = vmul.f32 %v1804, %v285
      %v1810 = vmul.f32 %v1801, %v286
      %s1811 = scalar_lea.vmem %s3, 24
      %v1812 = vld [vmem:[%s1811] sm:$0xff]
      %v1814 = vsel %vm1533, %v1812, 0
      %1816 = vmatprep.subr.mxu0 0.0
      %1817 = vmatpush1.msra.mxu0 0.0
      %1818 = vmatprep.subr.mxu0 0.0
      %1819 = vmatpush1.msra.mxu0 0.0
      %1820 = vmatprep.subr.mxu0 0.0
      %1821 = vmatpush1.msra.mxu0 0.0
      %1822 = vmatprep.subr.mxu0 0.0
      %1823 = vmatpush1.msra.mxu0 0.0
      %1824 = vmatprep.subr.mxu0 0.0
      %1825 = vmatpush1.msra.mxu0 0.0
      %1826 = vmatprep.subr.mxu0 0.0
      %1827 = vmatpush1.msra.mxu0 0.0
      %1828 = vmatprep.subr.mxu0 0.0
      %1829 = vmatpush1.msra.mxu0 0.0
      %1830 = vmatprep.subr.mxu0 0.0
      %1831 = vmatpush1.msra.mxu0 0.0
      %1832 = vmatprep.subr.mxu0 0.0
      %1833 = vmatpush1.msra.mxu0 0.0
      %1834 = vmatprep.subr.mxu0 0.0
      %1835 = vmatpush1.msra.mxu0 0.0
      %1836 = vmatprep.subr.mxu0 0.0
      %1837 = vmatpush1.msra.mxu0 0.0
      %1838 = vmatprep.subr.mxu0 0.0
      %1839 = vmatpush1.msra.mxu0 0.0
      %1840 = vmatprep.subr.mxu0 0.0
      %1841 = vmatpush1.msra.mxu0 0.0
      %1842 = vmatprep.subr.mxu0 %v1810
      %1843 = vmatpush1.msra.mxu0 %v1809
      %1844 = vmatprep.subr.mxu0 %v1808
      %1845 = vmatpush1.msra.mxu0 %v1807
      %1846 = vmatprep.subr.mxu0 %v1806
      %1847 = vmatpush1.msra.mxu0 %v1805
      %1848 = vmatprep.subr.mxu0 0.0
      %1849 = vmatpush2.msra.mxu0 0.0
      %1850 = vmatprep.subr.mxu0 0.0
      %1851 = vmatpush2.msra.mxu0 0.0
      %1852 = vmatprep.subr.mxu0 0.0
      %1853 = vmatpush2.msra.mxu0 0.0
      %1854 = vmatprep.subr.mxu0 0.0
      %1855 = vmatpush2.msra.mxu0 0.0
      %1856 = vmatprep.subr.mxu0 0.0
      %1857 = vmatpush2.msra.mxu0 0.0
      %1858 = vmatprep.subr.mxu0 0.0
      %1859 = vmatpush2.msra.mxu0 0.0
      %1860 = vmatprep.subr.mxu0 0.0
      %1861 = vmatpush2.msra.mxu0 0.0
      %1862 = vmatprep.subr.mxu0 0.0
      %1863 = vmatpush2.msra.mxu0 0.0
      %1864 = vmatprep.subr.mxu0 0.0
      %1865 = vmatpush2.msra.mxu0 0.0
      %1866 = vmatprep.subr.mxu0 0.0
      %1867 = vmatpush2.msra.mxu0 0.0
      %1868 = vmatprep.subr.mxu0 0.0
      %1869 = vmatpush2.msra.mxu0 0.0
      %1870 = vmatprep.subr.mxu0 0.0
      %1871 = vmatpush2.msra.mxu0 0.0
      %1872 = vmatprep.subr.mxu0 0.0
      %1873 = vmatpush2.msra.mxu0 0.0
      %1874 = vmatprep.subr.mxu0 0.0
      %1875 = vmatpush2.msra.mxu0 0.0
      %1876 = vmatprep.subr.mxu0 0.0
      %1877 = vmatpush2.msra.mxu0 0.0
      %1878 = vmatprep.subr.mxu0 0.0
      %1879 = vmatpush2.msra.mxu0 0.0
      %1880 = vmatprep.mubr.f32.mxu0 0.0
      %1881 = vmatmul.mubr.f32.gmra.mxu0 %v1814
      %v1882 = vpop.f32.mrf.mxu0
      %v1883 = vadd.f32 0.0, %v1882
      %v1884 = vpop.f32.mrf.mxu0
      %v1885 = vadd.f32 0.0, %v1884
      %1886 = vdwg.mxu0
      %v1887 = vadd.f32 %v1785, %v1883
      %v1888 = vadd.f32 %v1786, %v1885
      %s1889 = scalar_lea.vmem %s3, 32
      %v1890 = vld [vmem:[%s1889] sm:$0xff]
      %v1892 = vsel %vm1533, %v1890, 0
      %1894 = vmatprep.subr.mxu0 0.0
      %1895 = vmatpush1.msra.mxu0 0.0
      %1896 = vmatprep.subr.mxu0 0.0
      %1897 = vmatpush1.msra.mxu0 0.0
      %1898 = vmatprep.subr.mxu0 0.0
      %1899 = vmatpush1.msra.mxu0 0.0
      %1900 = vmatprep.subr.mxu0 0.0
      %1901 = vmatpush1.msra.mxu0 0.0
      %1902 = vmatprep.subr.mxu0 0.0
      %1903 = vmatpush1.msra.mxu0 0.0
      %1904 = vmatprep.subr.mxu0 0.0
      %1905 = vmatpush1.msra.mxu0 0.0
      %1906 = vmatprep.subr.mxu0 0.0
      %1907 = vmatpush1.msra.mxu0 0.0
      %1908 = vmatprep.subr.mxu0 0.0
      %1909 = vmatpush1.msra.mxu0 0.0
      %1910 = vmatprep.subr.mxu0 0.0
      %1911 = vmatpush1.msra.mxu0 0.0
      %1912 = vmatprep.subr.mxu0 0.0
      %1913 = vmatpush1.msra.mxu0 0.0
      %1914 = vmatprep.subr.mxu0 0.0
      %1915 = vmatpush1.msra.mxu0 0.0
      %1916 = vmatprep.subr.mxu0 0.0
      %1917 = vmatpush1.msra.mxu0 0.0
      %1918 = vmatprep.subr.mxu0 0.0
      %1919 = vmatpush1.msra.mxu0 0.0
      %1920 = vmatprep.subr.mxu0 %v1473
      %1921 = vmatpush1.msra.mxu0 %v1472
      %1922 = vmatprep.subr.mxu0 %v1471
      %1923 = vmatpush1.msra.mxu0 %v1470
      %1924 = vmatprep.subr.mxu0 %v1469
      %1925 = vmatpush1.msra.mxu0 %v1468
      %1926 = vmatprep.subr.mxu0 0.0
      %1927 = vmatpush2.msra.mxu0 0.0
      %1928 = vmatprep.subr.mxu0 0.0
      %1929 = vmatpush2.msra.mxu0 0.0
      %1930 = vmatprep.subr.mxu0 0.0
      %1931 = vmatpush2.msra.mxu0 0.0
      %1932 = vmatprep.subr.mxu0 0.0
      %1933 = vmatpush2.msra.mxu0 0.0
      %1934 = vmatprep.subr.mxu0 0.0
      %1935 = vmatpush2.msra.mxu0 0.0
      %1936 = vmatprep.subr.mxu0 0.0
      %1937 = vmatpush2.msra.mxu0 0.0
      %1938 = vmatprep.subr.mxu0 0.0
      %1939 = vmatpush2.msra.mxu0 0.0
      %1940 = vmatprep.subr.mxu0 0.0
      %1941 = vmatpush2.msra.mxu0 0.0
      %1942 = vmatprep.subr.mxu0 0.0
      %1943 = vmatpush2.msra.mxu0 0.0
      %1944 = vmatprep.subr.mxu0 0.0
      %1945 = vmatpush2.msra.mxu0 0.0
      %1946 = vmatprep.subr.mxu0 0.0
      %1947 = vmatpush2.msra.mxu0 0.0
      %1948 = vmatprep.subr.mxu0 0.0
      %1949 = vmatpush2.msra.mxu0 0.0
      %1950 = vmatprep.subr.mxu0 0.0
      %1951 = vmatpush2.msra.mxu0 0.0
      %1952 = vmatprep.subr.mxu0 0.0
      %1953 = vmatpush2.msra.mxu0 0.0
      %1954 = vmatprep.subr.mxu0 0.0
      %1955 = vmatpush2.msra.mxu0 0.0
      %1956 = vmatprep.subr.mxu0 0.0
      %1957 = vmatpush2.msra.mxu0 0.0
      %1958 = vmatprep.mubr.f32.mxu0 0.0
      %1959 = vmatmul.mubr.f32.gmra.mxu0 %v1892
      %v1960 = vpop.f32.mrf.mxu0
      %v1961 = vadd.f32 0.0, %v1960
      %v1962 = vpop.f32.mrf.mxu0
      %v1963 = vadd.f32 0.0, %v1962
      %1964 = vdwg.mxu0
      %v1965 = vadd.f32 %v1887, %v1961
      %v1966 = vadd.f32 %v1888, %v1963
      %1967 = vrot.lane.b32.xlu0 %v1468, 127
      %v1968 = vpop.permute.xlu0 %1967
      %1969 = vrot.lane.b32.xlu0 %v1470, 127
      %v1970 = vpop.permute.xlu0 %1969
      %1971 = vrot.lane.b32.xlu0 %v1472, 127
      %v1972 = vpop.permute.xlu0 %1971
      %1973 = vrot.lane.b32.xlu0 %v1469, 127
      %v1974 = vpop.permute.xlu0 %1973
      %1975 = vrot.lane.b32.xlu0 %v1471, 127
      %v1976 = vpop.permute.xlu0 %1975
      %1977 = vrot.lane.b32.xlu0 %v1473, 127
      %v1978 = vpop.permute.xlu0 %1977
      %v1979 = vsel %vm727, %v1968, %v1974
      %v1980 = vsel %vm727, %v1970, %v1976
      %v1981 = vsel %vm727, %v1972, %v1978
      %v1982 = vsel %vm727, %v1974, %v1968
      %v1983 = vsel %vm727, %v1976, %v1970
      %v1984 = vsel %vm727, %v1978, %v1972
      %v1985 = vmul.f32 %v1979, %v289
      %v1986 = vmul.f32 %v1982, %v290
      %v1987 = vmul.f32 %v1980, %v289
      %v1988 = vmul.f32 %v1983, %v290
      %v1989 = vmul.f32 %v1981, %v289
      %v1990 = vmul.f32 %v1984, %v290
      %s1991 = scalar_lea.vmem %s3, 40
      %v1992 = vld [vmem:[%s1991] sm:$0xff]
      %v1994 = vsel %vm1533, %v1992, 0
      %1996 = vmatprep.subr.mxu0 0.0
      %1997 = vmatpush1.msra.mxu0 0.0
      %1998 = vmatprep.subr.mxu0 0.0
      %1999 = vmatpush1.msra.mxu0 0.0
      %2000 = vmatprep.subr.mxu0 0.0
      %2001 = vmatpush1.msra.mxu0 0.0
      %2002 = vmatprep.subr.mxu0 0.0
      %2003 = vmatpush1.msra.mxu0 0.0
      %2004 = vmatprep.subr.mxu0 0.0
      %2005 = vmatpush1.msra.mxu0 0.0
      %2006 = vmatprep.subr.mxu0 0.0
      %2007 = vmatpush1.msra.mxu0 0.0
      %2008 = vmatprep.subr.mxu0 0.0
      %2009 = vmatpush1.msra.mxu0 0.0
      %2010 = vmatprep.subr.mxu0 0.0
      %2011 = vmatpush1.msra.mxu0 0.0
      %2012 = vmatprep.subr.mxu0 0.0
      %2013 = vmatpush1.msra.mxu0 0.0
      %2014 = vmatprep.subr.mxu0 0.0
      %2015 = vmatpush1.msra.mxu0 0.0
      %2016 = vmatprep.subr.mxu0 0.0
      %2017 = vmatpush1.msra.mxu0 0.0
      %2018 = vmatprep.subr.mxu0 0.0
      %2019 = vmatpush1.msra.mxu0 0.0
      %2020 = vmatprep.subr.mxu0 0.0
      %2021 = vmatpush1.msra.mxu0 0.0
      %2022 = vmatprep.subr.mxu0 %v1990
      %2023 = vmatpush1.msra.mxu0 %v1989
      %2024 = vmatprep.subr.mxu0 %v1988
      %2025 = vmatpush1.msra.mxu0 %v1987
      %2026 = vmatprep.subr.mxu0 %v1986
      %2027 = vmatpush1.msra.mxu0 %v1985
      %2028 = vmatprep.subr.mxu0 0.0
      %2029 = vmatpush2.msra.mxu0 0.0
      %2030 = vmatprep.subr.mxu0 0.0
      %2031 = vmatpush2.msra.mxu0 0.0
      %2032 = vmatprep.subr.mxu0 0.0
      %2033 = vmatpush2.msra.mxu0 0.0
      %2034 = vmatprep.subr.mxu0 0.0
      %2035 = vmatpush2.msra.mxu0 0.0
      %2036 = vmatprep.subr.mxu0 0.0
      %2037 = vmatpush2.msra.mxu0 0.0
      %2038 = vmatprep.subr.mxu0 0.0
      %2039 = vmatpush2.msra.mxu0 0.0
      %2040 = vmatprep.subr.mxu0 0.0
      %2041 = vmatpush2.msra.mxu0 0.0
      %2042 = vmatprep.subr.mxu0 0.0
      %2043 = vmatpush2.msra.mxu0 0.0
      %2044 = vmatprep.subr.mxu0 0.0
      %2045 = vmatpush2.msra.mxu0 0.0
      %2046 = vmatprep.subr.mxu0 0.0
      %2047 = vmatpush2.msra.mxu0 0.0
      %2048 = vmatprep.subr.mxu0 0.0
      %2049 = vmatpush2.msra.mxu0 0.0
      %2050 = vmatprep.subr.mxu0 0.0
      %2051 = vmatpush2.msra.mxu0 0.0
      %2052 = vmatprep.subr.mxu0 0.0
      %2053 = vmatpush2.msra.mxu0 0.0
      %2054 = vmatprep.subr.mxu0 0.0
      %2055 = vmatpush2.msra.mxu0 0.0
      %2056 = vmatprep.subr.mxu0 0.0
      %2057 = vmatpush2.msra.mxu0 0.0
      %2058 = vmatprep.subr.mxu0 0.0
      %2059 = vmatpush2.msra.mxu0 0.0
      %2060 = vmatprep.mubr.f32.mxu0 0.0
      %2061 = vmatmul.mubr.f32.gmra.mxu0 %v1994
      %v2062 = vpop.f32.mrf.mxu0
      %v2063 = vadd.f32 0.0, %v2062
      %v2064 = vpop.f32.mrf.mxu0
      %v2065 = vadd.f32 0.0, %v2064
      %2066 = vdwg.mxu0
      %v2067 = vadd.f32 %v1965, %v2063
      %v2068 = vadd.f32 %v1966, %v2065
      %s2069 = scalar_lea.vmem %s5, 16
      %v2070 = vld [vmem:[%s2069] sm:$0xff]
      %s2071 = scalar_lea.vmem %s5, 48
      %v2072 = vld [vmem:[%s2071] sm:$0xff]
      %s2073 = scalar_lea.vmem %s5, 80
      %v2074 = vld [vmem:[%s2073] sm:$0xff]
      %v2075 = vadd.f32 %v2067, %v2068
      %2076 = vadd.xlane.f32.xlu0 %v2075
      %v2077 = vpop.xlane.xlu0 %2076
      %v2078 = vmul.f32 %v2077, 0.00390625
      %v2079 = vmul.f32 %v2067, %v2067
      %v2080 = vmul.f32 %v2068, %v2068
      %v2081 = vadd.f32 %v2079, %v2080
      %2082 = vadd.xlane.f32.xlu0 %v2081
      %v2083 = vpop.xlane.xlu0 %2082
      %v2084 = vmul.f32 %v2083, 0.00390625
      %v2085 = vmul.f32 %v2078, %v2078
      %v2086 = vsub.f32 %v2084, %v2085
      %v2087 = vadd.f32 %v2086, 1e-05
      %v2088 = vrsqrt.pop %v2087
      %v2089 = vmul.f32 %v2070, %v2088
      %v2090 = vmul.f32 %v2078, %v2089
      %v2091 = vsub.f32 %v2072, %v2090
      %2093 = vset.pattern.permute.xlu0 0
      %2094 = vperm.xlu0 %2093, %v2089
      %v2095 = vpop.permute.xlu0 %2094
      %v2097 = vmul.f32 %v2067, %v2095
      %v2098 = vmul.f32 %v2068, %v2095
      %2100 = vset.pattern.permute.xlu0 0
      %2101 = vperm.xlu0 %2100, %v2091
      %v2102 = vpop.permute.xlu0 %2101
      %v2104 = vadd.f32 %v2097, %v2102
      %v2105 = vadd.f32 %v2098, %v2102
      %vm2106 = vcmp.ge.f32.partialorder %v2104, 0.0
      %vm2107 = vcmp.ge.f32.partialorder %v2105, 0.0
      %2109 = vset.pattern.permute.xlu0 0
      %2110 = vperm.xlu0 %2109, %v2074
      %v2111 = vpop.permute.xlu0 %2110
      %v2113 = vmul.f32 %v2111, %v2104
      %v2114 = vmul.f32 %v2111, %v2105
      %v2115 = vsel %vm2106, %v2104, %v2113
      %v2116 = vsel %vm2107, %v2105, %v2114
      %2117 = vst [vmem:[#allocation2] sm:$0xff] %v2115
      %2118 = vst [vmem:[#allocation2 + $0x8] sm:$0xff] %v2116
      %v2119 = vld [vmem:[#allocation2] sm:$0xff]
      %v2120 = vld [vmem:[#allocation2 + $0x8] sm:$0xff]
      %v2121 = vld [vmem:[#allocation2 + $0x10] sm:$0xff]
      %v2122 = vld [vmem:[#allocation2 + $0x18] sm:$0xff]
      %v2123 = vld [vmem:[#allocation2 + $0x20] sm:$0xff]
      %v2124 = vld [vmem:[#allocation2 + $0x28] sm:$0xff]
      %v2125 = vld [vmem:[#allocation2 + $0x30] sm:$0xff]
      %v2126 = vld [vmem:[#allocation2 + $0x38] sm:$0xff]
      %vm2127 = vcmp.ge.s32.totalorder %v257, 128
      %vm2128 = vcmp.ge.s32.totalorder %v258, 128
      %v2129 = vsel %vm2127, 1.0, 0.0
      %v2130 = vsel %vm2128, 1.0, 0.0
      %2131 = vrot.lane.b32.xlu0 %v2119, 1
      %v2132 = vpop.permute.xlu0 %2131
      %2133 = vrot.lane.b32.xlu0 %v2121, 1
      %v2134 = vpop.permute.xlu0 %2133
      %2135 = vrot.lane.b32.xlu0 %v2123, 1
      %v2136 = vpop.permute.xlu0 %2135
      %2137 = vrot.lane.b32.xlu0 %v2125, 1
      %v2138 = vpop.permute.xlu0 %2137
      %2139 = vrot.lane.b32.xlu0 %v2120, 1
      %v2140 = vpop.permute.xlu0 %2139
      %2141 = vrot.lane.b32.xlu0 %v2122, 1
      %v2142 = vpop.permute.xlu0 %2141
      %2143 = vrot.lane.b32.xlu0 %v2124, 1
      %v2144 = vpop.permute.xlu0 %2143
      %2145 = vrot.lane.b32.xlu0 %v2126, 1
      %v2146 = vpop.permute.xlu0 %2145
      %v2147 = vsel %vm562, %v2132, %v2140
      %v2148 = vsel %vm562, %v2134, %v2142
      %v2149 = vsel %vm562, %v2136, %v2144
      %v2150 = vsel %vm562, %v2138, %v2146
      %v2151 = vsel %vm562, %v2140, %v2132
      %v2152 = vsel %vm562, %v2142, %v2134
      %v2153 = vsel %vm562, %v2144, %v2136
      %v2154 = vsel %vm562, %v2146, %v2138
      %v2155 = vmul.f32 %v2129, %v285
      %v2156 = vmul.f32 %v2130, %v286
      %v2157 = vmul.f32 %v2147, %v2155
      %v2158 = vmul.f32 %v2151, %v2156
      %v2159 = vmul.f32 %v2148, %v2155
      %v2160 = vmul.f32 %v2152, %v2156
      %v2161 = vmul.f32 %v2149, %v2155
      %v2162 = vmul.f32 %v2153, %v2156
      %v2163 = vmul.f32 %v2150, %v2155
      %v2164 = vmul.f32 %v2154, %v2156
      %v2165 = vld [vmem:[%s4] sm:$0xff]
      %v2166 = vmul.f32 %v2120, %v2129
      %v2167 = vmul.f32 %v2119, %v2130
      %v2168 = vmul.f32 %v2122, %v2129
      %v2169 = vmul.f32 %v2121, %v2130
      %v2170 = vmul.f32 %v2124, %v2129
      %v2171 = vmul.f32 %v2123, %v2130
      %v2172 = vmul.f32 %v2126, %v2129
      %v2173 = vmul.f32 %v2125, %v2130
      %s2174 = scalar_lea.vmem %s4, 8
      %v2175 = vld [vmem:[%s2174] sm:$0xff]
      %vm2176 = vcmask 261120
      %v2178 = vsel %vm2176, %v2175, 0
      %2180 = vmatprep.subr.mxu0 0.0
      %2181 = vmatpush1.msra.mxu0 0.0
      %2182 = vmatprep.subr.mxu0 0.0
      %2183 = vmatpush1.msra.mxu0 0.0
      %2184 = vmatprep.subr.mxu0 0.0
      %2185 = vmatpush1.msra.mxu0 0.0
      %2186 = vmatprep.subr.mxu0 0.0
      %2187 = vmatpush1.msra.mxu0 0.0
      %2188 = vmatprep.subr.mxu0 0.0
      %2189 = vmatpush1.msra.mxu0 0.0
      %2190 = vmatprep.subr.mxu0 0.0
      %2191 = vmatpush1.msra.mxu0 0.0
      %2192 = vmatprep.subr.mxu0 0.0
      %2193 = vmatpush1.msra.mxu0 0.0
      %2194 = vmatprep.subr.mxu0 0.0
      %2195 = vmatpush1.msra.mxu0 0.0
      %2196 = vmatprep.subr.mxu0 0.0
      %2197 = vmatpush1.msra.mxu0 0.0
      %2198 = vmatprep.subr.mxu0 0.0
      %2199 = vmatpush1.msra.mxu0 0.0
      %2200 = vmatprep.subr.mxu0 0.0
      %2201 = vmatpush1.msra.mxu0 0.0
      %2202 = vmatprep.subr.mxu0 0.0
      %2203 = vmatpush1.msra.mxu0 0.0
      %2204 = vmatprep.subr.mxu0 %v2173
      %2205 = vmatpush1.msra.mxu0 %v2172
      %2206 = vmatprep.subr.mxu0 %v2171
      %2207 = vmatpush1.msra.mxu0 %v2170
      %2208 = vmatprep.subr.mxu0 %v2169
      %2209 = vmatpush1.msra.mxu0 %v2168
      %2210 = vmatprep.subr.mxu0 %v2167
      %2211 = vmatpush1.msra.mxu0 %v2166
      %2212 = vmatprep.subr.mxu0 0.0
      %2213 = vmatpush2.msra.mxu0 0.0
      %2214 = vmatprep.subr.mxu0 0.0
      %2215 = vmatpush2.msra.mxu0 0.0
      %2216 = vmatprep.subr.mxu0 0.0
      %2217 = vmatpush2.msra.mxu0 0.0
      %2218 = vmatprep.subr.mxu0 0.0
      %2219 = vmatpush2.msra.mxu0 0.0
      %2220 = vmatprep.subr.mxu0 0.0
      %2221 = vmatpush2.msra.mxu0 0.0
      %2222 = vmatprep.subr.mxu0 0.0
      %2223 = vmatpush2.msra.mxu0 0.0
      %2224 = vmatprep.subr.mxu0 0.0
      %2225 = vmatpush2.msra.mxu0 0.0
      %2226 = vmatprep.subr.mxu0 0.0
      %2227 = vmatpush2.msra.mxu0 0.0
      %2228 = vmatprep.subr.mxu0 0.0
      %2229 = vmatpush2.msra.mxu0 0.0
      %2230 = vmatprep.subr.mxu0 0.0
      %2231 = vmatpush2.msra.mxu0 0.0
      %2232 = vmatprep.subr.mxu0 0.0
      %2233 = vmatpush2.msra.mxu0 0.0
      %2234 = vmatprep.subr.mxu0 0.0
      %2235 = vmatpush2.msra.mxu0 0.0
      %2236 = vmatprep.subr.mxu0 0.0
      %2237 = vmatpush2.msra.mxu0 0.0
      %2238 = vmatprep.subr.mxu0 0.0
      %2239 = vmatpush2.msra.mxu0 0.0
      %2240 = vmatprep.subr.mxu0 0.0
      %2241 = vmatpush2.msra.mxu0 0.0
      %2242 = vmatprep.subr.mxu0 0.0
      %2243 = vmatpush2.msra.mxu0 0.0
      %2244 = vmatprep.mubr.f32.mxu0 0.0
      %2245 = vmatmul.mubr.f32.gmra.mxu0 %v2178
      %v2246 = vpop.f32.mrf.mxu0
      %v2247 = vadd.f32 0.0, %v2246
      %v2248 = vpop.f32.mrf.mxu0
      %v2249 = vadd.f32 0.0, %v2248
      %2250 = vdwg.mxu0
      %v2252 = vsel %vm2176, %v2165, 0
      %2254 = vmatprep.subr.mxu0 0.0
      %2255 = vmatpush1.msra.mxu0 0.0
      %2256 = vmatprep.subr.mxu0 0.0
      %2257 = vmatpush1.msra.mxu0 0.0
      %2258 = vmatprep.subr.mxu0 0.0
      %2259 = vmatpush1.msra.mxu0 0.0
      %2260 = vmatprep.subr.mxu0 0.0
      %2261 = vmatpush1.msra.mxu0 0.0
      %2262 = vmatprep.subr.mxu0 0.0
      %2263 = vmatpush1.msra.mxu0 0.0
      %2264 = vmatprep.subr.mxu0 0.0
      %2265 = vmatpush1.msra.mxu0 0.0
      %2266 = vmatprep.subr.mxu0 0.0
      %2267 = vmatpush1.msra.mxu0 0.0
      %2268 = vmatprep.subr.mxu0 0.0
      %2269 = vmatpush1.msra.mxu0 0.0
      %2270 = vmatprep.subr.mxu0 0.0
      %2271 = vmatpush1.msra.mxu0 0.0
      %2272 = vmatprep.subr.mxu0 0.0
      %2273 = vmatpush1.msra.mxu0 0.0
      %2274 = vmatprep.subr.mxu0 0.0
      %2275 = vmatpush1.msra.mxu0 0.0
      %2276 = vmatprep.subr.mxu0 0.0
      %2277 = vmatpush1.msra.mxu0 0.0
      %2278 = vmatprep.subr.mxu0 %v2164
      %2279 = vmatpush1.msra.mxu0 %v2163
      %2280 = vmatprep.subr.mxu0 %v2162
      %2281 = vmatpush1.msra.mxu0 %v2161
      %2282 = vmatprep.subr.mxu0 %v2160
      %2283 = vmatpush1.msra.mxu0 %v2159
      %2284 = vmatprep.subr.mxu0 %v2158
      %2285 = vmatpush1.msra.mxu0 %v2157
      %2286 = vmatprep.subr.mxu0 0.0
      %2287 = vmatpush2.msra.mxu0 0.0
      %2288 = vmatprep.subr.mxu0 0.0
      %2289 = vmatpush2.msra.mxu0 0.0
      %2290 = vmatprep.subr.mxu0 0.0
      %2291 = vmatpush2.msra.mxu0 0.0
      %2292 = vmatprep.subr.mxu0 0.0
      %2293 = vmatpush2.msra.mxu0 0.0
      %2294 = vmatprep.subr.mxu0 0.0
      %2295 = vmatpush2.msra.mxu0 0.0
      %2296 = vmatprep.subr.mxu0 0.0
      %2297 = vmatpush2.msra.mxu0 0.0
      %2298 = vmatprep.subr.mxu0 0.0
      %2299 = vmatpush2.msra.mxu0 0.0
      %2300 = vmatprep.subr.mxu0 0.0
      %2301 = vmatpush2.msra.mxu0 0.0
      %2302 = vmatprep.subr.mxu0 0.0
      %2303 = vmatpush2.msra.mxu0 0.0
      %2304 = vmatprep.subr.mxu0 0.0
      %2305 = vmatpush2.msra.mxu0 0.0
      %2306 = vmatprep.subr.mxu0 0.0
      %2307 = vmatpush2.msra.mxu0 0.0
      %2308 = vmatprep.subr.mxu0 0.0
      %2309 = vmatpush2.msra.mxu0 0.0
      %2310 = vmatprep.subr.mxu0 0.0
      %2311 = vmatpush2.msra.mxu0 0.0
      %2312 = vmatprep.subr.mxu0 0.0
      %2313 = vmatpush2.msra.mxu0 0.0
      %2314 = vmatprep.subr.mxu0 0.0
      %2315 = vmatpush2.msra.mxu0 0.0
      %2316 = vmatprep.subr.mxu0 0.0
      %2317 = vmatpush2.msra.mxu0 0.0
      %2318 = vmatprep.mubr.f32.mxu0 0.0
      %2319 = vmatmul.mubr.f32.gmra.mxu0 %v2252
      %v2320 = vpop.f32.mrf.mxu0
      %v2321 = vadd.f32 %v2247, %v2320
      %v2322 = vpop.f32.mrf.mxu0
      %v2323 = vadd.f32 %v2249, %v2322
      %2324 = vdwg.mxu0
      %2325 = vrot.lane.b32.xlu0 %v2119, 127
      %v2326 = vpop.permute.xlu0 %2325
      %2327 = vrot.lane.b32.xlu0 %v2121, 127
      %v2328 = vpop.permute.xlu0 %2327
      %2329 = vrot.lane.b32.xlu0 %v2123, 127
      %v2330 = vpop.permute.xlu0 %2329
      %2331 = vrot.lane.b32.xlu0 %v2125, 127
      %v2332 = vpop.permute.xlu0 %2331
      %2333 = vrot.lane.b32.xlu0 %v2120, 127
      %v2334 = vpop.permute.xlu0 %2333
      %2335 = vrot.lane.b32.xlu0 %v2122, 127
      %v2336 = vpop.permute.xlu0 %2335
      %2337 = vrot.lane.b32.xlu0 %v2124, 127
      %v2338 = vpop.permute.xlu0 %2337
      %2339 = vrot.lane.b32.xlu0 %v2126, 127
      %v2340 = vpop.permute.xlu0 %2339
      %v2341 = vsel %vm727, %v2326, %v2334
      %v2342 = vsel %vm727, %v2328, %v2336
      %v2343 = vsel %vm727, %v2330, %v2338
      %v2344 = vsel %vm727, %v2332, %v2340
      %v2345 = vsel %vm727, %v2334, %v2326
      %v2346 = vsel %vm727, %v2336, %v2328
      %v2347 = vsel %vm727, %v2338, %v2330
      %v2348 = vsel %vm727, %v2340, %v2332
      %v2349 = vmul.f32 %v2129, %v289
      %v2350 = vmul.f32 %v2130, %v290
      %v2351 = vmul.f32 %v2345, %v2349
      %v2352 = vmul.f32 %v2341, %v2350
      %v2353 = vmul.f32 %v2346, %v2349
      %v2354 = vmul.f32 %v2342, %v2350
      %v2355 = vmul.f32 %v2347, %v2349
      %v2356 = vmul.f32 %v2343, %v2350
      %v2357 = vmul.f32 %v2348, %v2349
      %v2358 = vmul.f32 %v2344, %v2350
      %s2359 = scalar_lea.vmem %s4, 16
      %v2360 = vld [vmem:[%s2359] sm:$0xff]
      %v2362 = vsel %vm2176, %v2360, 0
      %2364 = vmatprep.subr.mxu0 0.0
      %2365 = vmatpush1.msra.mxu0 0.0
      %2366 = vmatprep.subr.mxu0 0.0
      %2367 = vmatpush1.msra.mxu0 0.0
      %2368 = vmatprep.subr.mxu0 0.0
      %2369 = vmatpush1.msra.mxu0 0.0
      %2370 = vmatprep.subr.mxu0 0.0
      %2371 = vmatpush1.msra.mxu0 0.0
      %2372 = vmatprep.subr.mxu0 0.0
      %2373 = vmatpush1.msra.mxu0 0.0
      %2374 = vmatprep.subr.mxu0 0.0
      %2375 = vmatpush1.msra.mxu0 0.0
      %2376 = vmatprep.subr.mxu0 0.0
      %2377 = vmatpush1.msra.mxu0 0.0
      %2378 = vmatprep.subr.mxu0 0.0
      %2379 = vmatpush1.msra.mxu0 0.0
      %2380 = vmatprep.subr.mxu0 0.0
      %2381 = vmatpush1.msra.mxu0 0.0
      %2382 = vmatprep.subr.mxu0 0.0
      %2383 = vmatpush1.msra.mxu0 0.0
      %2384 = vmatprep.subr.mxu0 0.0
      %2385 = vmatpush1.msra.mxu0 0.0
      %2386 = vmatprep.subr.mxu0 0.0
      %2387 = vmatpush1.msra.mxu0 0.0
      %2388 = vmatprep.subr.mxu0 %v2358
      %2389 = vmatpush1.msra.mxu0 %v2357
      %2390 = vmatprep.subr.mxu0 %v2356
      %2391 = vmatpush1.msra.mxu0 %v2355
      %2392 = vmatprep.subr.mxu0 %v2354
      %2393 = vmatpush1.msra.mxu0 %v2353
      %2394 = vmatprep.subr.mxu0 %v2352
      %2395 = vmatpush1.msra.mxu0 %v2351
      %2396 = vmatprep.subr.mxu0 0.0
      %2397 = vmatpush2.msra.mxu0 0.0
      %2398 = vmatprep.subr.mxu0 0.0
      %2399 = vmatpush2.msra.mxu0 0.0
      %2400 = vmatprep.subr.mxu0 0.0
      %2401 = vmatpush2.msra.mxu0 0.0
      %2402 = vmatprep.subr.mxu0 0.0
      %2403 = vmatpush2.msra.mxu0 0.0
      %2404 = vmatprep.subr.mxu0 0.0
      %2405 = vmatpush2.msra.mxu0 0.0
      %2406 = vmatprep.subr.mxu0 0.0
      %2407 = vmatpush2.msra.mxu0 0.0
      %2408 = vmatprep.subr.mxu0 0.0
      %2409 = vmatpush2.msra.mxu0 0.0
      %2410 = vmatprep.subr.mxu0 0.0
      %2411 = vmatpush2.msra.mxu0 0.0
      %2412 = vmatprep.subr.mxu0 0.0
      %2413 = vmatpush2.msra.mxu0 0.0
      %2414 = vmatprep.subr.mxu0 0.0
      %2415 = vmatpush2.msra.mxu0 0.0
      %2416 = vmatprep.subr.mxu0 0.0
      %2417 = vmatpush2.msra.mxu0 0.0
      %2418 = vmatprep.subr.mxu0 0.0
      %2419 = vmatpush2.msra.mxu0 0.0
      %2420 = vmatprep.subr.mxu0 0.0
      %2421 = vmatpush2.msra.mxu0 0.0
      %2422 = vmatprep.subr.mxu0 0.0
      %2423 = vmatpush2.msra.mxu0 0.0
      %2424 = vmatprep.subr.mxu0 0.0
      %2425 = vmatpush2.msra.mxu0 0.0
      %2426 = vmatprep.subr.mxu0 0.0
      %2427 = vmatpush2.msra.mxu0 0.0
      %2428 = vmatprep.mubr.f32.mxu0 0.0
      %2429 = vmatmul.mubr.f32.gmra.mxu0 %v2362
      %v2430 = vpop.f32.mrf.mxu0
      %v2431 = vadd.f32 0.0, %v2430
      %v2432 = vpop.f32.mrf.mxu0
      %v2433 = vadd.f32 0.0, %v2432
      %2434 = vdwg.mxu0
      %v2435 = vadd.f32 %v2321, %v2431
      %v2436 = vadd.f32 %v2323, %v2433
      %v2437 = vmul.f32 %v2151, %v285
      %v2438 = vmul.f32 %v2147, %v286
      %v2439 = vmul.f32 %v2152, %v285
      %v2440 = vmul.f32 %v2148, %v286
      %v2441 = vmul.f32 %v2153, %v285
      %v2442 = vmul.f32 %v2149, %v286
      %v2443 = vmul.f32 %v2154, %v285
      %v2444 = vmul.f32 %v2150, %v286
      %s2445 = scalar_lea.vmem %s4, 24
      %v2446 = vld [vmem:[%s2445] sm:$0xff]
      %v2448 = vsel %vm2176, %v2446, 0
      %2450 = vmatprep.subr.mxu0 0.0
      %2451 = vmatpush1.msra.mxu0 0.0
      %2452 = vmatprep.subr.mxu0 0.0
      %2453 = vmatpush1.msra.mxu0 0.0
      %2454 = vmatprep.subr.mxu0 0.0
      %2455 = vmatpush1.msra.mxu0 0.0
      %2456 = vmatprep.subr.mxu0 0.0
      %2457 = vmatpush1.msra.mxu0 0.0
      %2458 = vmatprep.subr.mxu0 0.0
      %2459 = vmatpush1.msra.mxu0 0.0
      %2460 = vmatprep.subr.mxu0 0.0
      %2461 = vmatpush1.msra.mxu0 0.0
      %2462 = vmatprep.subr.mxu0 0.0
      %2463 = vmatpush1.msra.mxu0 0.0
      %2464 = vmatprep.subr.mxu0 0.0
      %2465 = vmatpush1.msra.mxu0 0.0
      %2466 = vmatprep.subr.mxu0 0.0
      %2467 = vmatpush1.msra.mxu0 0.0
      %2468 = vmatprep.subr.mxu0 0.0
      %2469 = vmatpush1.msra.mxu0 0.0
      %2470 = vmatprep.subr.mxu0 0.0
      %2471 = vmatpush1.msra.mxu0 0.0
      %2472 = vmatprep.subr.mxu0 0.0
      %2473 = vmatpush1.msra.mxu0 0.0
      %2474 = vmatprep.subr.mxu0 %v2444
      %2475 = vmatpush1.msra.mxu0 %v2443
      %2476 = vmatprep.subr.mxu0 %v2442
      %2477 = vmatpush1.msra.mxu0 %v2441
      %2478 = vmatprep.subr.mxu0 %v2440
      %2479 = vmatpush1.msra.mxu0 %v2439
      %2480 = vmatprep.subr.mxu0 %v2438
      %2481 = vmatpush1.msra.mxu0 %v2437
      %2482 = vmatprep.subr.mxu0 0.0
      %2483 = vmatpush2.msra.mxu0 0.0
      %2484 = vmatprep.subr.mxu0 0.0
      %2485 = vmatpush2.msra.mxu0 0.0
      %2486 = vmatprep.subr.mxu0 0.0
      %2487 = vmatpush2.msra.mxu0 0.0
      %2488 = vmatprep.subr.mxu0 0.0
      %2489 = vmatpush2.msra.mxu0 0.0
      %2490 = vmatprep.subr.mxu0 0.0
      %2491 = vmatpush2.msra.mxu0 0.0
      %2492 = vmatprep.subr.mxu0 0.0
      %2493 = vmatpush2.msra.mxu0 0.0
      %2494 = vmatprep.subr.mxu0 0.0
      %2495 = vmatpush2.msra.mxu0 0.0
      %2496 = vmatprep.subr.mxu0 0.0
      %2497 = vmatpush2.msra.mxu0 0.0
      %2498 = vmatprep.subr.mxu0 0.0
      %2499 = vmatpush2.msra.mxu0 0.0
      %2500 = vmatprep.subr.mxu0 0.0
      %2501 = vmatpush2.msra.mxu0 0.0
      %2502 = vmatprep.subr.mxu0 0.0
      %2503 = vmatpush2.msra.mxu0 0.0
      %2504 = vmatprep.subr.mxu0 0.0
      %2505 = vmatpush2.msra.mxu0 0.0
      %2506 = vmatprep.subr.mxu0 0.0
      %2507 = vmatpush2.msra.mxu0 0.0
      %2508 = vmatprep.subr.mxu0 0.0
      %2509 = vmatpush2.msra.mxu0 0.0
      %2510 = vmatprep.subr.mxu0 0.0
      %2511 = vmatpush2.msra.mxu0 0.0
      %2512 = vmatprep.subr.mxu0 0.0
      %2513 = vmatpush2.msra.mxu0 0.0
      %2514 = vmatprep.mubr.f32.mxu0 0.0
      %2515 = vmatmul.mubr.f32.gmra.mxu0 %v2448
      %v2516 = vpop.f32.mrf.mxu0
      %v2517 = vadd.f32 0.0, %v2516
      %v2518 = vpop.f32.mrf.mxu0
      %v2519 = vadd.f32 0.0, %v2518
      %2520 = vdwg.mxu0
      %v2521 = vadd.f32 %v2435, %v2517
      %v2522 = vadd.f32 %v2436, %v2519
      %s2523 = scalar_lea.vmem %s4, 32
      %v2524 = vld [vmem:[%s2523] sm:$0xff]
      %v2526 = vsel %vm2176, %v2524, 0
      %2528 = vmatprep.subr.mxu0 0.0
      %2529 = vmatpush1.msra.mxu0 0.0
      %2530 = vmatprep.subr.mxu0 0.0
      %2531 = vmatpush1.msra.mxu0 0.0
      %2532 = vmatprep.subr.mxu0 0.0
      %2533 = vmatpush1.msra.mxu0 0.0
      %2534 = vmatprep.subr.mxu0 0.0
      %2535 = vmatpush1.msra.mxu0 0.0
      %2536 = vmatprep.subr.mxu0 0.0
      %2537 = vmatpush1.msra.mxu0 0.0
      %2538 = vmatprep.subr.mxu0 0.0
      %2539 = vmatpush1.msra.mxu0 0.0
      %2540 = vmatprep.subr.mxu0 0.0
      %2541 = vmatpush1.msra.mxu0 0.0
      %2542 = vmatprep.subr.mxu0 0.0
      %2543 = vmatpush1.msra.mxu0 0.0
      %2544 = vmatprep.subr.mxu0 0.0
      %2545 = vmatpush1.msra.mxu0 0.0
      %2546 = vmatprep.subr.mxu0 0.0
      %2547 = vmatpush1.msra.mxu0 0.0
      %2548 = vmatprep.subr.mxu0 0.0
      %2549 = vmatpush1.msra.mxu0 0.0
      %2550 = vmatprep.subr.mxu0 0.0
      %2551 = vmatpush1.msra.mxu0 0.0
      %2552 = vmatprep.subr.mxu0 %v2126
      %2553 = vmatpush1.msra.mxu0 %v2125
      %2554 = vmatprep.subr.mxu0 %v2124
      %2555 = vmatpush1.msra.mxu0 %v2123
      %2556 = vmatprep.subr.mxu0 %v2122
      %2557 = vmatpush1.msra.mxu0 %v2121
      %2558 = vmatprep.subr.mxu0 %v2120
      %2559 = vmatpush1.msra.mxu0 %v2119
      %2560 = vmatprep.subr.mxu0 0.0
      %2561 = vmatpush2.msra.mxu0 0.0
      %2562 = vmatprep.subr.mxu0 0.0
      %2563 = vmatpush2.msra.mxu0 0.0
      %2564 = vmatprep.subr.mxu0 0.0
      %2565 = vmatpush2.msra.mxu0 0.0
      %2566 = vmatprep.subr.mxu0 0.0
      %2567 = vmatpush2.msra.mxu0 0.0
      %2568 = vmatprep.subr.mxu0 0.0
      %2569 = vmatpush2.msra.mxu0 0.0
      %2570 = vmatprep.subr.mxu0 0.0
      %2571 = vmatpush2.msra.mxu0 0.0
      %2572 = vmatprep.subr.mxu0 0.0
      %2573 = vmatpush2.msra.mxu0 0.0
      %2574 = vmatprep.subr.mxu0 0.0
      %2575 = vmatpush2.msra.mxu0 0.0
      %2576 = vmatprep.subr.mxu0 0.0
      %2577 = vmatpush2.msra.mxu0 0.0
      %2578 = vmatprep.subr.mxu0 0.0
      %2579 = vmatpush2.msra.mxu0 0.0
      %2580 = vmatprep.subr.mxu0 0.0
      %2581 = vmatpush2.msra.mxu0 0.0
      %2582 = vmatprep.subr.mxu0 0.0
      %2583 = vmatpush2.msra.mxu0 0.0
      %2584 = vmatprep.subr.mxu0 0.0
      %2585 = vmatpush2.msra.mxu0 0.0
      %2586 = vmatprep.subr.mxu0 0.0
      %2587 = vmatpush2.msra.mxu0 0.0
      %2588 = vmatprep.subr.mxu0 0.0
      %2589 = vmatpush2.msra.mxu0 0.0
      %2590 = vmatprep.subr.mxu0 0.0
      %2591 = vmatpush2.msra.mxu0 0.0
      %2592 = vmatprep.mubr.f32.mxu0 0.0
      %2593 = vmatmul.mubr.f32.gmra.mxu0 %v2526
      %v2594 = vpop.f32.mrf.mxu0
      %v2595 = vadd.f32 0.0, %v2594
      %v2596 = vpop.f32.mrf.mxu0
      %v2597 = vadd.f32 0.0, %v2596
      %2598 = vdwg.mxu0
      %v2599 = vadd.f32 %v2521, %v2595
      %v2600 = vadd.f32 %v2522, %v2597
      %v2601 = vmul.f32 %v2341, %v289
      %v2602 = vmul.f32 %v2345, %v290
      %v2603 = vmul.f32 %v2342, %v289
      %v2604 = vmul.f32 %v2346, %v290
      %v2605 = vmul.f32 %v2343, %v289
      %v2606 = vmul.f32 %v2347, %v290
      %v2607 = vmul.f32 %v2344, %v289
      %v2608 = vmul.f32 %v2348, %v290
      %s2609 = scalar_lea.vmem %s4, 40
      %v2610 = vld [vmem:[%s2609] sm:$0xff]
      %v2612 = vsel %vm2176, %v2610, 0
      %2614 = vmatprep.subr.mxu0 0.0
      %2615 = vmatpush1.msra.mxu0 0.0
      %2616 = vmatprep.subr.mxu0 0.0
      %2617 = vmatpush1.msra.mxu0 0.0
      %2618 = vmatprep.subr.mxu0 0.0
      %2619 = vmatpush1.msra.mxu0 0.0
      %2620 = vmatprep.subr.mxu0 0.0
      %2621 = vmatpush1.msra.mxu0 0.0
      %2622 = vmatprep.subr.mxu0 0.0
      %2623 = vmatpush1.msra.mxu0 0.0
      %2624 = vmatprep.subr.mxu0 0.0
      %2625 = vmatpush1.msra.mxu0 0.0
      %2626 = vmatprep.subr.mxu0 0.0
      %2627 = vmatpush1.msra.mxu0 0.0
      %2628 = vmatprep.subr.mxu0 0.0
      %2629 = vmatpush1.msra.mxu0 0.0
      %2630 = vmatprep.subr.mxu0 0.0
      %2631 = vmatpush1.msra.mxu0 0.0
      %2632 = vmatprep.subr.mxu0 0.0
      %2633 = vmatpush1.msra.mxu0 0.0
      %2634 = vmatprep.subr.mxu0 0.0
      %2635 = vmatpush1.msra.mxu0 0.0
      %2636 = vmatprep.subr.mxu0 0.0
      %2637 = vmatpush1.msra.mxu0 0.0
      %2638 = vmatprep.subr.mxu0 %v2608
      %2639 = vmatpush1.msra.mxu0 %v2607
      %2640 = vmatprep.subr.mxu0 %v2606
      %2641 = vmatpush1.msra.mxu0 %v2605
      %2642 = vmatprep.subr.mxu0 %v2604
      %2643 = vmatpush1.msra.mxu0 %v2603
      %2644 = vmatprep.subr.mxu0 %v2602
      %2645 = vmatpush1.msra.mxu0 %v2601
      %2646 = vmatprep.subr.mxu0 0.0
      %2647 = vmatpush2.msra.mxu0 0.0
      %2648 = vmatprep.subr.mxu0 0.0
      %2649 = vmatpush2.msra.mxu0 0.0
      %2650 = vmatprep.subr.mxu0 0.0
      %2651 = vmatpush2.msra.mxu0 0.0
      %2652 = vmatprep.subr.mxu0 0.0
      %2653 = vmatpush2.msra.mxu0 0.0
      %2654 = vmatprep.subr.mxu0 0.0
      %2655 = vmatpush2.msra.mxu0 0.0
      %2656 = vmatprep.subr.mxu0 0.0
      %2657 = vmatpush2.msra.mxu0 0.0
      %2658 = vmatprep.subr.mxu0 0.0
      %2659 = vmatpush2.msra.mxu0 0.0
      %2660 = vmatprep.subr.mxu0 0.0
      %2661 = vmatpush2.msra.mxu0 0.0
      %2662 = vmatprep.subr.mxu0 0.0
      %2663 = vmatpush2.msra.mxu0 0.0
      %2664 = vmatprep.subr.mxu0 0.0
      %2665 = vmatpush2.msra.mxu0 0.0
      %2666 = vmatprep.subr.mxu0 0.0
      %2667 = vmatpush2.msra.mxu0 0.0
      %2668 = vmatprep.subr.mxu0 0.0
      %2669 = vmatpush2.msra.mxu0 0.0
      %2670 = vmatprep.subr.mxu0 0.0
      %2671 = vmatpush2.msra.mxu0 0.0
      %2672 = vmatprep.subr.mxu0 0.0
      %2673 = vmatpush2.msra.mxu0 0.0
      %2674 = vmatprep.subr.mxu0 0.0
      %2675 = vmatpush2.msra.mxu0 0.0
      %2676 = vmatprep.subr.mxu0 0.0
      %2677 = vmatpush2.msra.mxu0 0.0
      %2678 = vmatprep.mubr.f32.mxu0 0.0
      %2679 = vmatmul.mubr.f32.gmra.mxu0 %v2612
      %v2680 = vpop.f32.mrf.mxu0
      %v2681 = vadd.f32 0.0, %v2680
      %v2682 = vpop.f32.mrf.mxu0
      %v2683 = vadd.f32 0.0, %v2682
      %2684 = vdwg.mxu0
      %v2685 = vadd.f32 %v2599, %v2681
      %v2686 = vadd.f32 %v2600, %v2683
      %s2687 = scalar_lea.vmem %s5, 24
      %v2688 = vld [vmem:[%s2687] sm:$0xff]
      %s2689 = scalar_lea.vmem %s5, 56
      %v2690 = vld [vmem:[%s2689] sm:$0xff]
      %s2691 = scalar_lea.vmem %s5, 88
      %v2692 = vld [vmem:[%s2691] sm:$0xff]
      %v2693 = vadd.f32 %v2685, %v2686
      %2694 = vadd.xlane.f32.xlu0 %v2693
      %v2695 = vpop.xlane.xlu0 %2694
      %v2696 = vmul.f32 %v2695, 0.00390625
      %v2697 = vmul.f32 %v2685, %v2685
      %v2698 = vmul.f32 %v2686, %v2686
      %v2699 = vadd.f32 %v2697, %v2698
      %2700 = vadd.xlane.f32.xlu0 %v2699
      %v2701 = vpop.xlane.xlu0 %2700
      %v2702 = vmul.f32 %v2701, 0.00390625
      %v2703 = vmul.f32 %v2696, %v2696
      %v2704 = vsub.f32 %v2702, %v2703
      %v2705 = vadd.f32 %v2704, 1e-05
      %v2706 = vrsqrt.pop %v2705
      %v2707 = vmul.f32 %v2688, %v2706
      %v2708 = vmul.f32 %v2696, %v2707
      %v2709 = vsub.f32 %v2690, %v2708
      %2711 = vset.pattern.permute.xlu0 0
      %2712 = vperm.xlu0 %2711, %v2707
      %v2713 = vpop.permute.xlu0 %2712
      %v2715 = vmul.f32 %v2685, %v2713
      %v2716 = vmul.f32 %v2686, %v2713
      %2718 = vset.pattern.permute.xlu0 0
      %2719 = vperm.xlu0 %2718, %v2709
      %v2720 = vpop.permute.xlu0 %2719
      %v2722 = vadd.f32 %v2715, %v2720
      %v2723 = vadd.f32 %v2716, %v2720
      %vm2724 = vcmp.ge.f32.partialorder %v2722, 0.0
      %vm2725 = vcmp.ge.f32.partialorder %v2723, 0.0
      %2727 = vset.pattern.permute.xlu0 0
      %2728 = vperm.xlu0 %2727, %v2692
      %v2729 = vpop.permute.xlu0 %2728
      %v2731 = vmul.f32 %v2729, %v2722
      %v2732 = vmul.f32 %v2729, %v2723
      %v2733 = vsel %vm2724, %v2722, %v2731
      %v2734 = vsel %vm2725, %v2723, %v2732
      %2735 = vst [vmem:[%s251] sm:$0xff] %v2733
      %2736 = vst [vmem:[%s251 + $0x8] sm:$0xff] %v2734
      %p2737 = scmp.lt.s32.totalorder %s17, 1
      %s2738 = scalar_select %p2737, %s17, 1
      %s2739 = smul.addr %s2738, 2
      %s2740 = smul.addr %s2739, 8
      %s2741 = scalar_lea.vmem %s6, %s2740
      // Predicated region
      $region45: #{dilated_dense_net_forward.1} parent=43 // pred_check
        %p2742 = pneg %p166
      $region46: #{dilated_dense_net_forward.1} parent=43 // pred_check_branch
        %2744 = sbr.rel (%p2742) target = $region48
      $region47: #{dilated_dense_net_forward.1} parent=43 // pred_region
        _
      $region48: #{dilated_dense_net_forward.1} parent=43 // pred_fallthru
        _
    $region44: #{dilated_dense_net_forward.1} parent=5 // pred_fallthru
      _
    %p2745 = scmp.le.s32.totalorder 2, %s12
    // Predicated region
    $region49: #{dilated_dense_net_forward.1} parent=5 // pred_check
      %p2746 = pneg %p2745
    $region50: #{dilated_dense_net_forward.1} parent=5 // pred_check_branch
      %2748 = sbr.rel (%p2746) target = $region52
    $region51: #{dilated_dense_net_forward.1} parent=5 // pred_region
      %s2749 = ssub.s32 %s12, 2
      // Predicated region
      $region53: #{dilated_dense_net_forward.1} parent=51 // pred_check
        %p2750 = pneg %p172
      $region54: #{dilated_dense_net_forward.1} parent=51 // pred_check_branch
        %2752 = sbr.rel (%p2750) target = $region56
      $region55: #{dilated_dense_net_forward.1} parent=51 // pred_region
        %p2753 = scmp.lt.s32.totalorder %s18, 1
        %s2754 = scalar_select %p2753, %s18, 1
        %s2755 = smul.addr %s2754, 2
        %s2756 = smul.addr %s2755, 8
        %s2757 = scalar_lea.vmem %s6, %s2756
      $region56: #{dilated_dense_net_forward.1} parent=51 // pred_fallthru
        _
    $region52: #{dilated_dense_net_forward.1} parent=5 // pred_fallthru
      _
  $region6: #{dilated_dense_net_forward.1} parent=0 // loop_footer
    %s16 = sadd.s32 1, %s12
  $region7: #{dilated_dense_net_forward.1} parent=0 // loop_footer_branch
    %11 = sbr.rel target = $region3
  $region8: #{dilated_dense_net_forward.1} parent=0 // loop_exit
    _

</llo_original>
